<compile_context>
chip_gen: v6e
topology: v6e:2x2x1
jax: 0.10.0
libtpu: 0.0.40
codegen_flags: <defaults>
</compile_context>

<pallas_src>
import functools

import jax
import jax.numpy as jnp
from jax import lax
from jax.experimental import pallas as pl
from jax.experimental.pallas import tpu as pltpu

# ----------------------------- config ---------------------------------------
CONFIG = dict(
    vocab_size=20,        # embedding table has vocab_size + 1 rows
    hidden_size=32,
    class_num=5,
    model_type="lstm",
    num_layers=2,
    pooling_style="max",
)
BATCH = 2
SEQ = 8
B_PAD = 8                 # pad batch to one full f32 sublane tile
LANE = 128                # lane-padded width of the classifier output


# ----------------------------- Pallas kernel --------------------------------
def _lstm_classifier_kernel(ids_ref,      # SMEM (B, S)        int32 token ids
                            table_ref,    # VMEM (VPAD, 4H)    emb@W_ih0^T + b0
                            w_hh_ref,     # VMEM (L, H, 4H)    pre-transposed
                            w_ih_ref,     # VMEM (L-1|1, H,4H) pre-transposed
                            bias_ref,     # VMEM (L-1|1, 1,4H) b_ih+b_hh layers>0
                            w_cls_ref,    # VMEM (H, LANE)     lane-padded
                            b_cls_ref,    # VMEM (1, LANE)     lane-padded
                            out_ref,      # VMEM (B_PAD, LANE) padded logits
                            gx_ref):      # VMEM scratch (S, B_PAD, 4H)
    S, B_pad, G = gx_ref.shape
    H = G // 4
    L = w_hh_ref.shape[0]
    B = ids_ref.shape[0]                  # real batch (<= B_pad)

    # ---- fused embedding lookup == layer-0 input projection (pre-pass) -----
    # table[v] = emb[v] @ W_ih0^T + b_ih0 + b_hh0 was precomputed once on the
    # host, so the whole layer-0 input projection is just S*B dynamic
    # (1, 4H)=(1,128) row copies.  Padded batch rows stay zero (row-isolated).
    gx_ref[...] = jnp.zeros(gx_ref.shape, jnp.float32)
    for s in range(S):
        for b in range(B):
            tok = ids_ref[b, s]
            gx_ref[s, pl.ds(b, 1), :] = table_ref[pl.ds(tok, 1), :]

    # ---- hoisted per-layer weight loads -------------------------------------
    w_hh = [w_hh_ref[l] for l in range(L)]            # each (H, 4H)
    w_ih_nxt = [w_ih_ref[l] for l in range(L - 1)]    # input proj of layer l+1
    b_nxt = [bias_ref[l] for l in range(L - 1)]       # (1, 4H)

    def cell(gx, h, c, w):
        # Only h @ W_hh sits on the serial recurrence chain.
        gates = gx + jnp.dot(h, w, preferred_element_type=jnp.float32)  # (B_pad,4H)
        sig = jax.nn.sigmoid(gates)      # one full-width EUP push
        tnh = jnp.tanh(gates)            # one full-width EUP push
        i_g = sig[:, 0 * H:1 * H]
        f_g = sig[:, 1 * H:2 * H]
        g_g = tnh[:, 2 * H:3 * H]
        o_g = sig[:, 3 * H:4 * H]
        c = f_g * c + i_g * g_g
        h = o_g * jnp.tanh(c)
        return h, c

    # ---- wavefronted recurrence: layer l runs timestep m - l at macro-step m
    # Serial chain ~ S + L - 1 cells instead of L * S; the layer-(l+1) input
    # projection is carried in registers (no per-step store).
    zeros = jnp.zeros((B_pad, H), jnp.float32)
    states = [(zeros, zeros) for _ in range(L)]
    pending = [None] * L                 # pending[l]: gates_x for layer l>0
    pool = jnp.full((B_pad, H), -jnp.inf, jnp.float32)

    for m in range(S + L - 1):
        new_pending = [None] * L
        for l in range(L):
            t = m - l
            if t < 0 or t >= S:
                continue
            gx = gx_ref[t] if l == 0 else pending[l]
            h, c = cell(gx, states[l][0], states[l][1], w_hh[l])
            states[l] = (h, c)
            if l + 1 < L:
                new_pending[l + 1] = (
                    jnp.dot(h, w_ih_nxt[l], preferred_element_type=jnp.float32)
                    + b_nxt[l])
            else:
                # fused max pooling over the sequence axis
                pool = jnp.maximum(pool, h)
        pending = new_pending

    # ---- classifier (lane-padded output, unmasked dense store) --------------
    out_ref[...] = (jnp.dot(pool, w_cls_ref[...],
                            preferred_element_type=jnp.float32)
                    + b_cls_ref[...])


# ----------------------------- wrappers --------------------------------------
def prepare_kernel_params(params, cfg):
    """One-time host-side weight prep (kept out of the per-call forward)."""
    H = cfg["hidden_size"]
    L = cfg["num_layers"]
    C = cfg["class_num"]
    V = cfg["vocab_size"] + 1
    vpad = ((V + 7) // 8) * 8

    bias_all = (params["b_ih"] + params["b_hh"]).astype(jnp.float32)   # (L, 4H)

    # Fused embedding x layer-0 input-projection table (+ layer-0 bias).
    emb_pad = jnp.zeros((vpad, H), jnp.float32).at[:V].set(params["emb"])
    table = emb_pad @ params["w_ih"][0].astype(jnp.float32).T + bias_all[0]

    w_hh_t = jnp.transpose(params["w_hh"], (0, 2, 1)).astype(jnp.float32)

    n_rest = max(L - 1, 1)
    w_ih_rest = jnp.zeros((n_rest, H, 4 * H), jnp.float32)
    bias_rest = jnp.zeros((n_rest, 1, 4 * H), jnp.float32)
    if L > 1:
        w_ih_rest = w_ih_rest.at[:L - 1].set(
            jnp.transpose(params["w_ih"][1:], (0, 2, 1)).astype(jnp.float32))
        bias_rest = bias_rest.at[:L - 1].set(bias_all[1:, None, :])

    w_cls_pad = jnp.zeros((H, LANE), jnp.float32).at[:, :C].set(
        params["w_cls"].astype(jnp.float32).T)
    b_cls_pad = jnp.zeros((1, LANE), jnp.float32).at[:, :C].set(
        params["b_cls"].astype(jnp.float32)[0])

    return dict(table=table, w_hh=w_hh_t, w_ih_rest=w_ih_rest,
                bias_rest=bias_rest, w_cls=w_cls_pad, b_cls=b_cls_pad)


def torch_model_forward(kparams, x_ids, cfg):
    """x_ids: (B, S) int32 token ids. Returns logits (B, class_num)."""
    B, S = x_ids.shape
    H = cfg["hidden_size"]
    C = cfg["class_num"]
    assert B <= B_PAD

    out_padded = pl.pallas_call(
        _lstm_classifier_kernel,
        out_shape=jax.ShapeDtypeStruct((B_PAD, LANE), jnp.float32),
        in_specs=[
            pl.BlockSpec(memory_space=pltpu.MemorySpace.SMEM),   # ids
            pl.BlockSpec(memory_space=pltpu.MemorySpace.VMEM),   # fused emb table
            pl.BlockSpec(memory_space=pltpu.MemorySpace.VMEM),   # w_hh
            pl.BlockSpec(memory_space=pltpu.MemorySpace.VMEM),   # w_ih (layers>0)
            pl.BlockSpec(memory_space=pltpu.MemorySpace.VMEM),   # bias (layers>0)
            pl.BlockSpec(memory_space=pltpu.MemorySpace.VMEM),   # w_cls
            pl.BlockSpec(memory_space=pltpu.MemorySpace.VMEM),   # b_cls
        ],
        out_specs=pl.BlockSpec(memory_space=pltpu.MemorySpace.VMEM),
        scratch_shapes=[pltpu.VMEM((S, B_PAD, 4 * H), jnp.float32)],
    )(x_ids.astype(jnp.int32), kparams["table"], kparams["w_hh"],
      kparams["w_ih_rest"], kparams["bias_rest"], kparams["w_cls"],
      kparams["b_cls"])
    return out_padded[:B, :C]


# ----------------------------- params & reference ----------------------------
def init_params(key, cfg):
    H = cfg["hidden_size"]
    L = cfg["num_layers"]
    C = cfg["class_num"]
    V = cfg["vocab_size"] + 1
    ks = jax.random.split(key, 7)
    emb = 0.1 * jax.random.normal(ks[0], (V, H), jnp.float32)
    emb = emb.at[0].set(0.0)                       # padding_idx=0
    w_ih = 0.1 * jax.random.normal(ks[1], (L, 4 * H, H), jnp.float32)
    w_hh = 0.1 * jax.random.normal(ks[2], (L, 4 * H, H), jnp.float32)
    b_ih = 0.1 * jax.random.normal(ks[3], (L, 4 * H), jnp.float32)
    b_hh = 0.1 * jax.random.normal(ks[4], (L, 4 * H), jnp.float32)
    w_cls = 0.1 * jax.random.normal(ks[5], (C, H), jnp.float32)
    b_cls = 0.1 * jax.random.normal(ks[6], (1, C), jnp.float32)
    return dict(emb=emb, w_ih=w_ih, w_hh=w_hh, b_ih=b_ih, b_hh=b_hh,
                w_cls=w_cls, b_cls=b_cls)


def reference_forward(params, x_ids, cfg):
    H = cfg["hidden_size"]
    x = jnp.take(params["emb"], x_ids, axis=0)             # (B, S, H)
    B, S, _ = x.shape
    for layer in range(cfg["num_layers"]):
        w_ih = params["w_ih"][layer]
        w_hh = params["w_hh"][layer]
        bias = params["b_ih"][layer] + params["b_hh"][layer]

        def step(carry, x_t):
            h, c = carry
            gates = x_t @ w_ih.T + h @ w_hh.T + bias
            i_g = jax.nn.sigmoid(gates[:, 0 * H:1 * H])
            f_g = jax.nn.sigmoid(gates[:, 1 * H:2 * H])
            g_g = jnp.tanh(gates[:, 2 * H:3 * H])
            o_g = jax.nn.sigmoid(gates[:, 3 * H:4 * H])
            c = f_g * c + i_g * g_g
            h = o_g * jnp.tanh(c)
            return (h, c), h

        init = (jnp.zeros((B, H)), jnp.zeros((B, H)))
        _, hs = lax.scan(step, init, jnp.transpose(x, (1, 0, 2)))
        x = jnp.transpose(hs, (1, 0, 2))
    pooled = jnp.max(x, axis=1)                             # max pooling
    return pooled @ params["w_cls"].T + params["b_cls"]


# ----------------------------- main ------------------------------------------
if __name__ == "__main__":
    key = jax.random.PRNGKey(0)
    k_params, k_x = jax.random.split(key)
    params = init_params(k_params, CONFIG)
    kparams = prepare_kernel_params(params, CONFIG)         # one-time prep

    # token ids in [0, vocab_size]; include a padding id (0).
    x_ids = jax.random.randint(k_x, (BATCH, SEQ), 0, CONFIG["vocab_size"] + 1,
                               dtype=jnp.int32)
    x_ids = x_ids.at[0, -1].set(0)

    forward = jax.jit(lambda kp, ids: torch_model_forward(kp, ids, CONFIG))
    logits = jax.block_until_ready(forward(kparams, x_ids))

    ref = reference_forward(params, x_ids, CONFIG)
    assert logits.shape == (BATCH, CONFIG["class_num"])
    assert jnp.allclose(logits, ref, atol=1e-4, rtol=1e-4), (logits, ref)

    print("KERNEL_OK")
</pallas_src>

<mosaic_0001>
module attributes {stable_mosaic.version = 11 : i64} {
  func.func @_lstm_classifier_kernel(%arg0: memref<2x8xi32, #tpu.memory_space<smem>>, %arg1: memref<24x128xf32, #tpu.memory_space<vmem>>, %arg2: memref<2x32x128xf32, #tpu.memory_space<vmem>>, %arg3: memref<1x32x128xf32, #tpu.memory_space<vmem>>, %arg4: memref<1x1x128xf32, #tpu.memory_space<vmem>>, %arg5: memref<32x128xf32, #tpu.memory_space<vmem>>, %arg6: memref<1x128xf32, #tpu.memory_space<vmem>>, %arg7: memref<8x128xf32, #tpu.memory_space<vmem>>, %arg8: memref<8x8x128xf32, #tpu.memory_space<vmem>>) attributes {dimension_semantics = [], scalar_prefetch = 0 : i64, scratch_operands = 1 : i64, tpu.core_type = #tpu.core_type<tc>} {
    %cst = arith.constant 0.000000e+00 : f32
    %0 = vector.broadcast %cst : f32 to vector<8x8x128xf32>
    %c0 = arith.constant 0 : index
    %c0_0 = arith.constant 0 : index
    %c0_1 = arith.constant 0 : index
    %1 = vector.load %arg8[%c0, %c0_0, %c0_1] : memref<8x8x128xf32, #tpu.memory_space<vmem>>, vector<8x8x128xf32>
    tpu.vector_store %arg8[%c0, %c0_0, %c0_1], %0 {strides = array<i32>} : memref<8x8x128xf32, #tpu.memory_space<vmem>>, vector<8x8x128xf32>,
    %c0_2 = arith.constant 0 : index
    %c0_3 = arith.constant 0 : index
    %2 = memref.load %arg0[%c0_2, %c0_3] : memref<2x8xi32, #tpu.memory_space<smem>>
    %3 = arith.index_cast %2 : i32 to index
    %c0_4 = arith.constant 0 : index
    %4 = vector.load %arg1[%3, %c0_4] : memref<24x128xf32, #tpu.memory_space<vmem>>, vector<1x128xf32>
    %c0_5 = arith.constant 0 : index
    %c0_6 = arith.constant 0 : index
    %c0_7 = arith.constant 0 : index
    %5 = vector.load %arg8[%c0_5, %c0_6, %c0_7] : memref<8x8x128xf32, #tpu.memory_space<vmem>>, vector<1x1x128xf32>
    %6 = vector.shape_cast %5 : vector<1x1x128xf32> to vector<1x128xf32>
    %7 = vector.shape_cast %4 : vector<1x128xf32> to vector<1x1x128xf32>
    tpu.vector_store %arg8[%c0_5, %c0_6, %c0_7], %7 {strides = array<i32>} : memref<8x8x128xf32, #tpu.memory_space<vmem>>, vector<1x1x128xf32>,
    %c1 = arith.constant 1 : index
    %c0_8 = arith.constant 0 : index
    %8 = memref.load %arg0[%c1, %c0_8] : memref<2x8xi32, #tpu.memory_space<smem>>
    %9 = arith.index_cast %8 : i32 to index
    %c0_9 = arith.constant 0 : index
    %10 = vector.load %arg1[%9, %c0_9] : memref<24x128xf32, #tpu.memory_space<vmem>>, vector<1x128xf32>
    %c0_10 = arith.constant 0 : index
    %c1_11 = arith.constant 1 : index
    %c0_12 = arith.constant 0 : index
    %11 = vector.load %arg8[%c0_10, %c1_11, %c0_12] : memref<8x8x128xf32, #tpu.memory_space<vmem>>, vector<1x1x128xf32>
    %12 = vector.shape_cast %11 : vector<1x1x128xf32> to vector<1x128xf32>
    %13 = vector.shape_cast %10 : vector<1x128xf32> to vector<1x1x128xf32>
    tpu.vector_store %arg8[%c0_10, %c1_11, %c0_12], %13 {strides = array<i32>} : memref<8x8x128xf32, #tpu.memory_space<vmem>>, vector<1x1x128xf32>,
    %c0_13 = arith.constant 0 : index
    %c1_14 = arith.constant 1 : index
    %14 = memref.load %arg0[%c0_13, %c1_14] : memref<2x8xi32, #tpu.memory_space<smem>>
    %15 = arith.index_cast %14 : i32 to index
    %c0_15 = arith.constant 0 : index
    %16 = vector.load %arg1[%15, %c0_15] : memref<24x128xf32, #tpu.memory_space<vmem>>, vector<1x128xf32>
    %c1_16 = arith.constant 1 : index
    %c0_17 = arith.constant 0 : index
    %c0_18 = arith.constant 0 : index
    %17 = vector.load %arg8[%c1_16, %c0_17, %c0_18] : memref<8x8x128xf32, #tpu.memory_space<vmem>>, vector<1x1x128xf32>
    %18 = vector.shape_cast %17 : vector<1x1x128xf32> to vector<1x128xf32>
    %19 = vector.shape_cast %16 : vector<1x128xf32> to vector<1x1x128xf32>
    tpu.vector_store %arg8[%c1_16, %c0_17, %c0_18], %19 {strides = array<i32>} : memref<8x8x128xf32, #tpu.memory_space<vmem>>, vector<1x1x128xf32>,
    %c1_19 = arith.constant 1 : index
    %c1_20 = arith.constant 1 : index
    %20 = memref.load %arg0[%c1_19, %c1_20] : memref<2x8xi32, #tpu.memory_space<smem>>
    %21 = arith.index_cast %20 : i32 to index
    %c0_21 = arith.constant 0 : index
    %22 = vector.load %arg1[%21, %c0_21] : memref<24x128xf32, #tpu.memory_space<vmem>>, vector<1x128xf32>
    %c1_22 = arith.constant 1 : index
    %c1_23 = arith.constant 1 : index
    %c0_24 = arith.constant 0 : index
    %23 = vector.load %arg8[%c1_22, %c1_23, %c0_24] : memref<8x8x128xf32, #tpu.memory_space<vmem>>, vector<1x1x128xf32>
    %24 = vector.shape_cast %23 : vector<1x1x128xf32> to vector<1x128xf32>
    %25 = vector.shape_cast %22 : vector<1x128xf32> to vector<1x1x128xf32>
    tpu.vector_store %arg8[%c1_22, %c1_23, %c0_24], %25 {strides = array<i32>} : memref<8x8x128xf32, #tpu.memory_space<vmem>>, vector<1x1x128xf32>,
    %c0_25 = arith.constant 0 : index
    %c2 = arith.constant 2 : index
    %26 = memref.load %arg0[%c0_25, %c2] : memref<2x8xi32, #tpu.memory_space<smem>>
    %27 = arith.index_cast %26 : i32 to index
    %c0_26 = arith.constant 0 : index
    %28 = vector.load %arg1[%27, %c0_26] : memref<24x128xf32, #tpu.memory_space<vmem>>, vector<1x128xf32>
    %c2_27 = arith.constant 2 : index
    %c0_28 = arith.constant 0 : index
    %c0_29 = arith.constant 0 : index
    %29 = vector.load %arg8[%c2_27, %c0_28, %c0_29] : memref<8x8x128xf32, #tpu.memory_space<vmem>>, vector<1x1x128xf32>
    %30 = vector.shape_cast %29 : vector<1x1x128xf32> to vector<1x128xf32>
    %31 = vector.shape_cast %28 : vector<1x128xf32> to vector<1x1x128xf32>
    tpu.vector_store %arg8[%c2_27, %c0_28, %c0_29], %31 {strides = array<i32>} : memref<8x8x128xf32, #tpu.memory_space<vmem>>, vector<1x1x128xf32>,
    %c1_30 = arith.constant 1 : index
    %c2_31 = arith.constant 2 : index
    %32 = memref.load %arg0[%c1_30, %c2_31] : memref<2x8xi32, #tpu.memory_space<smem>>
    %33 = arith.index_cast %32 : i32 to index
    %c0_32 = arith.constant 0 : index
    %34 = vector.load %arg1[%33, %c0_32] : memref<24x128xf32, #tpu.memory_space<vmem>>, vector<1x128xf32>
    %c2_33 = arith.constant 2 : index
    %c1_34 = arith.constant 1 : index
    %c0_35 = arith.constant 0 : index
    %35 = vector.load %arg8[%c2_33, %c1_34, %c0_35] : memref<8x8x128xf32, #tpu.memory_space<vmem>>, vector<1x1x128xf32>
    %36 = vector.shape_cast %35 : vector<1x1x128xf32> to vector<1x128xf32>
    %37 = vector.shape_cast %34 : vector<1x128xf32> to vector<1x1x128xf32>
    tpu.vector_store %arg8[%c2_33, %c1_34, %c0_35], %37 {strides = array<i32>} : memref<8x8x128xf32, #tpu.memory_space<vmem>>, vector<1x1x128xf32>,
    %c0_36 = arith.constant 0 : index
    %c3 = arith.constant 3 : index
    %38 = memref.load %arg0[%c0_36, %c3] : memref<2x8xi32, #tpu.memory_space<smem>>
    %39 = arith.index_cast %38 : i32 to index
    %c0_37 = arith.constant 0 : index
    %40 = vector.load %arg1[%39, %c0_37] : memref<24x128xf32, #tpu.memory_space<vmem>>, vector<1x128xf32>
    %c3_38 = arith.constant 3 : index
    %c0_39 = arith.constant 0 : index
    %c0_40 = arith.constant 0 : index
    %41 = vector.load %arg8[%c3_38, %c0_39, %c0_40] : memref<8x8x128xf32, #tpu.memory_space<vmem>>, vector<1x1x128xf32>
    %42 = vector.shape_cast %41 : vector<1x1x128xf32> to vector<1x128xf32>
    %43 = vector.shape_cast %40 : vector<1x128xf32> to vector<1x1x128xf32>
    tpu.vector_store %arg8[%c3_38, %c0_39, %c0_40], %43 {strides = array<i32>} : memref<8x8x128xf32, #tpu.memory_space<vmem>>, vector<1x1x128xf32>,
    %c1_41 = arith.constant 1 : index
    %c3_42 = arith.constant 3 : index
    %44 = memref.load %arg0[%c1_41, %c3_42] : memref<2x8xi32, #tpu.memory_space<smem>>
    %45 = arith.index_cast %44 : i32 to index
    %c0_43 = arith.constant 0 : index
    %46 = vector.load %arg1[%45, %c0_43] : memref<24x128xf32, #tpu.memory_space<vmem>>, vector<1x128xf32>
    %c3_44 = arith.constant 3 : index
    %c1_45 = arith.constant 1 : index
    %c0_46 = arith.constant 0 : index
    %47 = vector.load %arg8[%c3_44, %c1_45, %c0_46] : memref<8x8x128xf32, #tpu.memory_space<vmem>>, vector<1x1x128xf32>
    %48 = vector.shape_cast %47 : vector<1x1x128xf32> to vector<1x128xf32>
    %49 = vector.shape_cast %46 : vector<1x128xf32> to vector<1x1x128xf32>
    tpu.vector_store %arg8[%c3_44, %c1_45, %c0_46], %49 {strides = array<i32>} : memref<8x8x128xf32, #tpu.memory_space<vmem>>, vector<1x1x128xf32>,
    %c0_47 = arith.constant 0 : index
    %c4 = arith.constant 4 : index
    %50 = memref.load %arg0[%c0_47, %c4] : memref<2x8xi32, #tpu.memory_space<smem>>
    %51 = arith.index_cast %50 : i32 to index
    %c0_48 = arith.constant 0 : index
    %52 = vector.load %arg1[%51, %c0_48] : memref<24x128xf32, #tpu.memory_space<vmem>>, vector<1x128xf32>
    %c4_49 = arith.constant 4 : index
    %c0_50 = arith.constant 0 : index
    %c0_51 = arith.constant 0 : index
    %53 = vector.load %arg8[%c4_49, %c0_50, %c0_51] : memref<8x8x128xf32, #tpu.memory_space<vmem>>, vector<1x1x128xf32>
    %54 = vector.shape_cast %53 : vector<1x1x128xf32> to vector<1x128xf32>
    %55 = vector.shape_cast %52 : vector<1x128xf32> to vector<1x1x128xf32>
    tpu.vector_store %arg8[%c4_49, %c0_50, %c0_51], %55 {strides = array<i32>} : memref<8x8x128xf32, #tpu.memory_space<vmem>>, vector<1x1x128xf32>,
    %c1_52 = arith.constant 1 : index
    %c4_53 = arith.constant 4 : index
    %56 = memref.load %arg0[%c1_52, %c4_53] : memref<2x8xi32, #tpu.memory_space<smem>>
    %57 = arith.index_cast %56 : i32 to index
    %c0_54 = arith.constant 0 : index
    %58 = vector.load %arg1[%57, %c0_54] : memref<24x128xf32, #tpu.memory_space<vmem>>, vector<1x128xf32>
    %c4_55 = arith.constant 4 : index
    %c1_56 = arith.constant 1 : index
    %c0_57 = arith.constant 0 : index
    %59 = vector.load %arg8[%c4_55, %c1_56, %c0_57] : memref<8x8x128xf32, #tpu.memory_space<vmem>>, vector<1x1x128xf32>
    %60 = vector.shape_cast %59 : vector<1x1x128xf32> to vector<1x128xf32>
    %61 = vector.shape_cast %58 : vector<1x128xf32> to vector<1x1x128xf32>
    tpu.vector_store %arg8[%c4_55, %c1_56, %c0_57], %61 {strides = array<i32>} : memref<8x8x128xf32, #tpu.memory_space<vmem>>, vector<1x1x128xf32>,
    %c0_58 = arith.constant 0 : index
    %c5 = arith.constant 5 : index
    %62 = memref.load %arg0[%c0_58, %c5] : memref<2x8xi32, #tpu.memory_space<smem>>
    %63 = arith.index_cast %62 : i32 to index
    %c0_59 = arith.constant 0 : index
    %64 = vector.load %arg1[%63, %c0_59] : memref<24x128xf32, #tpu.memory_space<vmem>>, vector<1x128xf32>
    %c5_60 = arith.constant 5 : index
    %c0_61 = arith.constant 0 : index
    %c0_62 = arith.constant 0 : index
    %65 = vector.load %arg8[%c5_60, %c0_61, %c0_62] : memref<8x8x128xf32, #tpu.memory_space<vmem>>, vector<1x1x128xf32>
    %66 = vector.shape_cast %65 : vector<1x1x128xf32> to vector<1x128xf32>
    %67 = vector.shape_cast %64 : vector<1x128xf32> to vector<1x1x128xf32>
    tpu.vector_store %arg8[%c5_60, %c0_61, %c0_62], %67 {strides = array<i32>} : memref<8x8x128xf32, #tpu.memory_space<vmem>>, vector<1x1x128xf32>,
    %c1_63 = arith.constant 1 : index
    %c5_64 = arith.constant 5 : index
    %68 = memref.load %arg0[%c1_63, %c5_64] : memref<2x8xi32, #tpu.memory_space<smem>>
    %69 = arith.index_cast %68 : i32 to index
    %c0_65 = arith.constant 0 : index
    %70 = vector.load %arg1[%69, %c0_65] : memref<24x128xf32, #tpu.memory_space<vmem>>, vector<1x128xf32>
    %c5_66 = arith.constant 5 : index
    %c1_67 = arith.constant 1 : index
    %c0_68 = arith.constant 0 : index
    %71 = vector.load %arg8[%c5_66, %c1_67, %c0_68] : memref<8x8x128xf32, #tpu.memory_space<vmem>>, vector<1x1x128xf32>
    %72 = vector.shape_cast %71 : vector<1x1x128xf32> to vector<1x128xf32>
    %73 = vector.shape_cast %70 : vector<1x128xf32> to vector<1x1x128xf32>
    tpu.vector_store %arg8[%c5_66, %c1_67, %c0_68], %73 {strides = array<i32>} : memref<8x8x128xf32, #tpu.memory_space<vmem>>, vector<1x1x128xf32>,
    %c0_69 = arith.constant 0 : index
    %c6 = arith.constant 6 : index
    %74 = memref.load %arg0[%c0_69, %c6] : memref<2x8xi32, #tpu.memory_space<smem>>
    %75 = arith.index_cast %74 : i32 to index
    %c0_70 = arith.constant 0 : index
    %76 = vector.load %arg1[%75, %c0_70] : memref<24x128xf32, #tpu.memory_space<vmem>>, vector<1x128xf32>
    %c6_71 = arith.constant 6 : index
    %c0_72 = arith.constant 0 : index
    %c0_73 = arith.constant 0 : index
    %77 = vector.load %arg8[%c6_71, %c0_72, %c0_73] : memref<8x8x128xf32, #tpu.memory_space<vmem>>, vector<1x1x128xf32>
    %78 = vector.shape_cast %77 : vector<1x1x128xf32> to vector<1x128xf32>
    %79 = vector.shape_cast %76 : vector<1x128xf32> to vector<1x1x128xf32>
    tpu.vector_store %arg8[%c6_71, %c0_72, %c0_73], %79 {strides = array<i32>} : memref<8x8x128xf32, #tpu.memory_space<vmem>>, vector<1x1x128xf32>,
    %c1_74 = arith.constant 1 : index
    %c6_75 = arith.constant 6 : index
    %80 = memref.load %arg0[%c1_74, %c6_75] : memref<2x8xi32, #tpu.memory_space<smem>>
    %81 = arith.index_cast %80 : i32 to index
    %c0_76 = arith.constant 0 : index
    %82 = vector.load %arg1[%81, %c0_76] : memref<24x128xf32, #tpu.memory_space<vmem>>, vector<1x128xf32>
    %c6_77 = arith.constant 6 : index
    %c1_78 = arith.constant 1 : index
    %c0_79 = arith.constant 0 : index
    %83 = vector.load %arg8[%c6_77, %c1_78, %c0_79] : memref<8x8x128xf32, #tpu.memory_space<vmem>>, vector<1x1x128xf32>
    %84 = vector.shape_cast %83 : vector<1x1x128xf32> to vector<1x128xf32>
    %85 = vector.shape_cast %82 : vector<1x128xf32> to vector<1x1x128xf32>
    tpu.vector_store %arg8[%c6_77, %c1_78, %c0_79], %85 {strides = array<i32>} : memref<8x8x128xf32, #tpu.memory_space<vmem>>, vector<1x1x128xf32>,
    %c0_80 = arith.constant 0 : index
    %c7 = arith.constant 7 : index
    %86 = memref.load %arg0[%c0_80, %c7] : memref<2x8xi32, #tpu.memory_space<smem>>
    %87 = arith.index_cast %86 : i32 to index
    %c0_81 = arith.constant 0 : index
    %88 = vector.load %arg1[%87, %c0_81] : memref<24x128xf32, #tpu.memory_space<vmem>>, vector<1x128xf32>
    %c7_82 = arith.constant 7 : index
    %c0_83 = arith.constant 0 : index
    %c0_84 = arith.constant 0 : index
    %89 = vector.load %arg8[%c7_82, %c0_83, %c0_84] : memref<8x8x128xf32, #tpu.memory_space<vmem>>, vector<1x1x128xf32>
    %90 = vector.shape_cast %89 : vector<1x1x128xf32> to vector<1x128xf32>
    %91 = vector.shape_cast %88 : vector<1x128xf32> to vector<1x1x128xf32>
    tpu.vector_store %arg8[%c7_82, %c0_83, %c0_84], %91 {strides = array<i32>} : memref<8x8x128xf32, #tpu.memory_space<vmem>>, vector<1x1x128xf32>,
    %c1_85 = arith.constant 1 : index
    %c7_86 = arith.constant 7 : index
    %92 = memref.load %arg0[%c1_85, %c7_86] : memref<2x8xi32, #tpu.memory_space<smem>>
    %93 = arith.index_cast %92 : i32 to index
    %c0_87 = arith.constant 0 : index
    %94 = vector.load %arg1[%93, %c0_87] : memref<24x128xf32, #tpu.memory_space<vmem>>, vector<1x128xf32>
    %c7_88 = arith.constant 7 : index
    %c1_89 = arith.constant 1 : index
    %c0_90 = arith.constant 0 : index
    %95 = vector.load %arg8[%c7_88, %c1_89, %c0_90] : memref<8x8x128xf32, #tpu.memory_space<vmem>>, vector<1x1x128xf32>
    %96 = vector.shape_cast %95 : vector<1x1x128xf32> to vector<1x128xf32>
    %97 = vector.shape_cast %94 : vector<1x128xf32> to vector<1x1x128xf32>
    tpu.vector_store %arg8[%c7_88, %c1_89, %c0_90], %97 {strides = array<i32>} : memref<8x8x128xf32, #tpu.memory_space<vmem>>, vector<1x1x128xf32>,
    %c0_91 = arith.constant 0 : index
    %c0_92 = arith.constant 0 : index
    %c0_93 = arith.constant 0 : index
    %98 = vector.load %arg2[%c0_91, %c0_92, %c0_93] : memref<2x32x128xf32, #tpu.memory_space<vmem>>, vector<1x32x128xf32>
    %99 = vector.shape_cast %98 : vector<1x32x128xf32> to vector<32x128xf32>
    %c1_94 = arith.constant 1 : index
    %c0_95 = arith.constant 0 : index
    %c0_96 = arith.constant 0 : index
    %100 = vector.load %arg2[%c1_94, %c0_95, %c0_96] : memref<2x32x128xf32, #tpu.memory_space<vmem>>, vector<1x32x128xf32>
    %101 = vector.shape_cast %100 : vector<1x32x128xf32> to vector<32x128xf32>
    %c0_97 = arith.constant 0 : index
    %c0_98 = arith.constant 0 : index
    %c0_99 = arith.constant 0 : index
    %102 = vector.load %arg3[%c0_97, %c0_98, %c0_99] : memref<1x32x128xf32, #tpu.memory_space<vmem>>, vector<1x32x128xf32>
    %103 = vector.shape_cast %102 : vector<1x32x128xf32> to vector<32x128xf32>
    %c0_100 = arith.constant 0 : index
    %c0_101 = arith.constant 0 : index
    %c0_102 = arith.constant 0 : index
    %104 = vector.load %arg4[%c0_100, %c0_101, %c0_102] : memref<1x1x128xf32, #tpu.memory_space<vmem>>, vector<1x1x128xf32>
    %105 = vector.shape_cast %104 : vector<1x1x128xf32> to vector<1x128xf32>
    %cst_103 = arith.constant 0.000000e+00 : f32
    %106 = vector.broadcast %cst_103 : f32 to vector<8x32xf32>
    %cst_104 = arith.constant 0xFF800000 : f32
    %107 = vector.broadcast %cst_104 : f32 to vector<8x32xf32>
    %c0_105 = arith.constant 0 : index
    %c0_106 = arith.constant 0 : index
    %c0_107 = arith.constant 0 : index
    %108 = vector.load %arg8[%c0_105, %c0_106, %c0_107] : memref<8x8x128xf32, #tpu.memory_space<vmem>>, vector<1x8x128xf32>
    %109 = vector.shape_cast %108 : vector<1x8x128xf32> to vector<8x128xf32>
    %cst_108 = arith.constant dense<0.000000e+00> : vector<8x128xf32>
    %110 = tpu.matmul %106, %99, %cst_108 {dimension_numbers = #tpu.dot_dimension_numbers<[1], [0], [0], [1], [0, 0, 1, 1], [], []>} : vector<8x32xf32>, vector<32x128xf32>, vector<8x128xf32> -> vector<8x128xf32>
    %111 = arith.addf %109, %110 : vector<8x128xf32>
    %112 = arith.negf %111 : vector<8x128xf32>
    %113 = math.exp %112 : vector<8x128xf32>
    %cst_109 = arith.constant 1.000000e+00 : f32
    %114 = vector.broadcast %cst_109 : f32 to vector<8x128xf32>
    %115 = arith.addf %114, %113 : vector<8x128xf32>
    %116 = arith.divf %114, %115 : vector<8x128xf32>
    %117 = math.tanh %111 : vector<8x128xf32>
    %118 = vector.extract_strided_slice %116 {offsets = [0, 0], sizes = [8, 32], strides = [1, 1]} : vector<8x128xf32> to vector<8x32xf32>
    %119 = vector.extract_strided_slice %116 {offsets = [0, 32], sizes = [8, 32], strides = [1, 1]} : vector<8x128xf32> to vector<8x32xf32>
    %120 = vector.extract_strided_slice %117 {offsets = [0, 64], sizes = [8, 32], strides = [1, 1]} : vector<8x128xf32> to vector<8x32xf32>
    %121 = vector.extract_strided_slice %116 {offsets = [0, 96], sizes = [8, 32], strides = [1, 1]} : vector<8x128xf32> to vector<8x32xf32>
    %122 = arith.mulf %119, %106 : vector<8x32xf32>
    %123 = arith.mulf %118, %120 : vector<8x32xf32>
    %124 = arith.addf %122, %123 : vector<8x32xf32>
    %125 = math.tanh %124 : vector<8x32xf32>
    %126 = arith.mulf %121, %125 : vector<8x32xf32>
    %cst_110 = arith.constant dense<0.000000e+00> : vector<8x128xf32>
    %127 = tpu.matmul %126, %103, %cst_110 {dimension_numbers = #tpu.dot_dimension_numbers<[1], [0], [0], [1], [0, 0, 1, 1], [], []>} : vector<8x32xf32>, vector<32x128xf32>, vector<8x128xf32> -> vector<8x128xf32>
    %128 = vector.broadcast %105 : vector<1x128xf32> to vector<8x128xf32>
    %129 = arith.addf %127, %128 : vector<8x128xf32>
    %c1_111 = arith.constant 1 : index
    %c0_112 = arith.constant 0 : index
    %c0_113 = arith.constant 0 : index
    %130 = vector.load %arg8[%c1_111, %c0_112, %c0_113] : memref<8x8x128xf32, #tpu.memory_space<vmem>>, vector<1x8x128xf32>
    %131 = vector.shape_cast %130 : vector<1x8x128xf32> to vector<8x128xf32>
    %cst_114 = arith.constant dense<0.000000e+00> : vector<8x128xf32>
    %132 = tpu.matmul %126, %99, %cst_114 {dimension_numbers = #tpu.dot_dimension_numbers<[1], [0], [0], [1], [0, 0, 1, 1], [], []>} : vector<8x32xf32>, vector<32x128xf32>, vector<8x128xf32> -> vector<8x128xf32>
    %133 = arith.addf %131, %132 : vector<8x128xf32>
    %134 = arith.negf %133 : vector<8x128xf32>
    %135 = math.exp %134 : vector<8x128xf32>
    %cst_115 = arith.constant 1.000000e+00 : f32
    %136 = vector.broadcast %cst_115 : f32 to vector<8x128xf32>
    %137 = arith.addf %136, %135 : vector<8x128xf32>
    %138 = arith.divf %136, %137 : vector<8x128xf32>
    %139 = math.tanh %133 : vector<8x128xf32>
    %140 = vector.extract_strided_slice %138 {offsets = [0, 0], sizes = [8, 32], strides = [1, 1]} : vector<8x128xf32> to vector<8x32xf32>
    %141 = vector.extract_strided_slice %138 {offsets = [0, 32], sizes = [8, 32], strides = [1, 1]} : vector<8x128xf32> to vector<8x32xf32>
    %142 = vector.extract_strided_slice %139 {offsets = [0, 64], sizes = [8, 32], strides = [1, 1]} : vector<8x128xf32> to vector<8x32xf32>
    %143 = vector.extract_strided_slice %138 {offsets = [0, 96], sizes = [8, 32], strides = [1, 1]} : vector<8x128xf32> to vector<8x32xf32>
    %144 = arith.mulf %141, %124 : vector<8x32xf32>
    %145 = arith.mulf %140, %142 : vector<8x32xf32>
    %146 = arith.addf %144, %145 : vector<8x32xf32>
    %147 = math.tanh %146 : vector<8x32xf32>
    %148 = arith.mulf %143, %147 : vector<8x32xf32>
    %cst_116 = arith.constant dense<0.000000e+00> : vector<8x128xf32>
    %149 = tpu.matmul %148, %103, %cst_116 {dimension_numbers = #tpu.dot_dimension_numbers<[1], [0], [0], [1], [0, 0, 1, 1], [], []>} : vector<8x32xf32>, vector<32x128xf32>, vector<8x128xf32> -> vector<8x128xf32>
    %150 = vector.broadcast %105 : vector<1x128xf32> to vector<8x128xf32>
    %151 = arith.addf %149, %150 : vector<8x128xf32>
    %cst_117 = arith.constant dense<0.000000e+00> : vector<8x128xf32>
    %152 = tpu.matmul %106, %101, %cst_117 {dimension_numbers = #tpu.dot_dimension_numbers<[1], [0], [0], [1], [0, 0, 1, 1], [], []>} : vector<8x32xf32>, vector<32x128xf32>, vector<8x128xf32> -> vector<8x128xf32>
    %153 = arith.addf %129, %152 : vector<8x128xf32>
    %154 = arith.negf %153 : vector<8x128xf32>
    %155 = math.exp %154 : vector<8x128xf32>
    %cst_118 = arith.constant 1.000000e+00 : f32
    %156 = vector.broadcast %cst_118 : f32 to vector<8x128xf32>
    %157 = arith.addf %156, %155 : vector<8x128xf32>
    %158 = arith.divf %156, %157 : vector<8x128xf32>
    %159 = math.tanh %153 : vector<8x128xf32>
    %160 = vector.extract_strided_slice %158 {offsets = [0, 0], sizes = [8, 32], strides = [1, 1]} : vector<8x128xf32> to vector<8x32xf32>
    %161 = vector.extract_strided_slice %158 {offsets = [0, 32], sizes = [8, 32], strides = [1, 1]} : vector<8x128xf32> to vector<8x32xf32>
    %162 = vector.extract_strided_slice %159 {offsets = [0, 64], sizes = [8, 32], strides = [1, 1]} : vector<8x128xf32> to vector<8x32xf32>
    %163 = vector.extract_strided_slice %158 {offsets = [0, 96], sizes = [8, 32], strides = [1, 1]} : vector<8x128xf32> to vector<8x32xf32>
    %164 = arith.mulf %161, %106 : vector<8x32xf32>
    %165 = arith.mulf %160, %162 : vector<8x32xf32>
    %166 = arith.addf %164, %165 : vector<8x32xf32>
    %167 = math.tanh %166 : vector<8x32xf32>
    %168 = arith.mulf %163, %167 : vector<8x32xf32>
    %169 = arith.maximumf %107, %168 : vector<8x32xf32>
    %c2_119 = arith.constant 2 : index
    %c0_120 = arith.constant 0 : index
    %c0_121 = arith.constant 0 : index
    %170 = vector.load %arg8[%c2_119, %c0_120, %c0_121] : memref<8x8x128xf32, #tpu.memory_space<vmem>>, vector<1x8x128xf32>
    %171 = vector.shape_cast %170 : vector<1x8x128xf32> to vector<8x128xf32>
    %cst_122 = arith.constant dense<0.000000e+00> : vector<8x128xf32>
    %172 = tpu.matmul %148, %99, %cst_122 {dimension_numbers = #tpu.dot_dimension_numbers<[1], [0], [0], [1], [0, 0, 1, 1], [], []>} : vector<8x32xf32>, vector<32x128xf32>, vector<8x128xf32> -> vector<8x128xf32>
    %173 = arith.addf %171, %172 : vector<8x128xf32>
    %174 = arith.negf %173 : vector<8x128xf32>
    %175 = math.exp %174 : vector<8x128xf32>
    %cst_123 = arith.constant 1.000000e+00 : f32
    %176 = vector.broadcast %cst_123 : f32 to vector<8x128xf32>
    %177 = arith.addf %176, %175 : vector<8x128xf32>
    %178 = arith.divf %176, %177 : vector<8x128xf32>
    %179 = math.tanh %173 : vector<8x128xf32>
    %180 = vector.extract_strided_slice %178 {offsets = [0, 0], sizes = [8, 32], strides = [1, 1]} : vector<8x128xf32> to vector<8x32xf32>
    %181 = vector.extract_strided_slice %178 {offsets = [0, 32], sizes = [8, 32], strides = [1, 1]} : vector<8x128xf32> to vector<8x32xf32>
    %182 = vector.extract_strided_slice %179 {offsets = [0, 64], sizes = [8, 32], strides = [1, 1]} : vector<8x128xf32> to vector<8x32xf32>
    %183 = vector.extract_strided_slice %178 {offsets = [0, 96], sizes = [8, 32], strides = [1, 1]} : vector<8x128xf32> to vector<8x32xf32>
    %184 = arith.mulf %181, %146 : vector<8x32xf32>
    %185 = arith.mulf %180, %182 : vector<8x32xf32>
    %186 = arith.addf %184, %185 : vector<8x32xf32>
    %187 = math.tanh %186 : vector<8x32xf32>
    %188 = arith.mulf %183, %187 : vector<8x32xf32>
    %cst_124 = arith.constant dense<0.000000e+00> : vector<8x128xf32>
    %189 = tpu.matmul %188, %103, %cst_124 {dimension_numbers = #tpu.dot_dimension_numbers<[1], [0], [0], [1], [0, 0, 1, 1], [], []>} : vector<8x32xf32>, vector<32x128xf32>, vector<8x128xf32> -> vector<8x128xf32>
    %190 = vector.broadcast %105 : vector<1x128xf32> to vector<8x128xf32>
    %191 = arith.addf %189, %190 : vector<8x128xf32>
    %cst_125 = arith.constant dense<0.000000e+00> : vector<8x128xf32>
    %192 = tpu.matmul %168, %101, %cst_125 {dimension_numbers = #tpu.dot_dimension_numbers<[1], [0], [0], [1], [0, 0, 1, 1], [], []>} : vector<8x32xf32>, vector<32x128xf32>, vector<8x128xf32> -> vector<8x128xf32>
    %193 = arith.addf %151, %192 : vector<8x128xf32>
    %194 = arith.negf %193 : vector<8x128xf32>
    %195 = math.exp %194 : vector<8x128xf32>
    %cst_126 = arith.constant 1.000000e+00 : f32
    %196 = vector.broadcast %cst_126 : f32 to vector<8x128xf32>
    %197 = arith.addf %196, %195 : vector<8x128xf32>
    %198 = arith.divf %196, %197 : vector<8x128xf32>
    %199 = math.tanh %193 : vector<8x128xf32>
    %200 = vector.extract_strided_slice %198 {offsets = [0, 0], sizes = [8, 32], strides = [1, 1]} : vector<8x128xf32> to vector<8x32xf32>
    %201 = vector.extract_strided_slice %198 {offsets = [0, 32], sizes = [8, 32], strides = [1, 1]} : vector<8x128xf32> to vector<8x32xf32>
    %202 = vector.extract_strided_slice %199 {offsets = [0, 64], sizes = [8, 32], strides = [1, 1]} : vector<8x128xf32> to vector<8x32xf32>
    %203 = vector.extract_strided_slice %198 {offsets = [0, 96], sizes = [8, 32], strides = [1, 1]} : vector<8x128xf32> to vector<8x32xf32>
    %204 = arith.mulf %201, %166 : vector<8x32xf32>
    %205 = arith.mulf %200, %202 : vector<8x32xf32>
    %206 = arith.addf %204, %205 : vector<8x32xf32>
    %207 = math.tanh %206 : vector<8x32xf32>
    %208 = arith.mulf %203, %207 : vector<8x32xf32>
    %209 = arith.maximumf %169, %208 : vector<8x32xf32>
    %c3_127 = arith.constant 3 : index
    %c0_128 = arith.constant 0 : index
    %c0_129 = arith.constant 0 : index
    %210 = vector.load %arg8[%c3_127, %c0_128, %c0_129] : memref<8x8x128xf32, #tpu.memory_space<vmem>>, vector<1x8x128xf32>
    %211 = vector.shape_cast %210 : vector<1x8x128xf32> to vector<8x128xf32>
    %cst_130 = arith.constant dense<0.000000e+00> : vector<8x128xf32>
    %212 = tpu.matmul %188, %99, %cst_130 {dimension_numbers = #tpu.dot_dimension_numbers<[1], [0], [0], [1], [0, 0, 1, 1], [], []>} : vector<8x32xf32>, vector<32x128xf32>, vector<8x128xf32> -> vector<8x128xf32>
    %213 = arith.addf %211, %212 : vector<8x128xf32>
    %214 = arith.negf %213 : vector<8x128xf32>
    %215 = math.exp %214 : vector<8x128xf32>
    %cst_131 = arith.constant 1.000000e+00 : f32
    %216 = vector.broadcast %cst_131 : f32 to vector<8x128xf32>
    %217 = arith.addf %216, %215 : vector<8x128xf32>
    %218 = arith.divf %216, %217 : vector<8x128xf32>
    %219 = math.tanh %213 : vector<8x128xf32>
    %220 = vector.extract_strided_slice %218 {offsets = [0, 0], sizes = [8, 32], strides = [1, 1]} : vector<8x128xf32> to vector<8x32xf32>
    %221 = vector.extract_strided_slice %218 {offsets = [0, 32], sizes = [8, 32], strides = [1, 1]} : vector<8x128xf32> to vector<8x32xf32>
    %222 = vector.extract_strided_slice %219 {offsets = [0, 64], sizes = [8, 32], strides = [1, 1]} : vector<8x128xf32> to vector<8x32xf32>
    %223 = vector.extract_strided_slice %218 {offsets = [0, 96], sizes = [8, 32], strides = [1, 1]} : vector<8x128xf32> to vector<8x32xf32>
    %224 = arith.mulf %221, %186 : vector<8x32xf32>
    %225 = arith.mulf %220, %222 : vector<8x32xf32>
    %226 = arith.addf %224, %225 : vector<8x32xf32>
    %227 = math.tanh %226 : vector<8x32xf32>
    %228 = arith.mulf %223, %227 : vector<8x32xf32>
    %cst_132 = arith.constant dense<0.000000e+00> : vector<8x128xf32>
    %229 = tpu.matmul %228, %103, %cst_132 {dimension_numbers = #tpu.dot_dimension_numbers<[1], [0], [0], [1], [0, 0, 1, 1], [], []>} : vector<8x32xf32>, vector<32x128xf32>, vector<8x128xf32> -> vector<8x128xf32>
    %230 = vector.broadcast %105 : vector<1x128xf32> to vector<8x128xf32>
    %231 = arith.addf %229, %230 : vector<8x128xf32>
    %cst_133 = arith.constant dense<0.000000e+00> : vector<8x128xf32>
    %232 = tpu.matmul %208, %101, %cst_133 {dimension_numbers = #tpu.dot_dimension_numbers<[1], [0], [0], [1], [0, 0, 1, 1], [], []>} : vector<8x32xf32>, vector<32x128xf32>, vector<8x128xf32> -> vector<8x128xf32>
    %233 = arith.addf %191, %232 : vector<8x128xf32>
    %234 = arith.negf %233 : vector<8x128xf32>
    %235 = math.exp %234 : vector<8x128xf32>
    %cst_134 = arith.constant 1.000000e+00 : f32
    %236 = vector.broadcast %cst_134 : f32 to vector<8x128xf32>
    %237 = arith.addf %236, %235 : vector<8x128xf32>
    %238 = arith.divf %236, %237 : vector<8x128xf32>
    %239 = math.tanh %233 : vector<8x128xf32>
    %240 = vector.extract_strided_slice %238 {offsets = [0, 0], sizes = [8, 32], strides = [1, 1]} : vector<8x128xf32> to vector<8x32xf32>
    %241 = vector.extract_strided_slice %238 {offsets = [0, 32], sizes = [8, 32], strides = [1, 1]} : vector<8x128xf32> to vector<8x32xf32>
    %242 = vector.extract_strided_slice %239 {offsets = [0, 64], sizes = [8, 32], strides = [1, 1]} : vector<8x128xf32> to vector<8x32xf32>
    %243 = vector.extract_strided_slice %238 {offsets = [0, 96], sizes = [8, 32], strides = [1, 1]} : vector<8x128xf32> to vector<8x32xf32>
    %244 = arith.mulf %241, %206 : vector<8x32xf32>
    %245 = arith.mulf %240, %242 : vector<8x32xf32>
    %246 = arith.addf %244, %245 : vector<8x32xf32>
    %247 = math.tanh %246 : vector<8x32xf32>
    %248 = arith.mulf %243, %247 : vector<8x32xf32>
    %249 = arith.maximumf %209, %248 : vector<8x32xf32>
    %c4_135 = arith.constant 4 : index
    %c0_136 = arith.constant 0 : index
    %c0_137 = arith.constant 0 : index
    %250 = vector.load %arg8[%c4_135, %c0_136, %c0_137] : memref<8x8x128xf32, #tpu.memory_space<vmem>>, vector<1x8x128xf32>
    %251 = vector.shape_cast %250 : vector<1x8x128xf32> to vector<8x128xf32>
    %cst_138 = arith.constant dense<0.000000e+00> : vector<8x128xf32>
    %252 = tpu.matmul %228, %99, %cst_138 {dimension_numbers = #tpu.dot_dimension_numbers<[1], [0], [0], [1], [0, 0, 1, 1], [], []>} : vector<8x32xf32>, vector<32x128xf32>, vector<8x128xf32> -> vector<8x128xf32>
    %253 = arith.addf %251, %252 : vector<8x128xf32>
    %254 = arith.negf %253 : vector<8x128xf32>
    %255 = math.exp %254 : vector<8x128xf32>
    %cst_139 = arith.constant 1.000000e+00 : f32
    %256 = vector.broadcast %cst_139 : f32 to vector<8x128xf32>
    %257 = arith.addf %256, %255 : vector<8x128xf32>
    %258 = arith.divf %256, %257 : vector<8x128xf32>
    %259 = math.tanh %253 : vector<8x128xf32>
    %260 = vector.extract_strided_slice %258 {offsets = [0, 0], sizes = [8, 32], strides = [1, 1]} : vector<8x128xf32> to vector<8x32xf32>
    %261 = vector.extract_strided_slice %258 {offsets = [0, 32], sizes = [8, 32], strides = [1, 1]} : vector<8x128xf32> to vector<8x32xf32>
    %262 = vector.extract_strided_slice %259 {offsets = [0, 64], sizes = [8, 32], strides = [1, 1]} : vector<8x128xf32> to vector<8x32xf32>
    %263 = vector.extract_strided_slice %258 {offsets = [0, 96], sizes = [8, 32], strides = [1, 1]} : vector<8x128xf32> to vector<8x32xf32>
    %264 = arith.mulf %261, %226 : vector<8x32xf32>
    %265 = arith.mulf %260, %262 : vector<8x32xf32>
    %266 = arith.addf %264, %265 : vector<8x32xf32>
    %267 = math.tanh %266 : vector<8x32xf32>
    %268 = arith.mulf %263, %267 : vector<8x32xf32>
    %cst_140 = arith.constant dense<0.000000e+00> : vector<8x128xf32>
    %269 = tpu.matmul %268, %103, %cst_140 {dimension_numbers = #tpu.dot_dimension_numbers<[1], [0], [0], [1], [0, 0, 1, 1], [], []>} : vector<8x32xf32>, vector<32x128xf32>, vector<8x128xf32> -> vector<8x128xf32>
    %270 = vector.broadcast %105 : vector<1x128xf32> to vector<8x128xf32>
    %271 = arith.addf %269, %270 : vector<8x128xf32>
    %cst_141 = arith.constant dense<0.000000e+00> : vector<8x128xf32>
    %272 = tpu.matmul %248, %101, %cst_141 {dimension_numbers = #tpu.dot_dimension_numbers<[1], [0], [0], [1], [0, 0, 1, 1], [], []>} : vector<8x32xf32>, vector<32x128xf32>, vector<8x128xf32> -> vector<8x128xf32>
    %273 = arith.addf %231, %272 : vector<8x128xf32>
    %274 = arith.negf %273 : vector<8x128xf32>
    %275 = math.exp %274 : vector<8x128xf32>
    %cst_142 = arith.constant 1.000000e+00 : f32
    %276 = vector.broadcast %cst_142 : f32 to vector<8x128xf32>
    %277 = arith.addf %276, %275 : vector<8x128xf32>
    %278 = arith.divf %276, %277 : vector<8x128xf32>
    %279 = math.tanh %273 : vector<8x128xf32>
    %280 = vector.extract_strided_slice %278 {offsets = [0, 0], sizes = [8, 32], strides = [1, 1]} : vector<8x128xf32> to vector<8x32xf32>
    %281 = vector.extract_strided_slice %278 {offsets = [0, 32], sizes = [8, 32], strides = [1, 1]} : vector<8x128xf32> to vector<8x32xf32>
    %282 = vector.extract_strided_slice %279 {offsets = [0, 64], sizes = [8, 32], strides = [1, 1]} : vector<8x128xf32> to vector<8x32xf32>
    %283 = vector.extract_strided_slice %278 {offsets = [0, 96], sizes = [8, 32], strides = [1, 1]} : vector<8x128xf32> to vector<8x32xf32>
    %284 = arith.mulf %281, %246 : vector<8x32xf32>
    %285 = arith.mulf %280, %282 : vector<8x32xf32>
    %286 = arith.addf %284, %285 : vector<8x32xf32>
    %287 = math.tanh %286 : vector<8x32xf32>
    %288 = arith.mulf %283, %287 : vector<8x32xf32>
    %289 = arith.maximumf %249, %288 : vector<8x32xf32>
    %c5_143 = arith.constant 5 : index
    %c0_144 = arith.constant 0 : index
    %c0_145 = arith.constant 0 : index
    %290 = vector.load %arg8[%c5_143, %c0_144, %c0_145] : memref<8x8x128xf32, #tpu.memory_space<vmem>>, vector<1x8x128xf32>
    %291 = vector.shape_cast %290 : vector<1x8x128xf32> to vector<8x128xf32>
    %cst_146 = arith.constant dense<0.000000e+00> : vector<8x128xf32>
    %292 = tpu.matmul %268, %99, %cst_146 {dimension_numbers = #tpu.dot_dimension_numbers<[1], [0], [0], [1], [0, 0, 1, 1], [], []>} : vector<8x32xf32>, vector<32x128xf32>, vector<8x128xf32> -> vector<8x128xf32>
    %293 = arith.addf %291, %292 : vector<8x128xf32>
    %294 = arith.negf %293 : vector<8x128xf32>
    %295 = math.exp %294 : vector<8x128xf32>
    %cst_147 = arith.constant 1.000000e+00 : f32
    %296 = vector.broadcast %cst_147 : f32 to vector<8x128xf32>
    %297 = arith.addf %296, %295 : vector<8x128xf32>
    %298 = arith.divf %296, %297 : vector<8x128xf32>
    %299 = math.tanh %293 : vector<8x128xf32>
    %300 = vector.extract_strided_slice %298 {offsets = [0, 0], sizes = [8, 32], strides = [1, 1]} : vector<8x128xf32> to vector<8x32xf32>
    %301 = vector.extract_strided_slice %298 {offsets = [0, 32], sizes = [8, 32], strides = [1, 1]} : vector<8x128xf32> to vector<8x32xf32>
    %302 = vector.extract_strided_slice %299 {offsets = [0, 64], sizes = [8, 32], strides = [1, 1]} : vector<8x128xf32> to vector<8x32xf32>
    %303 = vector.extract_strided_slice %298 {offsets = [0, 96], sizes = [8, 32], strides = [1, 1]} : vector<8x128xf32> to vector<8x32xf32>
    %304 = arith.mulf %301, %266 : vector<8x32xf32>
    %305 = arith.mulf %300, %302 : vector<8x32xf32>
    %306 = arith.addf %304, %305 : vector<8x32xf32>
    %307 = math.tanh %306 : vector<8x32xf32>
    %308 = arith.mulf %303, %307 : vector<8x32xf32>
    %cst_148 = arith.constant dense<0.000000e+00> : vector<8x128xf32>
    %309 = tpu.matmul %308, %103, %cst_148 {dimension_numbers = #tpu.dot_dimension_numbers<[1], [0], [0], [1], [0, 0, 1, 1], [], []>} : vector<8x32xf32>, vector<32x128xf32>, vector<8x128xf32> -> vector<8x128xf32>
    %310 = vector.broadcast %105 : vector<1x128xf32> to vector<8x128xf32>
    %311 = arith.addf %309, %310 : vector<8x128xf32>
    %cst_149 = arith.constant dense<0.000000e+00> : vector<8x128xf32>
    %312 = tpu.matmul %288, %101, %cst_149 {dimension_numbers = #tpu.dot_dimension_numbers<[1], [0], [0], [1], [0, 0, 1, 1], [], []>} : vector<8x32xf32>, vector<32x128xf32>, vector<8x128xf32> -> vector<8x128xf32>
    %313 = arith.addf %271, %312 : vector<8x128xf32>
    %314 = arith.negf %313 : vector<8x128xf32>
    %315 = math.exp %314 : vector<8x128xf32>
    %cst_150 = arith.constant 1.000000e+00 : f32
    %316 = vector.broadcast %cst_150 : f32 to vector<8x128xf32>
    %317 = arith.addf %316, %315 : vector<8x128xf32>
    %318 = arith.divf %316, %317 : vector<8x128xf32>
    %319 = math.tanh %313 : vector<8x128xf32>
    %320 = vector.extract_strided_slice %318 {offsets = [0, 0], sizes = [8, 32], strides = [1, 1]} : vector<8x128xf32> to vector<8x32xf32>
    %321 = vector.extract_strided_slice %318 {offsets = [0, 32], sizes = [8, 32], strides = [1, 1]} : vector<8x128xf32> to vector<8x32xf32>
    %322 = vector.extract_strided_slice %319 {offsets = [0, 64], sizes = [8, 32], strides = [1, 1]} : vector<8x128xf32> to vector<8x32xf32>
    %323 = vector.extract_strided_slice %318 {offsets = [0, 96], sizes = [8, 32], strides = [1, 1]} : vector<8x128xf32> to vector<8x32xf32>
    %324 = arith.mulf %321, %286 : vector<8x32xf32>
    %325 = arith.mulf %320, %322 : vector<8x32xf32>
    %326 = arith.addf %324, %325 : vector<8x32xf32>
    %327 = math.tanh %326 : vector<8x32xf32>
    %328 = arith.mulf %323, %327 : vector<8x32xf32>
    %329 = arith.maximumf %289, %328 : vector<8x32xf32>
    %c6_151 = arith.constant 6 : index
    %c0_152 = arith.constant 0 : index
    %c0_153 = arith.constant 0 : index
    %330 = vector.load %arg8[%c6_151, %c0_152, %c0_153] : memref<8x8x128xf32, #tpu.memory_space<vmem>>, vector<1x8x128xf32>
    %331 = vector.shape_cast %330 : vector<1x8x128xf32> to vector<8x128xf32>
    %cst_154 = arith.constant dense<0.000000e+00> : vector<8x128xf32>
    %332 = tpu.matmul %308, %99, %cst_154 {dimension_numbers = #tpu.dot_dimension_numbers<[1], [0], [0], [1], [0, 0, 1, 1], [], []>} : vector<8x32xf32>, vector<32x128xf32>, vector<8x128xf32> -> vector<8x128xf32>
    %333 = arith.addf %331, %332 : vector<8x128xf32>
    %334 = arith.negf %333 : vector<8x128xf32>
    %335 = math.exp %334 : vector<8x128xf32>
    %cst_155 = arith.constant 1.000000e+00 : f32
    %336 = vector.broadcast %cst_155 : f32 to vector<8x128xf32>
    %337 = arith.addf %336, %335 : vector<8x128xf32>
    %338 = arith.divf %336, %337 : vector<8x128xf32>
    %339 = math.tanh %333 : vector<8x128xf32>
    %340 = vector.extract_strided_slice %338 {offsets = [0, 0], sizes = [8, 32], strides = [1, 1]} : vector<8x128xf32> to vector<8x32xf32>
    %341 = vector.extract_strided_slice %338 {offsets = [0, 32], sizes = [8, 32], strides = [1, 1]} : vector<8x128xf32> to vector<8x32xf32>
    %342 = vector.extract_strided_slice %339 {offsets = [0, 64], sizes = [8, 32], strides = [1, 1]} : vector<8x128xf32> to vector<8x32xf32>
    %343 = vector.extract_strided_slice %338 {offsets = [0, 96], sizes = [8, 32], strides = [1, 1]} : vector<8x128xf32> to vector<8x32xf32>
    %344 = arith.mulf %341, %306 : vector<8x32xf32>
    %345 = arith.mulf %340, %342 : vector<8x32xf32>
    %346 = arith.addf %344, %345 : vector<8x32xf32>
    %347 = math.tanh %346 : vector<8x32xf32>
    %348 = arith.mulf %343, %347 : vector<8x32xf32>
    %cst_156 = arith.constant dense<0.000000e+00> : vector<8x128xf32>
    %349 = tpu.matmul %348, %103, %cst_156 {dimension_numbers = #tpu.dot_dimension_numbers<[1], [0], [0], [1], [0, 0, 1, 1], [], []>} : vector<8x32xf32>, vector<32x128xf32>, vector<8x128xf32> -> vector<8x128xf32>
    %350 = vector.broadcast %105 : vector<1x128xf32> to vector<8x128xf32>
    %351 = arith.addf %349, %350 : vector<8x128xf32>
    %cst_157 = arith.constant dense<0.000000e+00> : vector<8x128xf32>
    %352 = tpu.matmul %328, %101, %cst_157 {dimension_numbers = #tpu.dot_dimension_numbers<[1], [0], [0], [1], [0, 0, 1, 1], [], []>} : vector<8x32xf32>, vector<32x128xf32>, vector<8x128xf32> -> vector<8x128xf32>
    %353 = arith.addf %311, %352 : vector<8x128xf32>
    %354 = arith.negf %353 : vector<8x128xf32>
    %355 = math.exp %354 : vector<8x128xf32>
    %cst_158 = arith.constant 1.000000e+00 : f32
    %356 = vector.broadcast %cst_158 : f32 to vector<8x128xf32>
    %357 = arith.addf %356, %355 : vector<8x128xf32>
    %358 = arith.divf %356, %357 : vector<8x128xf32>
    %359 = math.tanh %353 : vector<8x128xf32>
    %360 = vector.extract_strided_slice %358 {offsets = [0, 0], sizes = [8, 32], strides = [1, 1]} : vector<8x128xf32> to vector<8x32xf32>
    %361 = vector.extract_strided_slice %358 {offsets = [0, 32], sizes = [8, 32], strides = [1, 1]} : vector<8x128xf32> to vector<8x32xf32>
    %362 = vector.extract_strided_slice %359 {offsets = [0, 64], sizes = [8, 32], strides = [1, 1]} : vector<8x128xf32> to vector<8x32xf32>
    %363 = vector.extract_strided_slice %358 {offsets = [0, 96], sizes = [8, 32], strides = [1, 1]} : vector<8x128xf32> to vector<8x32xf32>
    %364 = arith.mulf %361, %326 : vector<8x32xf32>
    %365 = arith.mulf %360, %362 : vector<8x32xf32>
    %366 = arith.addf %364, %365 : vector<8x32xf32>
    %367 = math.tanh %366 : vector<8x32xf32>
    %368 = arith.mulf %363, %367 : vector<8x32xf32>
    %369 = arith.maximumf %329, %368 : vector<8x32xf32>
    %c7_159 = arith.constant 7 : index
    %c0_160 = arith.constant 0 : index
    %c0_161 = arith.constant 0 : index
    %370 = vector.load %arg8[%c7_159, %c0_160, %c0_161] : memref<8x8x128xf32, #tpu.memory_space<vmem>>, vector<1x8x128xf32>
    %371 = vector.shape_cast %370 : vector<1x8x128xf32> to vector<8x128xf32>
    %cst_162 = arith.constant dense<0.000000e+00> : vector<8x128xf32>
    %372 = tpu.matmul %348, %99, %cst_162 {dimension_numbers = #tpu.dot_dimension_numbers<[1], [0], [0], [1], [0, 0, 1, 1], [], []>} : vector<8x32xf32>, vector<32x128xf32>, vector<8x128xf32> -> vector<8x128xf32>
    %373 = arith.addf %371, %372 : vector<8x128xf32>
    %374 = arith.negf %373 : vector<8x128xf32>
    %375 = math.exp %374 : vector<8x128xf32>
    %cst_163 = arith.constant 1.000000e+00 : f32
    %376 = vector.broadcast %cst_163 : f32 to vector<8x128xf32>
    %377 = arith.addf %376, %375 : vector<8x128xf32>
    %378 = arith.divf %376, %377 : vector<8x128xf32>
    %379 = math.tanh %373 : vector<8x128xf32>
    %380 = vector.extract_strided_slice %378 {offsets = [0, 0], sizes = [8, 32], strides = [1, 1]} : vector<8x128xf32> to vector<8x32xf32>
    %381 = vector.extract_strided_slice %378 {offsets = [0, 32], sizes = [8, 32], strides = [1, 1]} : vector<8x128xf32> to vector<8x32xf32>
    %382 = vector.extract_strided_slice %379 {offsets = [0, 64], sizes = [8, 32], strides = [1, 1]} : vector<8x128xf32> to vector<8x32xf32>
    %383 = vector.extract_strided_slice %378 {offsets = [0, 96], sizes = [8, 32], strides = [1, 1]} : vector<8x128xf32> to vector<8x32xf32>
    %384 = arith.mulf %381, %346 : vector<8x32xf32>
    %385 = arith.mulf %380, %382 : vector<8x32xf32>
    %386 = arith.addf %384, %385 : vector<8x32xf32>
    %387 = math.tanh %386 : vector<8x32xf32>
    %388 = arith.mulf %383, %387 : vector<8x32xf32>
    %cst_164 = arith.constant dense<0.000000e+00> : vector<8x128xf32>
    %389 = tpu.matmul %388, %103, %cst_164 {dimension_numbers = #tpu.dot_dimension_numbers<[1], [0], [0], [1], [0, 0, 1, 1], [], []>} : vector<8x32xf32>, vector<32x128xf32>, vector<8x128xf32> -> vector<8x128xf32>
    %390 = vector.broadcast %105 : vector<1x128xf32> to vector<8x128xf32>
    %391 = arith.addf %389, %390 : vector<8x128xf32>
    %cst_165 = arith.constant dense<0.000000e+00> : vector<8x128xf32>
    %392 = tpu.matmul %368, %101, %cst_165 {dimension_numbers = #tpu.dot_dimension_numbers<[1], [0], [0], [1], [0, 0, 1, 1], [], []>} : vector<8x32xf32>, vector<32x128xf32>, vector<8x128xf32> -> vector<8x128xf32>
    %393 = arith.addf %351, %392 : vector<8x128xf32>
    %394 = arith.negf %393 : vector<8x128xf32>
    %395 = math.exp %394 : vector<8x128xf32>
    %cst_166 = arith.constant 1.000000e+00 : f32
    %396 = vector.broadcast %cst_166 : f32 to vector<8x128xf32>
    %397 = arith.addf %396, %395 : vector<8x128xf32>
    %398 = arith.divf %396, %397 : vector<8x128xf32>
    %399 = math.tanh %393 : vector<8x128xf32>
    %400 = vector.extract_strided_slice %398 {offsets = [0, 0], sizes = [8, 32], strides = [1, 1]} : vector<8x128xf32> to vector<8x32xf32>
    %401 = vector.extract_strided_slice %398 {offsets = [0, 32], sizes = [8, 32], strides = [1, 1]} : vector<8x128xf32> to vector<8x32xf32>
    %402 = vector.extract_strided_slice %399 {offsets = [0, 64], sizes = [8, 32], strides = [1, 1]} : vector<8x128xf32> to vector<8x32xf32>
    %403 = vector.extract_strided_slice %398 {offsets = [0, 96], sizes = [8, 32], strides = [1, 1]} : vector<8x128xf32> to vector<8x32xf32>
    %404 = arith.mulf %401, %366 : vector<8x32xf32>
    %405 = arith.mulf %400, %402 : vector<8x32xf32>
    %406 = arith.addf %404, %405 : vector<8x32xf32>
    %407 = math.tanh %406 : vector<8x32xf32>
    %408 = arith.mulf %403, %407 : vector<8x32xf32>
    %409 = arith.maximumf %369, %408 : vector<8x32xf32>
    %cst_167 = arith.constant dense<0.000000e+00> : vector<8x128xf32>
    %410 = tpu.matmul %408, %101, %cst_167 {dimension_numbers = #tpu.dot_dimension_numbers<[1], [0], [0], [1], [0, 0, 1, 1], [], []>} : vector<8x32xf32>, vector<32x128xf32>, vector<8x128xf32> -> vector<8x128xf32>
    %411 = arith.addf %391, %410 : vector<8x128xf32>
    %412 = arith.negf %411 : vector<8x128xf32>
    %413 = math.exp %412 : vector<8x128xf32>
    %cst_168 = arith.constant 1.000000e+00 : f32
    %414 = vector.broadcast %cst_168 : f32 to vector<8x128xf32>
    %415 = arith.addf %414, %413 : vector<8x128xf32>
    %416 = arith.divf %414, %415 : vector<8x128xf32>
    %417 = math.tanh %411 : vector<8x128xf32>
    %418 = vector.extract_strided_slice %416 {offsets = [0, 0], sizes = [8, 32], strides = [1, 1]} : vector<8x128xf32> to vector<8x32xf32>
    %419 = vector.extract_strided_slice %416 {offsets = [0, 32], sizes = [8, 32], strides = [1, 1]} : vector<8x128xf32> to vector<8x32xf32>
    %420 = vector.extract_strided_slice %417 {offsets = [0, 64], sizes = [8, 32], strides = [1, 1]} : vector<8x128xf32> to vector<8x32xf32>
    %421 = vector.extract_strided_slice %416 {offsets = [0, 96], sizes = [8, 32], strides = [1, 1]} : vector<8x128xf32> to vector<8x32xf32>
    %422 = arith.mulf %419, %406 : vector<8x32xf32>
    %423 = arith.mulf %418, %420 : vector<8x32xf32>
    %424 = arith.addf %422, %423 : vector<8x32xf32>
    %425 = math.tanh %424 : vector<8x32xf32>
    %426 = arith.mulf %421, %425 : vector<8x32xf32>
    %427 = arith.maximumf %409, %426 : vector<8x32xf32>
    %c0_169 = arith.constant 0 : index
    %c0_170 = arith.constant 0 : index
    %428 = vector.load %arg5[%c0_169, %c0_170] : memref<32x128xf32, #tpu.memory_space<vmem>>, vector<32x128xf32>
    %cst_171 = arith.constant dense<0.000000e+00> : vector<8x128xf32>
    %429 = tpu.matmul %427, %428, %cst_171 {dimension_numbers = #tpu.dot_dimension_numbers<[1], [0], [0], [1], [0, 0, 1, 1], [], []>} : vector<8x32xf32>, vector<32x128xf32>, vector<8x128xf32> -> vector<8x128xf32>
    %c0_172 = arith.constant 0 : index
    %c0_173 = arith.constant 0 : index
    %430 = vector.load %arg6[%c0_172, %c0_173] : memref<1x128xf32, #tpu.memory_space<vmem>>, vector<1x128xf32>
    %431 = vector.broadcast %430 : vector<1x128xf32> to vector<8x128xf32>
    %432 = arith.addf %429, %431 : vector<8x128xf32>
    %c0_174 = arith.constant 0 : index
    %c0_175 = arith.constant 0 : index
    %433 = vector.load %arg7[%c0_174, %c0_175] : memref<8x128xf32, #tpu.memory_space<vmem>>, vector<8x128xf32>
    tpu.vector_store %arg7[%c0_174, %c0_175], %432 {strides = array<i32>} : memref<8x128xf32, #tpu.memory_space<vmem>>, vector<8x128xf32>,
    return
  }
}

</mosaic_0001>

<llo_original>
// kernel: _lambda_.1
$region0: #{_lambda_.1}
  #allocation0 [shape = 'u32[]', space=smem, size = 0x4, offset = 0x4, fixed_abs, tag = 'smem constant byte address 0x4 - core index']
  #allocation1 [shape = 'u32[144,128]{1,0:T(1,128)}', space=vmem, size = 0x12000, scoped, tag = 'internal scratch']
  #allocation2 [shape = 'f32[8,8,128]{2,1,0:T(8,128)}', space=vmem, size = 0x8000, scoped, tag = 'scratch operand']
  %s0 = inlined_call_operand.vmem [shape: s32[2,8], index: 0, kind: input, shape index: {}]
  %s1 = inlined_call_operand.hbm [shape: f32[24,128], index: 1, kind: input, shape index: {}]
  %s2 = inlined_call_operand.hbm [shape: f32[2,32,128], index: 2, kind: input, shape index: {}]
  %s3 = inlined_call_operand.hbm [shape: f32[1,32,128], index: 3, kind: input, shape index: {}]
  %s4 = inlined_call_operand.vmem [shape: f32[1,1,128], index: 4, kind: input, shape index: {}]
  %s5 = inlined_call_operand.hbm [shape: f32[32,128], index: 5, kind: input, shape index: {}]
  %s6 = inlined_call_operand.hbm [shape: f32[1,128], index: 6, kind: input, shape index: {}]
  %s7 = inlined_call_operand.vmem [shape: f32[8,128], index: 7, kind: output, shape index: {}]
  %s8 = sld [smem:[#allocation0]]
  $region62: #{_lambda_.1} parent=0
    _
  %s10 = ssub.s32 1, %s8
  %s11 = scalar_select 0, %s10, %s8
  $region1: #{_lambda_.1} parent=0
    #allocation3 [shape = 'u8[1024]{0}', space=smem, size = 0x400, scoped, tag = 'input window, operand 0, single buffered']
    #allocation4 [shape = 's32[1]{0}', space=sflag, size = 0x4, scoped, tag = 'scoped memory for _lambda_.1']
    #allocation5 [shape = 's32[1]{0}', space=sflag, size = 0x4, scoped, tag = 'scoped memory for _lambda_.1']
    #allocation6 [shape = 'u8[12288]{0}', space=vmem, size = 0x3000, scoped, tag = 'input window, operand 1, single buffered']
    #allocation7 [shape = 'u8[32768]{0}', space=vmem, size = 0x8000, scoped, tag = 'input window, operand 2, single buffered']
    #allocation8 [shape = 's32[1]{0}', space=sflag, size = 0x4, scoped, tag = 'scoped memory for _lambda_.1']
    #allocation9 [shape = 'u8[16384]{0}', space=vmem, size = 0x4000, scoped, tag = 'input window, operand 3, single buffered']
    #allocation10 [shape = 'u8[16384]{0}', space=vmem, size = 0x4000, scoped, tag = 'input window, operand 5, single buffered']
    #allocation11 [shape = 's32[1]{0}', space=sflag, size = 0x4, scoped, tag = 'scoped memory for _lambda_.1']
    #allocation12 [shape = 'u8[512]{0}', space=vmem, size = 0x400, scoped, tag = 'input window, operand 6, single buffered']
    %12 = vsyncpa [#allocation5], 0
    %13 = vsyncpa [#allocation4], 0
    %14 = vsyncpa [#allocation8], 0
    %15 = vsyncpa [#allocation11], 0
    // Predicated region
    $region2: #{_lambda_.1} parent=1 // pred_check
      _
    $region3: #{_lambda_.1} parent=1 // pred_check_branch
      %17 = sbr.rel (0) target = $region5
    $region4: #{_lambda_.1} parent=1 // pred_region
      %s19 = ssub.s32 32, 32
      %20 = vsyncadd [#allocation5], %s19
      %s22 = sshll.u32 %s0, 4
      %s23 = int_to_ptr.vmem [resolvable:$true] %s22
      %25 = dma.vmem_to_smem %s23, 32, [#allocation3], [#allocation5]
    $region5: #{_lambda_.1} parent=1 // pred_fallthru
      _
    // Predicated region
    $region6: #{_lambda_.1} parent=1 // pred_check
      _
    $region7: #{_lambda_.1} parent=1 // pred_check_branch
      %27 = sbr.rel (0) target = $region9
    $region8: #{_lambda_.1} parent=1 // pred_region
      %s29 = ssub.s32 384, 384
      %30 = vsyncadd [#allocation4], %s29
      %s31 = sshll.u32 [#allocation6], 4
      %s32 = int_to_ptr.vmem [resolvable:$true] %s31
      %37 = dma.hbm_to_vmem [thread:$0]  %s1, 384, %s32, [#allocation4], 128, 128, 8
    $region9: #{_lambda_.1} parent=1 // pred_fallthru
      _
    // Predicated region
    $region10: #{_lambda_.1} parent=1 // pred_check
      _
    $region11: #{_lambda_.1} parent=1 // pred_check_branch
      %39 = sbr.rel (0) target = $region13
    $region12: #{_lambda_.1} parent=1 // pred_region
      %s41 = ssub.s32 1024, 1024
      %42 = vsyncadd [#allocation8], %s41
      %s43 = sshll.u32 [#allocation7], 4
      %s44 = int_to_ptr.vmem [resolvable:$true] %s43
      %49 = dma.hbm_to_vmem [thread:$0]  %s2, 1024, %s44, [#allocation8], 128, 128, 8
    $region13: #{_lambda_.1} parent=1 // pred_fallthru
      _
    // Predicated region
    $region14: #{_lambda_.1} parent=1 // pred_check
      _
    $region15: #{_lambda_.1} parent=1 // pred_check_branch
      %51 = sbr.rel (0) target = $region17
    $region16: #{_lambda_.1} parent=1 // pred_region
      %s53 = ssub.s32 512, 512
      %54 = vsyncadd [#allocation8], %s53
      %s55 = sshll.u32 [#allocation9], 4
      %s56 = int_to_ptr.vmem [resolvable:$true] %s55
      %61 = dma.hbm_to_vmem [thread:$0]  %s3, 512, %s56, [#allocation8], 128, 128, 8
    $region17: #{_lambda_.1} parent=1 // pred_fallthru
      _
    // Predicated region
    $region18: #{_lambda_.1} parent=1 // pred_check
      _
    $region19: #{_lambda_.1} parent=1 // pred_check_branch
      %63 = sbr.rel (0) target = $region21
    $region20: #{_lambda_.1} parent=1 // pred_region
      _
    $region21: #{_lambda_.1} parent=1 // pred_fallthru
      _
    // Predicated region
    $region22: #{_lambda_.1} parent=1 // pred_check
      _
    $region23: #{_lambda_.1} parent=1 // pred_check_branch
      %65 = sbr.rel (0) target = $region25
    $region24: #{_lambda_.1} parent=1 // pred_region
      %s67 = ssub.s32 512, 512
      %68 = vsyncadd [#allocation11], %s67
      %s69 = sshll.u32 [#allocation10], 4
      %s70 = int_to_ptr.vmem [resolvable:$true] %s69
      %75 = dma.hbm_to_vmem [thread:$0]  %s5, 512, %s70, [#allocation11], 128, 128, 8
    $region25: #{_lambda_.1} parent=1 // pred_fallthru
      _
    // Predicated region
    $region26: #{_lambda_.1} parent=1 // pred_check
      _
    $region27: #{_lambda_.1} parent=1 // pred_check_branch
      %77 = sbr.rel (0) target = $region29
    $region28: #{_lambda_.1} parent=1 // pred_region
      %s79 = ssub.s32 16, 16
      %80 = vsyncadd [#allocation11], %s79
      %s82 = sshll.u32 [#allocation12], 4
      %s83 = int_to_ptr.vmem [resolvable:$true] %s82
      %85 = dma.hbm_to_vmem [thread:$0]  %s6, 16, %s83, [#allocation11]
    $region29: #{_lambda_.1} parent=1 // pred_fallthru
      _
    // Predicated region
    $region30: #{_lambda_.1} parent=1 // pred_check
      _
    $region31: #{_lambda_.1} parent=1 // pred_check_branch
      %87 = sbr.rel (0) target = $region33
    $region32: #{_lambda_.1} parent=1 // pred_region
      %88 = dma.done [#allocation5], 32
    $region33: #{_lambda_.1} parent=1 // pred_fallthru
      _
    // Predicated region
    $region34: #{_lambda_.1} parent=1 // pred_check
      _
    $region35: #{_lambda_.1} parent=1 // pred_check_branch
      %90 = sbr.rel (0) target = $region37
    $region36: #{_lambda_.1} parent=1 // pred_region
      %91 = dma.done [#allocation4], 384
    $region37: #{_lambda_.1} parent=1 // pred_fallthru
      _
    // Predicated region
    $region38: #{_lambda_.1} parent=1 // pred_check
      _
    $region39: #{_lambda_.1} parent=1 // pred_check_branch
      %93 = sbr.rel (0) target = $region41
    $region40: #{_lambda_.1} parent=1 // pred_region
      %94 = dma.done [#allocation8], 1024
    $region41: #{_lambda_.1} parent=1 // pred_fallthru
      _
    // Predicated region
    $region42: #{_lambda_.1} parent=1 // pred_check
      _
    $region43: #{_lambda_.1} parent=1 // pred_check_branch
      %96 = sbr.rel (0) target = $region45
    $region44: #{_lambda_.1} parent=1 // pred_region
      %97 = dma.done [#allocation8], 512
    $region45: #{_lambda_.1} parent=1 // pred_fallthru
      _
    // Predicated region
    $region46: #{_lambda_.1} parent=1 // pred_check
      _
    $region47: #{_lambda_.1} parent=1 // pred_check_branch
      %99 = sbr.rel (0) target = $region49
    $region48: #{_lambda_.1} parent=1 // pred_region
      %100 = dma.done [#allocation11], 512
    $region49: #{_lambda_.1} parent=1 // pred_fallthru
      _
    // Predicated region
    $region50: #{_lambda_.1} parent=1 // pred_check
      _
    $region51: #{_lambda_.1} parent=1 // pred_check_branch
      %102 = sbr.rel (0) target = $region53
    $region52: #{_lambda_.1} parent=1 // pred_region
      %103 = dma.done [#allocation11], 16
    $region53: #{_lambda_.1} parent=1 // pred_fallthru
      _
    %104 = sfence
    %105 = vst [vmem:[#allocation2] sm:$0xff] 0.0
    %106 = vst [vmem:[#allocation2 + $0x8] sm:$0xff] 0.0
    %107 = vst [vmem:[#allocation2 + $0x10] sm:$0xff] 0.0
    %108 = vst [vmem:[#allocation2 + $0x18] sm:$0xff] 0.0
    %109 = vst [vmem:[#allocation2 + $0x20] sm:$0xff] 0.0
    %110 = vst [vmem:[#allocation2 + $0x28] sm:$0xff] 0.0
    %111 = vst [vmem:[#allocation2 + $0x30] sm:$0xff] 0.0
    %112 = vst [vmem:[#allocation2 + $0x38] sm:$0xff] 0.0
    %s113 = sld [smem:[#allocation3]]
    %s114 = scalar_lea.vmem [#allocation6], %s113
    %v115 = vld [vmem:[%s114] sm:$0x1]
    %116 = vst [vmem:[#allocation2] sm:$0x1] %v115
    %s117 = sld [smem:[#allocation3 + $0x80]]
    %s118 = scalar_lea.vmem [#allocation6], %s117
    %v119 = vld [vmem:[%s118] sm:$0x1]
    %120 = vst [vmem:[#allocation2 + $0x1] sm:$0x1] %v119
    %s121 = sld [smem:[#allocation3 + $0x1]]
    %s122 = scalar_lea.vmem [#allocation6], %s121
    %v123 = vld [vmem:[%s122] sm:$0x1]
    %s124 = scalar_lea.vmem [#allocation2], 8
    %125 = vst [vmem:[%s124] sm:$0x1] %v123
    %s126 = sld [smem:[#allocation3 + $0x81]]
    %s127 = scalar_lea.vmem [#allocation6], %s126
    %v128 = vld [vmem:[%s127] sm:$0x1]
    %129 = vst [vmem:[%s124 + $0x1] sm:$0x1] %v128
    %s130 = sld [smem:[#allocation3 + $0x2]]
    %s131 = scalar_lea.vmem [#allocation6], %s130
    %v132 = vld [vmem:[%s131] sm:$0x1]
    %s133 = scalar_lea.vmem [#allocation2], 16
    %134 = vst [vmem:[%s133] sm:$0x1] %v132
    %s135 = sld [smem:[#allocation3 + $0x82]]
    %s136 = scalar_lea.vmem [#allocation6], %s135
    %v137 = vld [vmem:[%s136] sm:$0x1]
    %138 = vst [vmem:[%s133 + $0x1] sm:$0x1] %v137
    %s139 = sld [smem:[#allocation3 + $0x3]]
    %s140 = scalar_lea.vmem [#allocation6], %s139
    %v141 = vld [vmem:[%s140] sm:$0x1]
    %s142 = scalar_lea.vmem [#allocation2], 24
    %143 = vst [vmem:[%s142] sm:$0x1] %v141
    %s144 = sld [smem:[#allocation3 + $0x83]]
    %s145 = scalar_lea.vmem [#allocation6], %s144
    %v146 = vld [vmem:[%s145] sm:$0x1]
    %147 = vst [vmem:[%s142 + $0x1] sm:$0x1] %v146
    %s148 = sld [smem:[#allocation3 + $0x4]]
    %s149 = scalar_lea.vmem [#allocation6], %s148
    %v150 = vld [vmem:[%s149] sm:$0x1]
    %s151 = scalar_lea.vmem [#allocation2], 32
    %152 = vst [vmem:[%s151] sm:$0x1] %v150
    %s153 = sld [smem:[#allocation3 + $0x84]]
    %s154 = scalar_lea.vmem [#allocation6], %s153
    %v155 = vld [vmem:[%s154] sm:$0x1]
    %156 = vst [vmem:[%s151 + $0x1] sm:$0x1] %v155
    %s157 = sld [smem:[#allocation3 + $0x5]]
    %s158 = scalar_lea.vmem [#allocation6], %s157
    %v159 = vld [vmem:[%s158] sm:$0x1]
    %s160 = scalar_lea.vmem [#allocation2], 40
    %161 = vst [vmem:[%s160] sm:$0x1] %v159
    %s162 = sld [smem:[#allocation3 + $0x85]]
    %s163 = scalar_lea.vmem [#allocation6], %s162
    %v164 = vld [vmem:[%s163] sm:$0x1]
    %165 = vst [vmem:[%s160 + $0x1] sm:$0x1] %v164
    %s166 = sld [smem:[#allocation3 + $0x6]]
    %s167 = scalar_lea.vmem [#allocation6], %s166
    %v168 = vld [vmem:[%s167] sm:$0x1]
    %s169 = scalar_lea.vmem [#allocation2], 48
    %170 = vst [vmem:[%s169] sm:$0x1] %v168
    %s171 = sld [smem:[#allocation3 + $0x86]]
    %s172 = scalar_lea.vmem [#allocation6], %s171
    %v173 = vld [vmem:[%s172] sm:$0x1]
    %174 = vst [vmem:[%s169 + $0x1] sm:$0x1] %v173
    %s175 = sld [smem:[#allocation3 + $0x7]]
    %s176 = scalar_lea.vmem [#allocation6], %s175
    %v177 = vld [vmem:[%s176] sm:$0x1]
    %s178 = scalar_lea.vmem [#allocation2], 56
    %179 = vst [vmem:[%s178] sm:$0x1] %v177
    %s180 = sld [smem:[#allocation3 + $0x87]]
    %s181 = scalar_lea.vmem [#allocation6], %s180
    %v182 = vld [vmem:[%s181] sm:$0x1]
    %183 = vst [vmem:[%s178 + $0x1] sm:$0x1] %v182
    %v184 = vld [vmem:[#allocation7] sm:$0xff]
    %v185 = vld [vmem:[#allocation7 + $0x8] sm:$0xff]
    %v186 = vld [vmem:[#allocation7 + $0x10] sm:$0xff]
    %v187 = vld [vmem:[#allocation7 + $0x18] sm:$0xff]
    %s188 = scalar_lea.vmem [#allocation7], 32
    %v189 = vld [vmem:[%s188] sm:$0xff]
    %v190 = vld [vmem:[%s188 + $0x8] sm:$0xff]
    %v191 = vld [vmem:[%s188 + $0x10] sm:$0xff]
    %v192 = vld [vmem:[%s188 + $0x18] sm:$0xff]
    %v193 = vld [vmem:[#allocation9] sm:$0xff]
    %v194 = vld [vmem:[#allocation9 + $0x8] sm:$0xff]
    %v195 = vld [vmem:[#allocation9 + $0x10] sm:$0xff]
    %v196 = vld [vmem:[#allocation9 + $0x18] sm:$0xff]
    %v197 = vld [vmem:[%s4] sm:$0x1]
    %v198 = vld [vmem:[#allocation2] sm:$0xff]
    %vm199 = vcmask 261120
    %v201 = vsel %vm199, 0.0, 0
    %203 = vmatprep.subr.mxu0 0.0
    %204 = vmatpush1.msra.mxu0 0.0
    %205 = vmatprep.subr.mxu0 0.0
    %206 = vmatpush1.msra.mxu0 0.0
    %207 = vmatprep.subr.mxu0 0.0
    %208 = vmatpush1.msra.mxu0 0.0
    %209 = vmatprep.subr.mxu0 0.0
    %210 = vmatpush1.msra.mxu0 0.0
    %211 = vmatprep.subr.mxu0 0.0
    %212 = vmatpush1.msra.mxu0 0.0
    %213 = vmatprep.subr.mxu0 0.0
    %214 = vmatpush1.msra.mxu0 0.0
    %215 = vmatprep.subr.mxu0 0.0
    %216 = vmatpush1.msra.mxu0 0.0
    %217 = vmatprep.subr.mxu0 0.0
    %218 = vmatpush1.msra.mxu0 0.0
    %219 = vmatprep.subr.mxu0 0.0
    %220 = vmatpush1.msra.mxu0 0.0
    %221 = vmatprep.subr.mxu0 0.0
    %222 = vmatpush1.msra.mxu0 0.0
    %223 = vmatprep.subr.mxu0 0.0
    %224 = vmatpush1.msra.mxu0 0.0
    %225 = vmatprep.subr.mxu0 0.0
    %226 = vmatpush1.msra.mxu0 0.0
    %227 = vmatprep.subr.mxu0 0.0
    %228 = vmatpush1.msra.mxu0 %v187
    %229 = vmatprep.subr.mxu0 0.0
    %230 = vmatpush1.msra.mxu0 %v186
    %231 = vmatprep.subr.mxu0 0.0
    %232 = vmatpush1.msra.mxu0 %v185
    %233 = vmatprep.subr.mxu0 0.0
    %234 = vmatpush1.msra.mxu0 %v184
    %235 = vmatprep.subr.mxu0 0.0
    %236 = vmatpush2.msra.mxu0 0.0
    %237 = vmatprep.subr.mxu0 0.0
    %238 = vmatpush2.msra.mxu0 0.0
    %239 = vmatprep.subr.mxu0 0.0
    %240 = vmatpush2.msra.mxu0 0.0
    %241 = vmatprep.subr.mxu0 0.0
    %242 = vmatpush2.msra.mxu0 0.0
    %243 = vmatprep.subr.mxu0 0.0
    %244 = vmatpush2.msra.mxu0 0.0
    %245 = vmatprep.subr.mxu0 0.0
    %246 = vmatpush2.msra.mxu0 0.0
    %247 = vmatprep.subr.mxu0 0.0
    %248 = vmatpush2.msra.mxu0 0.0
    %249 = vmatprep.subr.mxu0 0.0
    %250 = vmatpush2.msra.mxu0 0.0
    %251 = vmatprep.subr.mxu0 0.0
    %252 = vmatpush2.msra.mxu0 0.0
    %253 = vmatprep.subr.mxu0 0.0
    %254 = vmatpush2.msra.mxu0 0.0
    %255 = vmatprep.subr.mxu0 0.0
    %256 = vmatpush2.msra.mxu0 0.0
    %257 = vmatprep.subr.mxu0 0.0
    %258 = vmatpush2.msra.mxu0 0.0
    %259 = vmatprep.subr.mxu0 0.0
    %260 = vmatpush2.msra.mxu0 0.0
    %261 = vmatprep.subr.mxu0 0.0
    %262 = vmatpush2.msra.mxu0 0.0
    %263 = vmatprep.subr.mxu0 0.0
    %264 = vmatpush2.msra.mxu0 0.0
    %265 = vmatprep.subr.mxu0 0.0
    %266 = vmatpush2.msra.mxu0 0.0
    %267 = vmatprep.mubr.f32.mxu0 0.0
    %268 = vmatmul.mubr.f32.gmra.mxu0 %v201
    %v269 = vpop.f32.mrf.mxu0
    %v270 = vadd.f32 0.0, %v269
    %v271 = vpop.f32.mrf.mxu0
    %272 = vdwg.mxu0
    %v273 = vadd.f32 %v198, %v270
    %v274 = vxor.u32 %v273, 2147483648
    %v275 = vmul.f32 %v274, 1.442695
    %v276 = vpow.pop %v275
    %v277 = vadd.f32 %v276, 1.0
    %v278 = vrcp.pop %v277
    %v279 = vmul.f32 1.0, %v278
    %v280 = vtanh.pop %v273
    %v281 = vmul.f32 %v279, 0.0
    %283 = vrot.lane.b32.xlu0 %v280, 64
    %v284 = vpop.permute.xlu0 %283
    %v286 = vmul.f32 %v279, %v284
    %288 = vrot.lane.b32.xlu0 %v286, 32
    %v289 = vpop.permute.xlu0 %288
    %v291 = vadd.f32 %v281, %v289
    %v292 = vtanh.pop %v291
    %294 = vrot.lane.b32.xlu0 %v292, 64
    %v295 = vpop.permute.xlu0 %294
    %v297 = vmul.f32 %v279, %v295
    %v299 = vlaneseq
    %v300 = vshrl.u32 %v299, 7
    %v301 = vsub.s32 0, %v300
    %v302 = vrot.slane %v197, %v301
    %305 = vrot.lane.b32.xlu0 %v297, 32
    %v306 = vpop.permute.xlu0 %305
    %v307 = vsel %vm199, %v306, 0
    %309 = vmatprep.subr.mxu0 0.0
    %310 = vmatpush1.msra.mxu0 0.0
    %311 = vmatprep.subr.mxu0 0.0
    %312 = vmatpush1.msra.mxu0 0.0
    %313 = vmatprep.subr.mxu0 0.0
    %314 = vmatpush1.msra.mxu0 0.0
    %315 = vmatprep.subr.mxu0 0.0
    %316 = vmatpush1.msra.mxu0 0.0
    %317 = vmatprep.subr.mxu0 0.0
    %318 = vmatpush1.msra.mxu0 0.0
    %319 = vmatprep.subr.mxu0 0.0
    %320 = vmatpush1.msra.mxu0 0.0
    %321 = vmatprep.subr.mxu0 0.0
    %322 = vmatpush1.msra.mxu0 0.0
    %323 = vmatprep.subr.mxu0 0.0
    %324 = vmatpush1.msra.mxu0 0.0
    %325 = vmatprep.subr.mxu0 0.0
    %326 = vmatpush1.msra.mxu0 0.0
    %327 = vmatprep.subr.mxu0 0.0
    %328 = vmatpush1.msra.mxu0 0.0
    %329 = vmatprep.subr.mxu0 0.0
    %330 = vmatpush1.msra.mxu0 0.0
    %331 = vmatprep.subr.mxu0 0.0
    %332 = vmatpush1.msra.mxu0 0.0
    %333 = vmatprep.subr.mxu0 0.0
    %334 = vmatpush1.msra.mxu0 %v196
    %335 = vmatprep.subr.mxu0 0.0
    %336 = vmatpush1.msra.mxu0 %v195
    %337 = vmatprep.subr.mxu0 0.0
    %338 = vmatpush1.msra.mxu0 %v194
    %339 = vmatprep.subr.mxu0 0.0
    %340 = vmatpush1.msra.mxu0 %v193
    %341 = vmatprep.subr.mxu0 0.0
    %342 = vmatpush2.msra.mxu0 0.0
    %343 = vmatprep.subr.mxu0 0.0
    %344 = vmatpush2.msra.mxu0 0.0
    %345 = vmatprep.subr.mxu0 0.0
    %346 = vmatpush2.msra.mxu0 0.0
    %347 = vmatprep.subr.mxu0 0.0
    %348 = vmatpush2.msra.mxu0 0.0
    %349 = vmatprep.subr.mxu0 0.0
    %350 = vmatpush2.msra.mxu0 0.0
    %351 = vmatprep.subr.mxu0 0.0
    %352 = vmatpush2.msra.mxu0 0.0
    %353 = vmatprep.subr.mxu0 0.0
    %354 = vmatpush2.msra.mxu0 0.0
    %355 = vmatprep.subr.mxu0 0.0
    %356 = vmatpush2.msra.mxu0 0.0
    %357 = vmatprep.subr.mxu0 0.0
    %358 = vmatpush2.msra.mxu0 0.0
    %359 = vmatprep.subr.mxu0 0.0
    %360 = vmatpush2.msra.mxu0 0.0
    %361 = vmatprep.subr.mxu0 0.0
    %362 = vmatpush2.msra.mxu0 0.0
    %363 = vmatprep.subr.mxu0 0.0
    %364 = vmatpush2.msra.mxu0 0.0
    %365 = vmatprep.subr.mxu0 0.0
    %366 = vmatpush2.msra.mxu0 0.0
    %367 = vmatprep.subr.mxu0 0.0
    %368 = vmatpush2.msra.mxu0 0.0
    %369 = vmatprep.subr.mxu0 0.0
    %370 = vmatpush2.msra.mxu0 0.0
    %371 = vmatprep.subr.mxu0 0.0
    %372 = vmatpush2.msra.mxu0 0.0
    %373 = vmatprep.mubr.f32.mxu0 0.0
    %374 = vmatmul.mubr.f32.gmra.mxu0 %v307
    %v375 = vpop.f32.mrf.mxu0
    %v376 = vadd.f32 %v302, %v375
    %v377 = vpop.f32.mrf.mxu0
    %378 = vdwg.mxu0
    %v379 = vld [vmem:[%s124] sm:$0xff]
    %380 = vmatprep.subr.mxu0 0.0
    %381 = vmatpush1.msra.mxu0 0.0
    %382 = vmatprep.subr.mxu0 0.0
    %383 = vmatpush1.msra.mxu0 0.0
    %384 = vmatprep.subr.mxu0 0.0
    %385 = vmatpush1.msra.mxu0 0.0
    %386 = vmatprep.subr.mxu0 0.0
    %387 = vmatpush1.msra.mxu0 0.0
    %388 = vmatprep.subr.mxu0 0.0
    %389 = vmatpush1.msra.mxu0 0.0
    %390 = vmatprep.subr.mxu0 0.0
    %391 = vmatpush1.msra.mxu0 0.0
    %392 = vmatprep.subr.mxu0 0.0
    %393 = vmatpush1.msra.mxu0 0.0
    %394 = vmatprep.subr.mxu0 0.0
    %395 = vmatpush1.msra.mxu0 0.0
    %396 = vmatprep.subr.mxu0 0.0
    %397 = vmatpush1.msra.mxu0 0.0
    %398 = vmatprep.subr.mxu0 0.0
    %399 = vmatpush1.msra.mxu0 0.0
    %400 = vmatprep.subr.mxu0 0.0
    %401 = vmatpush1.msra.mxu0 0.0
    %402 = vmatprep.subr.mxu0 0.0
    %403 = vmatpush1.msra.mxu0 0.0
    %404 = vmatprep.subr.mxu0 0.0
    %405 = vmatpush1.msra.mxu0 %v187
    %406 = vmatprep.subr.mxu0 0.0
    %407 = vmatpush1.msra.mxu0 %v186
    %408 = vmatprep.subr.mxu0 0.0
    %409 = vmatpush1.msra.mxu0 %v185
    %410 = vmatprep.subr.mxu0 0.0
    %411 = vmatpush1.msra.mxu0 %v184
    %412 = vmatprep.subr.mxu0 0.0
    %413 = vmatpush2.msra.mxu0 0.0
    %414 = vmatprep.subr.mxu0 0.0
    %415 = vmatpush2.msra.mxu0 0.0
    %416 = vmatprep.subr.mxu0 0.0
    %417 = vmatpush2.msra.mxu0 0.0
    %418 = vmatprep.subr.mxu0 0.0
    %419 = vmatpush2.msra.mxu0 0.0
    %420 = vmatprep.subr.mxu0 0.0
    %421 = vmatpush2.msra.mxu0 0.0
    %422 = vmatprep.subr.mxu0 0.0
    %423 = vmatpush2.msra.mxu0 0.0
    %424 = vmatprep.subr.mxu0 0.0
    %425 = vmatpush2.msra.mxu0 0.0
    %426 = vmatprep.subr.mxu0 0.0
    %427 = vmatpush2.msra.mxu0 0.0
    %428 = vmatprep.subr.mxu0 0.0
    %429 = vmatpush2.msra.mxu0 0.0
    %430 = vmatprep.subr.mxu0 0.0
    %431 = vmatpush2.msra.mxu0 0.0
    %432 = vmatprep.subr.mxu0 0.0
    %433 = vmatpush2.msra.mxu0 0.0
    %434 = vmatprep.subr.mxu0 0.0
    %435 = vmatpush2.msra.mxu0 0.0
    %436 = vmatprep.subr.mxu0 0.0
    %437 = vmatpush2.msra.mxu0 0.0
    %438 = vmatprep.subr.mxu0 0.0
    %439 = vmatpush2.msra.mxu0 0.0
    %440 = vmatprep.subr.mxu0 0.0
    %441 = vmatpush2.msra.mxu0 0.0
    %442 = vmatprep.subr.mxu0 0.0
    %443 = vmatpush2.msra.mxu0 0.0
    %444 = vmatprep.mubr.f32.mxu0 0.0
    %445 = vmatmul.mubr.f32.gmra.mxu0 %v307
    %v446 = vpop.f32.mrf.mxu0
    %v447 = vadd.f32 0.0, %v446
    %v448 = vpop.f32.mrf.mxu0
    %449 = vdwg.mxu0
    %v450 = vadd.f32 %v379, %v447
    %v451 = vxor.u32 %v450, 2147483648
    %v452 = vmul.f32 %v451, 1.442695
    %v453 = vpow.pop %v452
    %v454 = vadd.f32 %v453, 1.0
    %v455 = vrcp.pop %v454
    %v456 = vmul.f32 1.0, %v455
    %v457 = vtanh.pop %v450
    %v458 = vmul.f32 %v456, %v291
    %460 = vrot.lane.b32.xlu0 %v457, 64
    %v461 = vpop.permute.xlu0 %460
    %v463 = vmul.f32 %v456, %v461
    %465 = vrot.lane.b32.xlu0 %v463, 32
    %v466 = vpop.permute.xlu0 %465
    %v468 = vadd.f32 %v458, %v466
    %v469 = vtanh.pop %v468
    %471 = vrot.lane.b32.xlu0 %v469, 64
    %v472 = vpop.permute.xlu0 %471
    %v474 = vmul.f32 %v456, %v472
    %476 = vrot.lane.b32.xlu0 %v474, 32
    %v477 = vpop.permute.xlu0 %476
    %v478 = vsel %vm199, %v477, 0
    %480 = vmatprep.subr.mxu0 0.0
    %481 = vmatpush1.msra.mxu0 0.0
    %482 = vmatprep.subr.mxu0 0.0
    %483 = vmatpush1.msra.mxu0 0.0
    %484 = vmatprep.subr.mxu0 0.0
    %485 = vmatpush1.msra.mxu0 0.0
    %486 = vmatprep.subr.mxu0 0.0
    %487 = vmatpush1.msra.mxu0 0.0
    %488 = vmatprep.subr.mxu0 0.0
    %489 = vmatpush1.msra.mxu0 0.0
    %490 = vmatprep.subr.mxu0 0.0
    %491 = vmatpush1.msra.mxu0 0.0
    %492 = vmatprep.subr.mxu0 0.0
    %493 = vmatpush1.msra.mxu0 0.0
    %494 = vmatprep.subr.mxu0 0.0
    %495 = vmatpush1.msra.mxu0 0.0
    %496 = vmatprep.subr.mxu0 0.0
    %497 = vmatpush1.msra.mxu0 0.0
    %498 = vmatprep.subr.mxu0 0.0
    %499 = vmatpush1.msra.mxu0 0.0
    %500 = vmatprep.subr.mxu0 0.0
    %501 = vmatpush1.msra.mxu0 0.0
    %502 = vmatprep.subr.mxu0 0.0
    %503 = vmatpush1.msra.mxu0 0.0
    %504 = vmatprep.subr.mxu0 0.0
    %505 = vmatpush1.msra.mxu0 %v196
    %506 = vmatprep.subr.mxu0 0.0
    %507 = vmatpush1.msra.mxu0 %v195
    %508 = vmatprep.subr.mxu0 0.0
    %509 = vmatpush1.msra.mxu0 %v194
    %510 = vmatprep.subr.mxu0 0.0
    %511 = vmatpush1.msra.mxu0 %v193
    %512 = vmatprep.subr.mxu0 0.0
    %513 = vmatpush2.msra.mxu0 0.0
    %514 = vmatprep.subr.mxu0 0.0
    %515 = vmatpush2.msra.mxu0 0.0
    %516 = vmatprep.subr.mxu0 0.0
    %517 = vmatpush2.msra.mxu0 0.0
    %518 = vmatprep.subr.mxu0 0.0
    %519 = vmatpush2.msra.mxu0 0.0
    %520 = vmatprep.subr.mxu0 0.0
    %521 = vmatpush2.msra.mxu0 0.0
    %522 = vmatprep.subr.mxu0 0.0
    %523 = vmatpush2.msra.mxu0 0.0
    %524 = vmatprep.subr.mxu0 0.0
    %525 = vmatpush2.msra.mxu0 0.0
    %526 = vmatprep.subr.mxu0 0.0
    %527 = vmatpush2.msra.mxu0 0.0
    %528 = vmatprep.subr.mxu0 0.0
    %529 = vmatpush2.msra.mxu0 0.0
    %530 = vmatprep.subr.mxu0 0.0
    %531 = vmatpush2.msra.mxu0 0.0
    %532 = vmatprep.subr.mxu0 0.0
    %533 = vmatpush2.msra.mxu0 0.0
    %534 = vmatprep.subr.mxu0 0.0
    %535 = vmatpush2.msra.mxu0 0.0
    %536 = vmatprep.subr.mxu0 0.0
    %537 = vmatpush2.msra.mxu0 0.0
    %538 = vmatprep.subr.mxu0 0.0
    %539 = vmatpush2.msra.mxu0 0.0
    %540 = vmatprep.subr.mxu0 0.0
    %541 = vmatpush2.msra.mxu0 0.0
    %542 = vmatprep.subr.mxu0 0.0
    %543 = vmatpush2.msra.mxu0 0.0
    %544 = vmatprep.mubr.f32.mxu0 0.0
    %545 = vmatmul.mubr.f32.gmra.mxu0 %v478
    %v546 = vpop.f32.mrf.mxu0
    %v547 = vadd.f32 %v302, %v546
    %v548 = vpop.f32.mrf.mxu0
    %549 = vdwg.mxu0
    %550 = vmatprep.subr.mxu0 0.0
    %551 = vmatpush1.msra.mxu0 0.0
    %552 = vmatprep.subr.mxu0 0.0
    %553 = vmatpush1.msra.mxu0 0.0
    %554 = vmatprep.subr.mxu0 0.0
    %555 = vmatpush1.msra.mxu0 0.0
    %556 = vmatprep.subr.mxu0 0.0
    %557 = vmatpush1.msra.mxu0 0.0
    %558 = vmatprep.subr.mxu0 0.0
    %559 = vmatpush1.msra.mxu0 0.0
    %560 = vmatprep.subr.mxu0 0.0
    %561 = vmatpush1.msra.mxu0 0.0
    %562 = vmatprep.subr.mxu0 0.0
    %563 = vmatpush1.msra.mxu0 0.0
    %564 = vmatprep.subr.mxu0 0.0
    %565 = vmatpush1.msra.mxu0 0.0
    %566 = vmatprep.subr.mxu0 0.0
    %567 = vmatpush1.msra.mxu0 0.0
    %568 = vmatprep.subr.mxu0 0.0
    %569 = vmatpush1.msra.mxu0 0.0
    %570 = vmatprep.subr.mxu0 0.0
    %571 = vmatpush1.msra.mxu0 0.0
    %572 = vmatprep.subr.mxu0 0.0
    %573 = vmatpush1.msra.mxu0 0.0
    %574 = vmatprep.subr.mxu0 0.0
    %575 = vmatpush1.msra.mxu0 %v192
    %576 = vmatprep.subr.mxu0 0.0
    %577 = vmatpush1.msra.mxu0 %v191
    %578 = vmatprep.subr.mxu0 0.0
    %579 = vmatpush1.msra.mxu0 %v190
    %580 = vmatprep.subr.mxu0 0.0
    %581 = vmatpush1.msra.mxu0 %v189
    %582 = vmatprep.subr.mxu0 0.0
    %583 = vmatpush2.msra.mxu0 0.0
    %584 = vmatprep.subr.mxu0 0.0
    %585 = vmatpush2.msra.mxu0 0.0
    %586 = vmatprep.subr.mxu0 0.0
    %587 = vmatpush2.msra.mxu0 0.0
    %588 = vmatprep.subr.mxu0 0.0
    %589 = vmatpush2.msra.mxu0 0.0
    %590 = vmatprep.subr.mxu0 0.0
    %591 = vmatpush2.msra.mxu0 0.0
    %592 = vmatprep.subr.mxu0 0.0
    %593 = vmatpush2.msra.mxu0 0.0
    %594 = vmatprep.subr.mxu0 0.0
    %595 = vmatpush2.msra.mxu0 0.0
    %596 = vmatprep.subr.mxu0 0.0
    %597 = vmatpush2.msra.mxu0 0.0
    %598 = vmatprep.subr.mxu0 0.0
    %599 = vmatpush2.msra.mxu0 0.0
    %600 = vmatprep.subr.mxu0 0.0
    %601 = vmatpush2.msra.mxu0 0.0
    %602 = vmatprep.subr.mxu0 0.0
    %603 = vmatpush2.msra.mxu0 0.0
    %604 = vmatprep.subr.mxu0 0.0
    %605 = vmatpush2.msra.mxu0 0.0
    %606 = vmatprep.subr.mxu0 0.0
    %607 = vmatpush2.msra.mxu0 0.0
    %608 = vmatprep.subr.mxu0 0.0
    %609 = vmatpush2.msra.mxu0 0.0
    %610 = vmatprep.subr.mxu0 0.0
    %611 = vmatpush2.msra.mxu0 0.0
    %612 = vmatprep.subr.mxu0 0.0
    %613 = vmatpush2.msra.mxu0 0.0
    %614 = vmatprep.mubr.f32.mxu0 0.0
    %615 = vmatmul.mubr.f32.gmra.mxu0 %v201
    %v616 = vpop.f32.mrf.mxu0
    %v617 = vadd.f32 0.0, %v616
    %v618 = vpop.f32.mrf.mxu0
    %619 = vdwg.mxu0
    %v620 = vadd.f32 %v376, %v617
    %v621 = vxor.u32 %v620, 2147483648
    %v622 = vmul.f32 %v621, 1.442695
    %v623 = vpow.pop %v622
    %v624 = vadd.f32 %v623, 1.0
    %v625 = vrcp.pop %v624
    %v626 = vmul.f32 1.0, %v625
    %v627 = vtanh.pop %v620
    %v628 = vmul.f32 %v626, 0.0
    %630 = vrot.lane.b32.xlu0 %v627, 64
    %v631 = vpop.permute.xlu0 %630
    %v633 = vmul.f32 %v626, %v631
    %635 = vrot.lane.b32.xlu0 %v633, 32
    %v636 = vpop.permute.xlu0 %635
    %v638 = vadd.f32 %v628, %v636
    %v639 = vtanh.pop %v638
    %641 = vrot.lane.b32.xlu0 %v639, 64
    %v642 = vpop.permute.xlu0 %641
    %v644 = vmul.f32 %v626, %v642
    %v645 = vld [vmem:[%s133] sm:$0xff]
    %646 = vmatprep.subr.mxu0 0.0
    %647 = vmatpush1.msra.mxu0 0.0
    %648 = vmatprep.subr.mxu0 0.0
    %649 = vmatpush1.msra.mxu0 0.0
    %650 = vmatprep.subr.mxu0 0.0
    %651 = vmatpush1.msra.mxu0 0.0
    %652 = vmatprep.subr.mxu0 0.0
    %653 = vmatpush1.msra.mxu0 0.0
    %654 = vmatprep.subr.mxu0 0.0
    %655 = vmatpush1.msra.mxu0 0.0
    %656 = vmatprep.subr.mxu0 0.0
    %657 = vmatpush1.msra.mxu0 0.0
    %658 = vmatprep.subr.mxu0 0.0
    %659 = vmatpush1.msra.mxu0 0.0
    %660 = vmatprep.subr.mxu0 0.0
    %661 = vmatpush1.msra.mxu0 0.0
    %662 = vmatprep.subr.mxu0 0.0
    %663 = vmatpush1.msra.mxu0 0.0
    %664 = vmatprep.subr.mxu0 0.0
    %665 = vmatpush1.msra.mxu0 0.0
    %666 = vmatprep.subr.mxu0 0.0
    %667 = vmatpush1.msra.mxu0 0.0
    %668 = vmatprep.subr.mxu0 0.0
    %669 = vmatpush1.msra.mxu0 0.0
    %670 = vmatprep.subr.mxu0 0.0
    %671 = vmatpush1.msra.mxu0 %v187
    %672 = vmatprep.subr.mxu0 0.0
    %673 = vmatpush1.msra.mxu0 %v186
    %674 = vmatprep.subr.mxu0 0.0
    %675 = vmatpush1.msra.mxu0 %v185
    %676 = vmatprep.subr.mxu0 0.0
    %677 = vmatpush1.msra.mxu0 %v184
    %678 = vmatprep.subr.mxu0 0.0
    %679 = vmatpush2.msra.mxu0 0.0
    %680 = vmatprep.subr.mxu0 0.0
    %681 = vmatpush2.msra.mxu0 0.0
    %682 = vmatprep.subr.mxu0 0.0
    %683 = vmatpush2.msra.mxu0 0.0
    %684 = vmatprep.subr.mxu0 0.0
    %685 = vmatpush2.msra.mxu0 0.0
    %686 = vmatprep.subr.mxu0 0.0
    %687 = vmatpush2.msra.mxu0 0.0
    %688 = vmatprep.subr.mxu0 0.0
    %689 = vmatpush2.msra.mxu0 0.0
    %690 = vmatprep.subr.mxu0 0.0
    %691 = vmatpush2.msra.mxu0 0.0
    %692 = vmatprep.subr.mxu0 0.0
    %693 = vmatpush2.msra.mxu0 0.0
    %694 = vmatprep.subr.mxu0 0.0
    %695 = vmatpush2.msra.mxu0 0.0
    %696 = vmatprep.subr.mxu0 0.0
    %697 = vmatpush2.msra.mxu0 0.0
    %698 = vmatprep.subr.mxu0 0.0
    %699 = vmatpush2.msra.mxu0 0.0
    %700 = vmatprep.subr.mxu0 0.0
    %701 = vmatpush2.msra.mxu0 0.0
    %702 = vmatprep.subr.mxu0 0.0
    %703 = vmatpush2.msra.mxu0 0.0
    %704 = vmatprep.subr.mxu0 0.0
    %705 = vmatpush2.msra.mxu0 0.0
    %706 = vmatprep.subr.mxu0 0.0
    %707 = vmatpush2.msra.mxu0 0.0
    %708 = vmatprep.subr.mxu0 0.0
    %709 = vmatpush2.msra.mxu0 0.0
    %710 = vmatprep.mubr.f32.mxu0 0.0
    %711 = vmatmul.mubr.f32.gmra.mxu0 %v478
    %v712 = vpop.f32.mrf.mxu0
    %v713 = vadd.f32 0.0, %v712
    %v714 = vpop.f32.mrf.mxu0
    %715 = vdwg.mxu0
    %v716 = vadd.f32 %v645, %v713
    %v717 = vxor.u32 %v716, 2147483648
    %v718 = vmul.f32 %v717, 1.442695
    %v719 = vpow.pop %v718
    %v720 = vadd.f32 %v719, 1.0
    %v721 = vrcp.pop %v720
    %v722 = vmul.f32 1.0, %v721
    %v723 = vtanh.pop %v716
    %v724 = vmul.f32 %v722, %v468
    %726 = vrot.lane.b32.xlu0 %v723, 64
    %v727 = vpop.permute.xlu0 %726
    %v729 = vmul.f32 %v722, %v727
    %731 = vrot.lane.b32.xlu0 %v729, 32
    %v732 = vpop.permute.xlu0 %731
    %v734 = vadd.f32 %v724, %v732
    %v735 = vtanh.pop %v734
    %737 = vrot.lane.b32.xlu0 %v735, 64
    %v738 = vpop.permute.xlu0 %737
    %v740 = vmul.f32 %v722, %v738
    %742 = vrot.lane.b32.xlu0 %v740, 32
    %v743 = vpop.permute.xlu0 %742
    %v744 = vsel %vm199, %v743, 0
    %746 = vmatprep.subr.mxu0 0.0
    %747 = vmatpush1.msra.mxu0 0.0
    %748 = vmatprep.subr.mxu0 0.0
    %749 = vmatpush1.msra.mxu0 0.0
    %750 = vmatprep.subr.mxu0 0.0
    %751 = vmatpush1.msra.mxu0 0.0
    %752 = vmatprep.subr.mxu0 0.0
    %753 = vmatpush1.msra.mxu0 0.0
    %754 = vmatprep.subr.mxu0 0.0
    %755 = vmatpush1.msra.mxu0 0.0
    %756 = vmatprep.subr.mxu0 0.0
    %757 = vmatpush1.msra.mxu0 0.0
    %758 = vmatprep.subr.mxu0 0.0
    %759 = vmatpush1.msra.mxu0 0.0
    %760 = vmatprep.subr.mxu0 0.0
    %761 = vmatpush1.msra.mxu0 0.0
    %762 = vmatprep.subr.mxu0 0.0
    %763 = vmatpush1.msra.mxu0 0.0
    %764 = vmatprep.subr.mxu0 0.0
    %765 = vmatpush1.msra.mxu0 0.0
    %766 = vmatprep.subr.mxu0 0.0
    %767 = vmatpush1.msra.mxu0 0.0
    %768 = vmatprep.subr.mxu0 0.0
    %769 = vmatpush1.msra.mxu0 0.0
    %770 = vmatprep.subr.mxu0 0.0
    %771 = vmatpush1.msra.mxu0 %v196
    %772 = vmatprep.subr.mxu0 0.0
    %773 = vmatpush1.msra.mxu0 %v195
    %774 = vmatprep.subr.mxu0 0.0
    %775 = vmatpush1.msra.mxu0 %v194
    %776 = vmatprep.subr.mxu0 0.0
    %777 = vmatpush1.msra.mxu0 %v193
    %778 = vmatprep.subr.mxu0 0.0
    %779 = vmatpush2.msra.mxu0 0.0
    %780 = vmatprep.subr.mxu0 0.0
    %781 = vmatpush2.msra.mxu0 0.0
    %782 = vmatprep.subr.mxu0 0.0
    %783 = vmatpush2.msra.mxu0 0.0
    %784 = vmatprep.subr.mxu0 0.0
    %785 = vmatpush2.msra.mxu0 0.0
    %786 = vmatprep.subr.mxu0 0.0
    %787 = vmatpush2.msra.mxu0 0.0
    %788 = vmatprep.subr.mxu0 0.0
    %789 = vmatpush2.msra.mxu0 0.0
    %790 = vmatprep.subr.mxu0 0.0
    %791 = vmatpush2.msra.mxu0 0.0
    %792 = vmatprep.subr.mxu0 0.0
    %793 = vmatpush2.msra.mxu0 0.0
    %794 = vmatprep.subr.mxu0 0.0
    %795 = vmatpush2.msra.mxu0 0.0
    %796 = vmatprep.subr.mxu0 0.0
    %797 = vmatpush2.msra.mxu0 0.0
    %798 = vmatprep.subr.mxu0 0.0
    %799 = vmatpush2.msra.mxu0 0.0
    %800 = vmatprep.subr.mxu0 0.0
    %801 = vmatpush2.msra.mxu0 0.0
    %802 = vmatprep.subr.mxu0 0.0
    %803 = vmatpush2.msra.mxu0 0.0
    %804 = vmatprep.subr.mxu0 0.0
    %805 = vmatpush2.msra.mxu0 0.0
    %806 = vmatprep.subr.mxu0 0.0
    %807 = vmatpush2.msra.mxu0 0.0
    %808 = vmatprep.subr.mxu0 0.0
    %809 = vmatpush2.msra.mxu0 0.0
    %810 = vmatprep.mubr.f32.mxu0 0.0
    %811 = vmatmul.mubr.f32.gmra.mxu0 %v744
    %v812 = vpop.f32.mrf.mxu0
    %v813 = vadd.f32 %v302, %v812
    %v814 = vpop.f32.mrf.mxu0
    %815 = vdwg.mxu0
    %817 = vrot.lane.b32.xlu0 %v644, 32
    %v818 = vpop.permute.xlu0 %817
    %v819 = vsel %vm199, %v818, 0
    %821 = vmatprep.subr.mxu0 0.0
    %822 = vmatpush1.msra.mxu0 0.0
    %823 = vmatprep.subr.mxu0 0.0
    %824 = vmatpush1.msra.mxu0 0.0
    %825 = vmatprep.subr.mxu0 0.0
    %826 = vmatpush1.msra.mxu0 0.0
    %827 = vmatprep.subr.mxu0 0.0
    %828 = vmatpush1.msra.mxu0 0.0
    %829 = vmatprep.subr.mxu0 0.0
    %830 = vmatpush1.msra.mxu0 0.0
    %831 = vmatprep.subr.mxu0 0.0
    %832 = vmatpush1.msra.mxu0 0.0
    %833 = vmatprep.subr.mxu0 0.0
    %834 = vmatpush1.msra.mxu0 0.0
    %835 = vmatprep.subr.mxu0 0.0
    %836 = vmatpush1.msra.mxu0 0.0
    %837 = vmatprep.subr.mxu0 0.0
    %838 = vmatpush1.msra.mxu0 0.0
    %839 = vmatprep.subr.mxu0 0.0
    %840 = vmatpush1.msra.mxu0 0.0
    %841 = vmatprep.subr.mxu0 0.0
    %842 = vmatpush1.msra.mxu0 0.0
    %843 = vmatprep.subr.mxu0 0.0
    %844 = vmatpush1.msra.mxu0 0.0
    %845 = vmatprep.subr.mxu0 0.0
    %846 = vmatpush1.msra.mxu0 %v192
    %847 = vmatprep.subr.mxu0 0.0
    %848 = vmatpush1.msra.mxu0 %v191
    %849 = vmatprep.subr.mxu0 0.0
    %850 = vmatpush1.msra.mxu0 %v190
    %851 = vmatprep.subr.mxu0 0.0
    %852 = vmatpush1.msra.mxu0 %v189
    %853 = vmatprep.subr.mxu0 0.0
    %854 = vmatpush2.msra.mxu0 0.0
    %855 = vmatprep.subr.mxu0 0.0
    %856 = vmatpush2.msra.mxu0 0.0
    %857 = vmatprep.subr.mxu0 0.0
    %858 = vmatpush2.msra.mxu0 0.0
    %859 = vmatprep.subr.mxu0 0.0
    %860 = vmatpush2.msra.mxu0 0.0
    %861 = vmatprep.subr.mxu0 0.0
    %862 = vmatpush2.msra.mxu0 0.0
    %863 = vmatprep.subr.mxu0 0.0
    %864 = vmatpush2.msra.mxu0 0.0
    %865 = vmatprep.subr.mxu0 0.0
    %866 = vmatpush2.msra.mxu0 0.0
    %867 = vmatprep.subr.mxu0 0.0
    %868 = vmatpush2.msra.mxu0 0.0
    %869 = vmatprep.subr.mxu0 0.0
    %870 = vmatpush2.msra.mxu0 0.0
    %871 = vmatprep.subr.mxu0 0.0
    %872 = vmatpush2.msra.mxu0 0.0
    %873 = vmatprep.subr.mxu0 0.0
    %874 = vmatpush2.msra.mxu0 0.0
    %875 = vmatprep.subr.mxu0 0.0
    %876 = vmatpush2.msra.mxu0 0.0
    %877 = vmatprep.subr.mxu0 0.0
    %878 = vmatpush2.msra.mxu0 0.0
    %879 = vmatprep.subr.mxu0 0.0
    %880 = vmatpush2.msra.mxu0 0.0
    %881 = vmatprep.subr.mxu0 0.0
    %882 = vmatpush2.msra.mxu0 0.0
    %883 = vmatprep.subr.mxu0 0.0
    %884 = vmatpush2.msra.mxu0 0.0
    %885 = vmatprep.mubr.f32.mxu0 0.0
    %886 = vmatmul.mubr.f32.gmra.mxu0 %v819
    %v887 = vpop.f32.mrf.mxu0
    %v888 = vadd.f32 0.0, %v887
    %v889 = vpop.f32.mrf.mxu0
    %890 = vdwg.mxu0
    %v891 = vadd.f32 %v547, %v888
    %v892 = vxor.u32 %v891, 2147483648
    %v893 = vmul.f32 %v892, 1.442695
    %v894 = vpow.pop %v893
    %v895 = vadd.f32 %v894, 1.0
    %v896 = vrcp.pop %v895
    %v897 = vmul.f32 1.0, %v896
    %v898 = vtanh.pop %v891
    %v899 = vmul.f32 %v897, %v638
    %901 = vrot.lane.b32.xlu0 %v898, 64
    %v902 = vpop.permute.xlu0 %901
    %v904 = vmul.f32 %v897, %v902
    %906 = vrot.lane.b32.xlu0 %v904, 32
    %v907 = vpop.permute.xlu0 %906
    %v909 = vadd.f32 %v899, %v907
    %v910 = vtanh.pop %v909
    %912 = vrot.lane.b32.xlu0 %v910, 64
    %v913 = vpop.permute.xlu0 %912
    %v915 = vmul.f32 %v897, %v913
    %v916 = vmax.f32 %v644, %v915
    %v917 = vld [vmem:[%s142] sm:$0xff]
    %918 = vmatprep.subr.mxu0 0.0
    %919 = vmatpush1.msra.mxu0 0.0
    %920 = vmatprep.subr.mxu0 0.0
    %921 = vmatpush1.msra.mxu0 0.0
    %922 = vmatprep.subr.mxu0 0.0
    %923 = vmatpush1.msra.mxu0 0.0
    %924 = vmatprep.subr.mxu0 0.0
    %925 = vmatpush1.msra.mxu0 0.0
    %926 = vmatprep.subr.mxu0 0.0
    %927 = vmatpush1.msra.mxu0 0.0
    %928 = vmatprep.subr.mxu0 0.0
    %929 = vmatpush1.msra.mxu0 0.0
    %930 = vmatprep.subr.mxu0 0.0
    %931 = vmatpush1.msra.mxu0 0.0
    %932 = vmatprep.subr.mxu0 0.0
    %933 = vmatpush1.msra.mxu0 0.0
    %934 = vmatprep.subr.mxu0 0.0
    %935 = vmatpush1.msra.mxu0 0.0
    %936 = vmatprep.subr.mxu0 0.0
    %937 = vmatpush1.msra.mxu0 0.0
    %938 = vmatprep.subr.mxu0 0.0
    %939 = vmatpush1.msra.mxu0 0.0
    %940 = vmatprep.subr.mxu0 0.0
    %941 = vmatpush1.msra.mxu0 0.0
    %942 = vmatprep.subr.mxu0 0.0
    %943 = vmatpush1.msra.mxu0 %v187
    %944 = vmatprep.subr.mxu0 0.0
    %945 = vmatpush1.msra.mxu0 %v186
    %946 = vmatprep.subr.mxu0 0.0
    %947 = vmatpush1.msra.mxu0 %v185
    %948 = vmatprep.subr.mxu0 0.0
    %949 = vmatpush1.msra.mxu0 %v184
    %950 = vmatprep.subr.mxu0 0.0
    %951 = vmatpush2.msra.mxu0 0.0
    %952 = vmatprep.subr.mxu0 0.0
    %953 = vmatpush2.msra.mxu0 0.0
    %954 = vmatprep.subr.mxu0 0.0
    %955 = vmatpush2.msra.mxu0 0.0
    %956 = vmatprep.subr.mxu0 0.0
    %957 = vmatpush2.msra.mxu0 0.0
    %958 = vmatprep.subr.mxu0 0.0
    %959 = vmatpush2.msra.mxu0 0.0
    %960 = vmatprep.subr.mxu0 0.0
    %961 = vmatpush2.msra.mxu0 0.0
    %962 = vmatprep.subr.mxu0 0.0
    %963 = vmatpush2.msra.mxu0 0.0
    %964 = vmatprep.subr.mxu0 0.0
    %965 = vmatpush2.msra.mxu0 0.0
    %966 = vmatprep.subr.mxu0 0.0
    %967 = vmatpush2.msra.mxu0 0.0
    %968 = vmatprep.subr.mxu0 0.0
    %969 = vmatpush2.msra.mxu0 0.0
    %970 = vmatprep.subr.mxu0 0.0
    %971 = vmatpush2.msra.mxu0 0.0
    %972 = vmatprep.subr.mxu0 0.0
    %973 = vmatpush2.msra.mxu0 0.0
    %974 = vmatprep.subr.mxu0 0.0
    %975 = vmatpush2.msra.mxu0 0.0
    %976 = vmatprep.subr.mxu0 0.0
    %977 = vmatpush2.msra.mxu0 0.0
    %978 = vmatprep.subr.mxu0 0.0
    %979 = vmatpush2.msra.mxu0 0.0
    %980 = vmatprep.subr.mxu0 0.0
    %981 = vmatpush2.msra.mxu0 0.0
    %982 = vmatprep.mubr.f32.mxu0 0.0
    %983 = vmatmul.mubr.f32.gmra.mxu0 %v744
    %v984 = vpop.f32.mrf.mxu0
    %v985 = vadd.f32 0.0, %v984
    %v986 = vpop.f32.mrf.mxu0
    %987 = vdwg.mxu0
    %v988 = vadd.f32 %v917, %v985
    %v989 = vxor.u32 %v988, 2147483648
    %v990 = vmul.f32 %v989, 1.442695
    %v991 = vpow.pop %v990
    %v992 = vadd.f32 %v991, 1.0
    %v993 = vrcp.pop %v992
    %v994 = vmul.f32 1.0, %v993
    %v995 = vtanh.pop %v988
    %v996 = vmul.f32 %v994, %v734
    %998 = vrot.lane.b32.xlu0 %v995, 64
    %v999 = vpop.permute.xlu0 %998
    %v1001 = vmul.f32 %v994, %v999
    %1003 = vrot.lane.b32.xlu0 %v1001, 32
    %v1004 = vpop.permute.xlu0 %1003
    %v1006 = vadd.f32 %v996, %v1004
    %v1007 = vtanh.pop %v1006
    %1009 = vrot.lane.b32.xlu0 %v1007, 64
    %v1010 = vpop.permute.xlu0 %1009
    %v1012 = vmul.f32 %v994, %v1010
    %1014 = vrot.lane.b32.xlu0 %v1012, 32
    %v1015 = vpop.permute.xlu0 %1014
    %v1016 = vsel %vm199, %v1015, 0
    %1018 = vmatprep.subr.mxu0 0.0
    %1019 = vmatpush1.msra.mxu0 0.0
    %1020 = vmatprep.subr.mxu0 0.0
    %1021 = vmatpush1.msra.mxu0 0.0
    %1022 = vmatprep.subr.mxu0 0.0
    %1023 = vmatpush1.msra.mxu0 0.0
    %1024 = vmatprep.subr.mxu0 0.0
    %1025 = vmatpush1.msra.mxu0 0.0
    %1026 = vmatprep.subr.mxu0 0.0
    %1027 = vmatpush1.msra.mxu0 0.0
    %1028 = vmatprep.subr.mxu0 0.0
    %1029 = vmatpush1.msra.mxu0 0.0
    %1030 = vmatprep.subr.mxu0 0.0
    %1031 = vmatpush1.msra.mxu0 0.0
    %1032 = vmatprep.subr.mxu0 0.0
    %1033 = vmatpush1.msra.mxu0 0.0
    %1034 = vmatprep.subr.mxu0 0.0
    %1035 = vmatpush1.msra.mxu0 0.0
    %1036 = vmatprep.subr.mxu0 0.0
    %1037 = vmatpush1.msra.mxu0 0.0
    %1038 = vmatprep.subr.mxu0 0.0
    %1039 = vmatpush1.msra.mxu0 0.0
    %1040 = vmatprep.subr.mxu0 0.0
    %1041 = vmatpush1.msra.mxu0 0.0
    %1042 = vmatprep.subr.mxu0 0.0
    %1043 = vmatpush1.msra.mxu0 %v196
    %1044 = vmatprep.subr.mxu0 0.0
    %1045 = vmatpush1.msra.mxu0 %v195
    %1046 = vmatprep.subr.mxu0 0.0
    %1047 = vmatpush1.msra.mxu0 %v194
    %1048 = vmatprep.subr.mxu0 0.0
    %1049 = vmatpush1.msra.mxu0 %v193
    %1050 = vmatprep.subr.mxu0 0.0
    %1051 = vmatpush2.msra.mxu0 0.0
    %1052 = vmatprep.subr.mxu0 0.0
    %1053 = vmatpush2.msra.mxu0 0.0
    %1054 = vmatprep.subr.mxu0 0.0
    %1055 = vmatpush2.msra.mxu0 0.0
    %1056 = vmatprep.subr.mxu0 0.0
    %1057 = vmatpush2.msra.mxu0 0.0
    %1058 = vmatprep.subr.mxu0 0.0
    %1059 = vmatpush2.msra.mxu0 0.0
    %1060 = vmatprep.subr.mxu0 0.0
    %1061 = vmatpush2.msra.mxu0 0.0
    %1062 = vmatprep.subr.mxu0 0.0
    %1063 = vmatpush2.msra.mxu0 0.0
    %1064 = vmatprep.subr.mxu0 0.0
    %1065 = vmatpush2.msra.mxu0 0.0
    %1066 = vmatprep.subr.mxu0 0.0
    %1067 = vmatpush2.msra.mxu0 0.0
    %1068 = vmatprep.subr.mxu0 0.0
    %1069 = vmatpush2.msra.mxu0 0.0
    %1070 = vmatprep.subr.mxu0 0.0
    %1071 = vmatpush2.msra.mxu0 0.0
    %1072 = vmatprep.subr.mxu0 0.0
    %1073 = vmatpush2.msra.mxu0 0.0
    %1074 = vmatprep.subr.mxu0 0.0
    %1075 = vmatpush2.msra.mxu0 0.0
    %1076 = vmatprep.subr.mxu0 0.0
    %1077 = vmatpush2.msra.mxu0 0.0
    %1078 = vmatprep.subr.mxu0 0.0
    %1079 = vmatpush2.msra.mxu0 0.0
    %1080 = vmatprep.subr.mxu0 0.0
    %1081 = vmatpush2.msra.mxu0 0.0
    %1082 = vmatprep.mubr.f32.mxu0 0.0
    %1083 = vmatmul.mubr.f32.gmra.mxu0 %v1016
    %v1084 = vpop.f32.mrf.mxu0
    %v1085 = vadd.f32 %v302, %v1084
    %v1086 = vpop.f32.mrf.mxu0
    %1087 = vdwg.mxu0
    %1089 = vrot.lane.b32.xlu0 %v915, 32
    %v1090 = vpop.permute.xlu0 %1089
    %v1091 = vsel %vm199, %v1090, 0
    %1093 = vmatprep.subr.mxu0 0.0
    %1094 = vmatpush1.msra.mxu0 0.0
    %1095 = vmatprep.subr.mxu0 0.0
    %1096 = vmatpush1.msra.mxu0 0.0
    %1097 = vmatprep.subr.mxu0 0.0
    %1098 = vmatpush1.msra.mxu0 0.0
    %1099 = vmatprep.subr.mxu0 0.0
    %1100 = vmatpush1.msra.mxu0 0.0
    %1101 = vmatprep.subr.mxu0 0.0
    %1102 = vmatpush1.msra.mxu0 0.0
    %1103 = vmatprep.subr.mxu0 0.0
    %1104 = vmatpush1.msra.mxu0 0.0
    %1105 = vmatprep.subr.mxu0 0.0
    %1106 = vmatpush1.msra.mxu0 0.0
    %1107 = vmatprep.subr.mxu0 0.0
    %1108 = vmatpush1.msra.mxu0 0.0
    %1109 = vmatprep.subr.mxu0 0.0
    %1110 = vmatpush1.msra.mxu0 0.0
    %1111 = vmatprep.subr.mxu0 0.0
    %1112 = vmatpush1.msra.mxu0 0.0
    %1113 = vmatprep.subr.mxu0 0.0
    %1114 = vmatpush1.msra.mxu0 0.0
    %1115 = vmatprep.subr.mxu0 0.0
    %1116 = vmatpush1.msra.mxu0 0.0
    %1117 = vmatprep.subr.mxu0 0.0
    %1118 = vmatpush1.msra.mxu0 %v192
    %1119 = vmatprep.subr.mxu0 0.0
    %1120 = vmatpush1.msra.mxu0 %v191
    %1121 = vmatprep.subr.mxu0 0.0
    %1122 = vmatpush1.msra.mxu0 %v190
    %1123 = vmatprep.subr.mxu0 0.0
    %1124 = vmatpush1.msra.mxu0 %v189
    %1125 = vmatprep.subr.mxu0 0.0
    %1126 = vmatpush2.msra.mxu0 0.0
    %1127 = vmatprep.subr.mxu0 0.0
    %1128 = vmatpush2.msra.mxu0 0.0
    %1129 = vmatprep.subr.mxu0 0.0
    %1130 = vmatpush2.msra.mxu0 0.0
    %1131 = vmatprep.subr.mxu0 0.0
    %1132 = vmatpush2.msra.mxu0 0.0
    %1133 = vmatprep.subr.mxu0 0.0
    %1134 = vmatpush2.msra.mxu0 0.0
    %1135 = vmatprep.subr.mxu0 0.0
    %1136 = vmatpush2.msra.mxu0 0.0
    %1137 = vmatprep.subr.mxu0 0.0
    %1138 = vmatpush2.msra.mxu0 0.0
    %1139 = vmatprep.subr.mxu0 0.0
    %1140 = vmatpush2.msra.mxu0 0.0
    %1141 = vmatprep.subr.mxu0 0.0
    %1142 = vmatpush2.msra.mxu0 0.0
    %1143 = vmatprep.subr.mxu0 0.0
    %1144 = vmatpush2.msra.mxu0 0.0
    %1145 = vmatprep.subr.mxu0 0.0
    %1146 = vmatpush2.msra.mxu0 0.0
    %1147 = vmatprep.subr.mxu0 0.0
    %1148 = vmatpush2.msra.mxu0 0.0
    %1149 = vmatprep.subr.mxu0 0.0
    %1150 = vmatpush2.msra.mxu0 0.0
    %1151 = vmatprep.subr.mxu0 0.0
    %1152 = vmatpush2.msra.mxu0 0.0
    %1153 = vmatprep.subr.mxu0 0.0
    %1154 = vmatpush2.msra.mxu0 0.0
    %1155 = vmatprep.subr.mxu0 0.0
    %1156 = vmatpush2.msra.mxu0 0.0
    %1157 = vmatprep.mubr.f32.mxu0 0.0
    %1158 = vmatmul.mubr.f32.gmra.mxu0 %v1091
    %v1159 = vpop.f32.mrf.mxu0
    %v1160 = vadd.f32 0.0, %v1159
    %v1161 = vpop.f32.mrf.mxu0
    %1162 = vdwg.mxu0
    %v1163 = vadd.f32 %v813, %v1160
    %v1164 = vxor.u32 %v1163, 2147483648
    %v1165 = vmul.f32 %v1164, 1.442695
    %v1166 = vpow.pop %v1165
    %v1167 = vadd.f32 %v1166, 1.0
    %v1168 = vrcp.pop %v1167
    %v1169 = vmul.f32 1.0, %v1168
    %v1170 = vtanh.pop %v1163
    %v1171 = vmul.f32 %v1169, %v909
    %1173 = vrot.lane.b32.xlu0 %v1170, 64
    %v1174 = vpop.permute.xlu0 %1173
    %v1176 = vmul.f32 %v1169, %v1174
    %1178 = vrot.lane.b32.xlu0 %v1176, 32
    %v1179 = vpop.permute.xlu0 %1178
    %v1181 = vadd.f32 %v1171, %v1179
    %v1182 = vtanh.pop %v1181
    %1184 = vrot.lane.b32.xlu0 %v1182, 64
    %v1185 = vpop.permute.xlu0 %1184
    %v1187 = vmul.f32 %v1169, %v1185
    %v1188 = vmax.f32 %v916, %v1187
    %v1189 = vld [vmem:[%s151] sm:$0xff]
    %1190 = vmatprep.subr.mxu0 0.0
    %1191 = vmatpush1.msra.mxu0 0.0
    %1192 = vmatprep.subr.mxu0 0.0
    %1193 = vmatpush1.msra.mxu0 0.0
    %1194 = vmatprep.subr.mxu0 0.0
    %1195 = vmatpush1.msra.mxu0 0.0
    %1196 = vmatprep.subr.mxu0 0.0
    %1197 = vmatpush1.msra.mxu0 0.0
    %1198 = vmatprep.subr.mxu0 0.0
    %1199 = vmatpush1.msra.mxu0 0.0
    %1200 = vmatprep.subr.mxu0 0.0
    %1201 = vmatpush1.msra.mxu0 0.0
    %1202 = vmatprep.subr.mxu0 0.0
    %1203 = vmatpush1.msra.mxu0 0.0
    %1204 = vmatprep.subr.mxu0 0.0
    %1205 = vmatpush1.msra.mxu0 0.0
    %1206 = vmatprep.subr.mxu0 0.0
    %1207 = vmatpush1.msra.mxu0 0.0
    %1208 = vmatprep.subr.mxu0 0.0
    %1209 = vmatpush1.msra.mxu0 0.0
    %1210 = vmatprep.subr.mxu0 0.0
    %1211 = vmatpush1.msra.mxu0 0.0
    %1212 = vmatprep.subr.mxu0 0.0
    %1213 = vmatpush1.msra.mxu0 0.0
    %1214 = vmatprep.subr.mxu0 0.0
    %1215 = vmatpush1.msra.mxu0 %v187
    %1216 = vmatprep.subr.mxu0 0.0
    %1217 = vmatpush1.msra.mxu0 %v186
    %1218 = vmatprep.subr.mxu0 0.0
    %1219 = vmatpush1.msra.mxu0 %v185
    %1220 = vmatprep.subr.mxu0 0.0
    %1221 = vmatpush1.msra.mxu0 %v184
    %1222 = vmatprep.subr.mxu0 0.0
    %1223 = vmatpush2.msra.mxu0 0.0
    %1224 = vmatprep.subr.mxu0 0.0
    %1225 = vmatpush2.msra.mxu0 0.0
    %1226 = vmatprep.subr.mxu0 0.0
    %1227 = vmatpush2.msra.mxu0 0.0
    %1228 = vmatprep.subr.mxu0 0.0
    %1229 = vmatpush2.msra.mxu0 0.0
    %1230 = vmatprep.subr.mxu0 0.0
    %1231 = vmatpush2.msra.mxu0 0.0
    %1232 = vmatprep.subr.mxu0 0.0
    %1233 = vmatpush2.msra.mxu0 0.0
    %1234 = vmatprep.subr.mxu0 0.0
    %1235 = vmatpush2.msra.mxu0 0.0
    %1236 = vmatprep.subr.mxu0 0.0
    %1237 = vmatpush2.msra.mxu0 0.0
    %1238 = vmatprep.subr.mxu0 0.0
    %1239 = vmatpush2.msra.mxu0 0.0
    %1240 = vmatprep.subr.mxu0 0.0
    %1241 = vmatpush2.msra.mxu0 0.0
    %1242 = vmatprep.subr.mxu0 0.0
    %1243 = vmatpush2.msra.mxu0 0.0
    %1244 = vmatprep.subr.mxu0 0.0
    %1245 = vmatpush2.msra.mxu0 0.0
    %1246 = vmatprep.subr.mxu0 0.0
    %1247 = vmatpush2.msra.mxu0 0.0
    %1248 = vmatprep.subr.mxu0 0.0
    %1249 = vmatpush2.msra.mxu0 0.0
    %1250 = vmatprep.subr.mxu0 0.0
    %1251 = vmatpush2.msra.mxu0 0.0
    %1252 = vmatprep.subr.mxu0 0.0
    %1253 = vmatpush2.msra.mxu0 0.0
    %1254 = vmatprep.mubr.f32.mxu0 0.0
    %1255 = vmatmul.mubr.f32.gmra.mxu0 %v1016
    %v1256 = vpop.f32.mrf.mxu0
    %v1257 = vadd.f32 0.0, %v1256
    %v1258 = vpop.f32.mrf.mxu0
    %1259 = vdwg.mxu0
    %v1260 = vadd.f32 %v1189, %v1257
    %v1261 = vxor.u32 %v1260, 2147483648
    %v1262 = vmul.f32 %v1261, 1.442695
    %v1263 = vpow.pop %v1262
    %v1264 = vadd.f32 %v1263, 1.0
    %v1265 = vrcp.pop %v1264
    %v1266 = vmul.f32 1.0, %v1265
    %v1267 = vtanh.pop %v1260
    %v1268 = vmul.f32 %v1266, %v1006
    %1270 = vrot.lane.b32.xlu0 %v1267, 64
    %v1271 = vpop.permute.xlu0 %1270
    %v1273 = vmul.f32 %v1266, %v1271
    %1275 = vrot.lane.b32.xlu0 %v1273, 32
    %v1276 = vpop.permute.xlu0 %1275
    %v1278 = vadd.f32 %v1268, %v1276
    %v1279 = vtanh.pop %v1278
    %1281 = vrot.lane.b32.xlu0 %v1279, 64
    %v1282 = vpop.permute.xlu0 %1281
    %v1284 = vmul.f32 %v1266, %v1282
    %1286 = vrot.lane.b32.xlu0 %v1284, 32
    %v1287 = vpop.permute.xlu0 %1286
    %v1288 = vsel %vm199, %v1287, 0
    %1290 = vmatprep.subr.mxu0 0.0
    %1291 = vmatpush1.msra.mxu0 0.0
    %1292 = vmatprep.subr.mxu0 0.0
    %1293 = vmatpush1.msra.mxu0 0.0
    %1294 = vmatprep.subr.mxu0 0.0
    %1295 = vmatpush1.msra.mxu0 0.0
    %1296 = vmatprep.subr.mxu0 0.0
    %1297 = vmatpush1.msra.mxu0 0.0
    %1298 = vmatprep.subr.mxu0 0.0
    %1299 = vmatpush1.msra.mxu0 0.0
    %1300 = vmatprep.subr.mxu0 0.0
    %1301 = vmatpush1.msra.mxu0 0.0
    %1302 = vmatprep.subr.mxu0 0.0
    %1303 = vmatpush1.msra.mxu0 0.0
    %1304 = vmatprep.subr.mxu0 0.0
    %1305 = vmatpush1.msra.mxu0 0.0
    %1306 = vmatprep.subr.mxu0 0.0
    %1307 = vmatpush1.msra.mxu0 0.0
    %1308 = vmatprep.subr.mxu0 0.0
    %1309 = vmatpush1.msra.mxu0 0.0
    %1310 = vmatprep.subr.mxu0 0.0
    %1311 = vmatpush1.msra.mxu0 0.0
    %1312 = vmatprep.subr.mxu0 0.0
    %1313 = vmatpush1.msra.mxu0 0.0
    %1314 = vmatprep.subr.mxu0 0.0
    %1315 = vmatpush1.msra.mxu0 %v196
    %1316 = vmatprep.subr.mxu0 0.0
    %1317 = vmatpush1.msra.mxu0 %v195
    %1318 = vmatprep.subr.mxu0 0.0
    %1319 = vmatpush1.msra.mxu0 %v194
    %1320 = vmatprep.subr.mxu0 0.0
    %1321 = vmatpush1.msra.mxu0 %v193
    %1322 = vmatprep.subr.mxu0 0.0
    %1323 = vmatpush2.msra.mxu0 0.0
    %1324 = vmatprep.subr.mxu0 0.0
    %1325 = vmatpush2.msra.mxu0 0.0
    %1326 = vmatprep.subr.mxu0 0.0
    %1327 = vmatpush2.msra.mxu0 0.0
    %1328 = vmatprep.subr.mxu0 0.0
    %1329 = vmatpush2.msra.mxu0 0.0
    %1330 = vmatprep.subr.mxu0 0.0
    %1331 = vmatpush2.msra.mxu0 0.0
    %1332 = vmatprep.subr.mxu0 0.0
    %1333 = vmatpush2.msra.mxu0 0.0
    %1334 = vmatprep.subr.mxu0 0.0
    %1335 = vmatpush2.msra.mxu0 0.0
    %1336 = vmatprep.subr.mxu0 0.0
    %1337 = vmatpush2.msra.mxu0 0.0
    %1338 = vmatprep.subr.mxu0 0.0
    %1339 = vmatpush2.msra.mxu0 0.0
    %1340 = vmatprep.subr.mxu0 0.0
    %1341 = vmatpush2.msra.mxu0 0.0
    %1342 = vmatprep.subr.mxu0 0.0
    %1343 = vmatpush2.msra.mxu0 0.0
    %1344 = vmatprep.subr.mxu0 0.0
    %1345 = vmatpush2.msra.mxu0 0.0
    %1346 = vmatprep.subr.mxu0 0.0
    %1347 = vmatpush2.msra.mxu0 0.0
    %1348 = vmatprep.subr.mxu0 0.0
    %1349 = vmatpush2.msra.mxu0 0.0
    %1350 = vmatprep.subr.mxu0 0.0
    %1351 = vmatpush2.msra.mxu0 0.0
    %1352 = vmatprep.subr.mxu0 0.0
    %1353 = vmatpush2.msra.mxu0 0.0
    %1354 = vmatprep.mubr.f32.mxu0 0.0
    %1355 = vmatmul.mubr.f32.gmra.mxu0 %v1288
    %v1356 = vpop.f32.mrf.mxu0
    %v1357 = vadd.f32 %v302, %v1356
    %v1358 = vpop.f32.mrf.mxu0
    %1359 = vdwg.mxu0
    %1361 = vrot.lane.b32.xlu0 %v1187, 32
    %v1362 = vpop.permute.xlu0 %1361
    %v1363 = vsel %vm199, %v1362, 0
    %1365 = vmatprep.subr.mxu0 0.0
    %1366 = vmatpush1.msra.mxu0 0.0
    %1367 = vmatprep.subr.mxu0 0.0
    %1368 = vmatpush1.msra.mxu0 0.0
    %1369 = vmatprep.subr.mxu0 0.0
    %1370 = vmatpush1.msra.mxu0 0.0
    %1371 = vmatprep.subr.mxu0 0.0
    %1372 = vmatpush1.msra.mxu0 0.0
    %1373 = vmatprep.subr.mxu0 0.0
    %1374 = vmatpush1.msra.mxu0 0.0
    %1375 = vmatprep.subr.mxu0 0.0
    %1376 = vmatpush1.msra.mxu0 0.0
    %1377 = vmatprep.subr.mxu0 0.0
    %1378 = vmatpush1.msra.mxu0 0.0
    %1379 = vmatprep.subr.mxu0 0.0
    %1380 = vmatpush1.msra.mxu0 0.0
    %1381 = vmatprep.subr.mxu0 0.0
    %1382 = vmatpush1.msra.mxu0 0.0
    %1383 = vmatprep.subr.mxu0 0.0
    %1384 = vmatpush1.msra.mxu0 0.0
    %1385 = vmatprep.subr.mxu0 0.0
    %1386 = vmatpush1.msra.mxu0 0.0
    %1387 = vmatprep.subr.mxu0 0.0
    %1388 = vmatpush1.msra.mxu0 0.0
    %1389 = vmatprep.subr.mxu0 0.0
    %1390 = vmatpush1.msra.mxu0 %v192
    %1391 = vmatprep.subr.mxu0 0.0
    %1392 = vmatpush1.msra.mxu0 %v191
    %1393 = vmatprep.subr.mxu0 0.0
    %1394 = vmatpush1.msra.mxu0 %v190
    %1395 = vmatprep.subr.mxu0 0.0
    %1396 = vmatpush1.msra.mxu0 %v189
    %1397 = vmatprep.subr.mxu0 0.0
    %1398 = vmatpush2.msra.mxu0 0.0
    %1399 = vmatprep.subr.mxu0 0.0
    %1400 = vmatpush2.msra.mxu0 0.0
    %1401 = vmatprep.subr.mxu0 0.0
    %1402 = vmatpush2.msra.mxu0 0.0
    %1403 = vmatprep.subr.mxu0 0.0
    %1404 = vmatpush2.msra.mxu0 0.0
    %1405 = vmatprep.subr.mxu0 0.0
    %1406 = vmatpush2.msra.mxu0 0.0
    %1407 = vmatprep.subr.mxu0 0.0
    %1408 = vmatpush2.msra.mxu0 0.0
    %1409 = vmatprep.subr.mxu0 0.0
    %1410 = vmatpush2.msra.mxu0 0.0
    %1411 = vmatprep.subr.mxu0 0.0
    %1412 = vmatpush2.msra.mxu0 0.0
    %1413 = vmatprep.subr.mxu0 0.0
    %1414 = vmatpush2.msra.mxu0 0.0
    %1415 = vmatprep.subr.mxu0 0.0
    %1416 = vmatpush2.msra.mxu0 0.0
    %1417 = vmatprep.subr.mxu0 0.0
    %1418 = vmatpush2.msra.mxu0 0.0
    %1419 = vmatprep.subr.mxu0 0.0
    %1420 = vmatpush2.msra.mxu0 0.0
    %1421 = vmatprep.subr.mxu0 0.0
    %1422 = vmatpush2.msra.mxu0 0.0
    %1423 = vmatprep.subr.mxu0 0.0
    %1424 = vmatpush2.msra.mxu0 0.0
    %1425 = vmatprep.subr.mxu0 0.0
    %1426 = vmatpush2.msra.mxu0 0.0
    %1427 = vmatprep.subr.mxu0 0.0
    %1428 = vmatpush2.msra.mxu0 0.0
    %1429 = vmatprep.mubr.f32.mxu0 0.0
    %1430 = vmatmul.mubr.f32.gmra.mxu0 %v1363
    %v1431 = vpop.f32.mrf.mxu0
    %v1432 = vadd.f32 0.0, %v1431
    %v1433 = vpop.f32.mrf.mxu0
    %1434 = vdwg.mxu0
    %v1435 = vadd.f32 %v1085, %v1432
    %v1436 = vxor.u32 %v1435, 2147483648
    %v1437 = vmul.f32 %v1436, 1.442695
    %v1438 = vpow.pop %v1437
    %v1439 = vadd.f32 %v1438, 1.0
    %v1440 = vrcp.pop %v1439
    %v1441 = vmul.f32 1.0, %v1440
    %v1442 = vtanh.pop %v1435
    %v1443 = vmul.f32 %v1441, %v1181
    %1445 = vrot.lane.b32.xlu0 %v1442, 64
    %v1446 = vpop.permute.xlu0 %1445
    %v1448 = vmul.f32 %v1441, %v1446
    %1450 = vrot.lane.b32.xlu0 %v1448, 32
    %v1451 = vpop.permute.xlu0 %1450
    %v1453 = vadd.f32 %v1443, %v1451
    %v1454 = vtanh.pop %v1453
    %1456 = vrot.lane.b32.xlu0 %v1454, 64
    %v1457 = vpop.permute.xlu0 %1456
    %v1459 = vmul.f32 %v1441, %v1457
    %v1460 = vmax.f32 %v1188, %v1459
    %v1461 = vld [vmem:[%s160] sm:$0xff]
    %1462 = vmatprep.subr.mxu0 0.0
    %1463 = vmatpush1.msra.mxu0 0.0
    %1464 = vmatprep.subr.mxu0 0.0
    %1465 = vmatpush1.msra.mxu0 0.0
    %1466 = vmatprep.subr.mxu0 0.0
    %1467 = vmatpush1.msra.mxu0 0.0
    %1468 = vmatprep.subr.mxu0 0.0
    %1469 = vmatpush1.msra.mxu0 0.0
    %1470 = vmatprep.subr.mxu0 0.0
    %1471 = vmatpush1.msra.mxu0 0.0
    %1472 = vmatprep.subr.mxu0 0.0
    %1473 = vmatpush1.msra.mxu0 0.0
    %1474 = vmatprep.subr.mxu0 0.0
    %1475 = vmatpush1.msra.mxu0 0.0
    %1476 = vmatprep.subr.mxu0 0.0
    %1477 = vmatpush1.msra.mxu0 0.0
    %1478 = vmatprep.subr.mxu0 0.0
    %1479 = vmatpush1.msra.mxu0 0.0
    %1480 = vmatprep.subr.mxu0 0.0
    %1481 = vmatpush1.msra.mxu0 0.0
    %1482 = vmatprep.subr.mxu0 0.0
    %1483 = vmatpush1.msra.mxu0 0.0
    %1484 = vmatprep.subr.mxu0 0.0
    %1485 = vmatpush1.msra.mxu0 0.0
    %1486 = vmatprep.subr.mxu0 0.0
    %1487 = vmatpush1.msra.mxu0 %v187
    %1488 = vmatprep.subr.mxu0 0.0
    %1489 = vmatpush1.msra.mxu0 %v186
    %1490 = vmatprep.subr.mxu0 0.0
    %1491 = vmatpush1.msra.mxu0 %v185
    %1492 = vmatprep.subr.mxu0 0.0
    %1493 = vmatpush1.msra.mxu0 %v184
    %1494 = vmatprep.subr.mxu0 0.0
    %1495 = vmatpush2.msra.mxu0 0.0
    %1496 = vmatprep.subr.mxu0 0.0
    %1497 = vmatpush2.msra.mxu0 0.0
    %1498 = vmatprep.subr.mxu0 0.0
    %1499 = vmatpush2.msra.mxu0 0.0
    %1500 = vmatprep.subr.mxu0 0.0
    %1501 = vmatpush2.msra.mxu0 0.0
    %1502 = vmatprep.subr.mxu0 0.0
    %1503 = vmatpush2.msra.mxu0 0.0
    %1504 = vmatprep.subr.mxu0 0.0
    %1505 = vmatpush2.msra.mxu0 0.0
    %1506 = vmatprep.subr.mxu0 0.0
    %1507 = vmatpush2.msra.mxu0 0.0
    %1508 = vmatprep.subr.mxu0 0.0
    %1509 = vmatpush2.msra.mxu0 0.0
    %1510 = vmatprep.subr.mxu0 0.0
    %1511 = vmatpush2.msra.mxu0 0.0
    %1512 = vmatprep.subr.mxu0 0.0
    %1513 = vmatpush2.msra.mxu0 0.0
    %1514 = vmatprep.subr.mxu0 0.0
    %1515 = vmatpush2.msra.mxu0 0.0
    %1516 = vmatprep.subr.mxu0 0.0
    %1517 = vmatpush2.msra.mxu0 0.0
    %1518 = vmatprep.subr.mxu0 0.0
    %1519 = vmatpush2.msra.mxu0 0.0
    %1520 = vmatprep.subr.mxu0 0.0
    %1521 = vmatpush2.msra.mxu0 0.0
    %1522 = vmatprep.subr.mxu0 0.0
    %1523 = vmatpush2.msra.mxu0 0.0
    %1524 = vmatprep.subr.mxu0 0.0
    %1525 = vmatpush2.msra.mxu0 0.0
    %1526 = vmatprep.mubr.f32.mxu0 0.0
    %1527 = vmatmul.mubr.f32.gmra.mxu0 %v1288
    %v1528 = vpop.f32.mrf.mxu0
    %v1529 = vadd.f32 0.0, %v1528
    %v1530 = vpop.f32.mrf.mxu0
    %1531 = vdwg.mxu0
    %v1532 = vadd.f32 %v1461, %v1529
    %v1533 = vxor.u32 %v1532, 2147483648
    %v1534 = vmul.f32 %v1533, 1.442695
    %v1535 = vpow.pop %v1534
    %v1536 = vadd.f32 %v1535, 1.0
    %v1537 = vrcp.pop %v1536
    %v1538 = vmul.f32 1.0, %v1537
    %v1539 = vtanh.pop %v1532
    %v1540 = vmul.f32 %v1538, %v1278
    %1542 = vrot.lane.b32.xlu0 %v1539, 64
    %v1543 = vpop.permute.xlu0 %1542
    %v1545 = vmul.f32 %v1538, %v1543
    %1547 = vrot.lane.b32.xlu0 %v1545, 32
    %v1548 = vpop.permute.xlu0 %1547
    %v1550 = vadd.f32 %v1540, %v1548
    %v1551 = vtanh.pop %v1550
    %1553 = vrot.lane.b32.xlu0 %v1551, 64
    %v1554 = vpop.permute.xlu0 %1553
    %v1556 = vmul.f32 %v1538, %v1554
    %1558 = vrot.lane.b32.xlu0 %v1556, 32
    %v1559 = vpop.permute.xlu0 %1558
    %v1560 = vsel %vm199, %v1559, 0
    %1562 = vmatprep.subr.mxu0 0.0
    %1563 = vmatpush1.msra.mxu0 0.0
    %1564 = vmatprep.subr.mxu0 0.0
    %1565 = vmatpush1.msra.mxu0 0.0
    %1566 = vmatprep.subr.mxu0 0.0
    %1567 = vmatpush1.msra.mxu0 0.0
    %1568 = vmatprep.subr.mxu0 0.0
    %1569 = vmatpush1.msra.mxu0 0.0
    %1570 = vmatprep.subr.mxu0 0.0
    %1571 = vmatpush1.msra.mxu0 0.0
    %1572 = vmatprep.subr.mxu0 0.0
    %1573 = vmatpush1.msra.mxu0 0.0
    %1574 = vmatprep.subr.mxu0 0.0
    %1575 = vmatpush1.msra.mxu0 0.0
    %1576 = vmatprep.subr.mxu0 0.0
    %1577 = vmatpush1.msra.mxu0 0.0
    %1578 = vmatprep.subr.mxu0 0.0
    %1579 = vmatpush1.msra.mxu0 0.0
    %1580 = vmatprep.subr.mxu0 0.0
    %1581 = vmatpush1.msra.mxu0 0.0
    %1582 = vmatprep.subr.mxu0 0.0
    %1583 = vmatpush1.msra.mxu0 0.0
    %1584 = vmatprep.subr.mxu0 0.0
    %1585 = vmatpush1.msra.mxu0 0.0
    %1586 = vmatprep.subr.mxu0 0.0
    %1587 = vmatpush1.msra.mxu0 %v196
    %1588 = vmatprep.subr.mxu0 0.0
    %1589 = vmatpush1.msra.mxu0 %v195
    %1590 = vmatprep.subr.mxu0 0.0
    %1591 = vmatpush1.msra.mxu0 %v194
    %1592 = vmatprep.subr.mxu0 0.0
    %1593 = vmatpush1.msra.mxu0 %v193
    %1594 = vmatprep.subr.mxu0 0.0
    %1595 = vmatpush2.msra.mxu0 0.0
    %1596 = vmatprep.subr.mxu0 0.0
    %1597 = vmatpush2.msra.mxu0 0.0
    %1598 = vmatprep.subr.mxu0 0.0
    %1599 = vmatpush2.msra.mxu0 0.0
    %1600 = vmatprep.subr.mxu0 0.0
    %1601 = vmatpush2.msra.mxu0 0.0
    %1602 = vmatprep.subr.mxu0 0.0
    %1603 = vmatpush2.msra.mxu0 0.0
    %1604 = vmatprep.subr.mxu0 0.0
    %1605 = vmatpush2.msra.mxu0 0.0
    %1606 = vmatprep.subr.mxu0 0.0
    %1607 = vmatpush2.msra.mxu0 0.0
    %1608 = vmatprep.subr.mxu0 0.0
    %1609 = vmatpush2.msra.mxu0 0.0
    %1610 = vmatprep.subr.mxu0 0.0
    %1611 = vmatpush2.msra.mxu0 0.0
    %1612 = vmatprep.subr.mxu0 0.0
    %1613 = vmatpush2.msra.mxu0 0.0
    %1614 = vmatprep.subr.mxu0 0.0
    %1615 = vmatpush2.msra.mxu0 0.0
    %1616 = vmatprep.subr.mxu0 0.0
    %1617 = vmatpush2.msra.mxu0 0.0
    %1618 = vmatprep.subr.mxu0 0.0
    %1619 = vmatpush2.msra.mxu0 0.0
    %1620 = vmatprep.subr.mxu0 0.0
    %1621 = vmatpush2.msra.mxu0 0.0
    %1622 = vmatprep.subr.mxu0 0.0
    %1623 = vmatpush2.msra.mxu0 0.0
    %1624 = vmatprep.subr.mxu0 0.0
    %1625 = vmatpush2.msra.mxu0 0.0
    %1626 = vmatprep.mubr.f32.mxu0 0.0
    %1627 = vmatmul.mubr.f32.gmra.mxu0 %v1560
    %v1628 = vpop.f32.mrf.mxu0
    %v1629 = vadd.f32 %v302, %v1628
    %v1630 = vpop.f32.mrf.mxu0
    %1631 = vdwg.mxu0
    %1633 = vrot.lane.b32.xlu0 %v1459, 32
    %v1634 = vpop.permute.xlu0 %1633
    %v1635 = vsel %vm199, %v1634, 0
    %1637 = vmatprep.subr.mxu0 0.0
    %1638 = vmatpush1.msra.mxu0 0.0
    %1639 = vmatprep.subr.mxu0 0.0
    %1640 = vmatpush1.msra.mxu0 0.0
    %1641 = vmatprep.subr.mxu0 0.0
    %1642 = vmatpush1.msra.mxu0 0.0
    %1643 = vmatprep.subr.mxu0 0.0
    %1644 = vmatpush1.msra.mxu0 0.0
    %1645 = vmatprep.subr.mxu0 0.0
    %1646 = vmatpush1.msra.mxu0 0.0
    %1647 = vmatprep.subr.mxu0 0.0
    %1648 = vmatpush1.msra.mxu0 0.0
    %1649 = vmatprep.subr.mxu0 0.0
    %1650 = vmatpush1.msra.mxu0 0.0
    %1651 = vmatprep.subr.mxu0 0.0
    %1652 = vmatpush1.msra.mxu0 0.0
    %1653 = vmatprep.subr.mxu0 0.0
    %1654 = vmatpush1.msra.mxu0 0.0
    %1655 = vmatprep.subr.mxu0 0.0
    %1656 = vmatpush1.msra.mxu0 0.0
    %1657 = vmatprep.subr.mxu0 0.0
    %1658 = vmatpush1.msra.mxu0 0.0
    %1659 = vmatprep.subr.mxu0 0.0
    %1660 = vmatpush1.msra.mxu0 0.0
    %1661 = vmatprep.subr.mxu0 0.0
    %1662 = vmatpush1.msra.mxu0 %v192
    %1663 = vmatprep.subr.mxu0 0.0
    %1664 = vmatpush1.msra.mxu0 %v191
    %1665 = vmatprep.subr.mxu0 0.0
    %1666 = vmatpush1.msra.mxu0 %v190
    %1667 = vmatprep.subr.mxu0 0.0
    %1668 = vmatpush1.msra.mxu0 %v189
    %1669 = vmatprep.subr.mxu0 0.0
    %1670 = vmatpush2.msra.mxu0 0.0
    %1671 = vmatprep.subr.mxu0 0.0
    %1672 = vmatpush2.msra.mxu0 0.0
    %1673 = vmatprep.subr.mxu0 0.0
    %1674 = vmatpush2.msra.mxu0 0.0
    %1675 = vmatprep.subr.mxu0 0.0
    %1676 = vmatpush2.msra.mxu0 0.0
    %1677 = vmatprep.subr.mxu0 0.0
    %1678 = vmatpush2.msra.mxu0 0.0
    %1679 = vmatprep.subr.mxu0 0.0
    %1680 = vmatpush2.msra.mxu0 0.0
    %1681 = vmatprep.subr.mxu0 0.0
    %1682 = vmatpush2.msra.mxu0 0.0
    %1683 = vmatprep.subr.mxu0 0.0
    %1684 = vmatpush2.msra.mxu0 0.0
    %1685 = vmatprep.subr.mxu0 0.0
    %1686 = vmatpush2.msra.mxu0 0.0
    %1687 = vmatprep.subr.mxu0 0.0
    %1688 = vmatpush2.msra.mxu0 0.0
    %1689 = vmatprep.subr.mxu0 0.0
    %1690 = vmatpush2.msra.mxu0 0.0
    %1691 = vmatprep.subr.mxu0 0.0
    %1692 = vmatpush2.msra.mxu0 0.0
    %1693 = vmatprep.subr.mxu0 0.0
    %1694 = vmatpush2.msra.mxu0 0.0
    %1695 = vmatprep.subr.mxu0 0.0
    %1696 = vmatpush2.msra.mxu0 0.0
    %1697 = vmatprep.subr.mxu0 0.0
    %1698 = vmatpush2.msra.mxu0 0.0
    %1699 = vmatprep.subr.mxu0 0.0
    %1700 = vmatpush2.msra.mxu0 0.0
    %1701 = vmatprep.mubr.f32.mxu0 0.0
    %1702 = vmatmul.mubr.f32.gmra.mxu0 %v1635
    %v1703 = vpop.f32.mrf.mxu0
    %v1704 = vadd.f32 0.0, %v1703
    %v1705 = vpop.f32.mrf.mxu0
    %1706 = vdwg.mxu0
    %v1707 = vadd.f32 %v1357, %v1704
    %v1708 = vxor.u32 %v1707, 2147483648
    %v1709 = vmul.f32 %v1708, 1.442695
    %v1710 = vpow.pop %v1709
    %v1711 = vadd.f32 %v1710, 1.0
    %v1712 = vrcp.pop %v1711
    %v1713 = vmul.f32 1.0, %v1712
    %v1714 = vtanh.pop %v1707
    %v1715 = vmul.f32 %v1713, %v1453
    %1717 = vrot.lane.b32.xlu0 %v1714, 64
    %v1718 = vpop.permute.xlu0 %1717
    %v1720 = vmul.f32 %v1713, %v1718
    %1722 = vrot.lane.b32.xlu0 %v1720, 32
    %v1723 = vpop.permute.xlu0 %1722
    %v1725 = vadd.f32 %v1715, %v1723
    %v1726 = vtanh.pop %v1725
    %1728 = vrot.lane.b32.xlu0 %v1726, 64
    %v1729 = vpop.permute.xlu0 %1728
    %v1731 = vmul.f32 %v1713, %v1729
    %v1732 = vmax.f32 %v1460, %v1731
    %v1733 = vld [vmem:[%s169] sm:$0xff]
    %1734 = vmatprep.subr.mxu0 0.0
    %1735 = vmatpush1.msra.mxu0 0.0
    %1736 = vmatprep.subr.mxu0 0.0
    %1737 = vmatpush1.msra.mxu0 0.0
    %1738 = vmatprep.subr.mxu0 0.0
    %1739 = vmatpush1.msra.mxu0 0.0
    %1740 = vmatprep.subr.mxu0 0.0
    %1741 = vmatpush1.msra.mxu0 0.0
    %1742 = vmatprep.subr.mxu0 0.0
    %1743 = vmatpush1.msra.mxu0 0.0
    %1744 = vmatprep.subr.mxu0 0.0
    %1745 = vmatpush1.msra.mxu0 0.0
    %1746 = vmatprep.subr.mxu0 0.0
    %1747 = vmatpush1.msra.mxu0 0.0
    %1748 = vmatprep.subr.mxu0 0.0
    %1749 = vmatpush1.msra.mxu0 0.0
    %1750 = vmatprep.subr.mxu0 0.0
    %1751 = vmatpush1.msra.mxu0 0.0
    %1752 = vmatprep.subr.mxu0 0.0
    %1753 = vmatpush1.msra.mxu0 0.0
    %1754 = vmatprep.subr.mxu0 0.0
    %1755 = vmatpush1.msra.mxu0 0.0
    %1756 = vmatprep.subr.mxu0 0.0
    %1757 = vmatpush1.msra.mxu0 0.0
    %1758 = vmatprep.subr.mxu0 0.0
    %1759 = vmatpush1.msra.mxu0 %v187
    %1760 = vmatprep.subr.mxu0 0.0
    %1761 = vmatpush1.msra.mxu0 %v186
    %1762 = vmatprep.subr.mxu0 0.0
    %1763 = vmatpush1.msra.mxu0 %v185
    %1764 = vmatprep.subr.mxu0 0.0
    %1765 = vmatpush1.msra.mxu0 %v184
    %1766 = vmatprep.subr.mxu0 0.0
    %1767 = vmatpush2.msra.mxu0 0.0
    %1768 = vmatprep.subr.mxu0 0.0
    %1769 = vmatpush2.msra.mxu0 0.0
    %1770 = vmatprep.subr.mxu0 0.0
    %1771 = vmatpush2.msra.mxu0 0.0
    %1772 = vmatprep.subr.mxu0 0.0
    %1773 = vmatpush2.msra.mxu0 0.0
    %1774 = vmatprep.subr.mxu0 0.0
    %1775 = vmatpush2.msra.mxu0 0.0
    %1776 = vmatprep.subr.mxu0 0.0
    %1777 = vmatpush2.msra.mxu0 0.0
    %1778 = vmatprep.subr.mxu0 0.0
    %1779 = vmatpush2.msra.mxu0 0.0
    %1780 = vmatprep.subr.mxu0 0.0
    %1781 = vmatpush2.msra.mxu0 0.0
    %1782 = vmatprep.subr.mxu0 0.0
    %1783 = vmatpush2.msra.mxu0 0.0
    %1784 = vmatprep.subr.mxu0 0.0
    %1785 = vmatpush2.msra.mxu0 0.0
    %1786 = vmatprep.subr.mxu0 0.0
    %1787 = vmatpush2.msra.mxu0 0.0
    %1788 = vmatprep.subr.mxu0 0.0
    %1789 = vmatpush2.msra.mxu0 0.0
    %1790 = vmatprep.subr.mxu0 0.0
    %1791 = vmatpush2.msra.mxu0 0.0
    %1792 = vmatprep.subr.mxu0 0.0
    %1793 = vmatpush2.msra.mxu0 0.0
    %1794 = vmatprep.subr.mxu0 0.0
    %1795 = vmatpush2.msra.mxu0 0.0
    %1796 = vmatprep.subr.mxu0 0.0
    %1797 = vmatpush2.msra.mxu0 0.0
    %1798 = vmatprep.mubr.f32.mxu0 0.0
    %1799 = vmatmul.mubr.f32.gmra.mxu0 %v1560
    %v1800 = vpop.f32.mrf.mxu0
    %v1801 = vadd.f32 0.0, %v1800
    %v1802 = vpop.f32.mrf.mxu0
    %1803 = vdwg.mxu0
    %v1804 = vadd.f32 %v1733, %v1801
    %v1805 = vxor.u32 %v1804, 2147483648
    %v1806 = vmul.f32 %v1805, 1.442695
    %v1807 = vpow.pop %v1806
    %v1808 = vadd.f32 %v1807, 1.0
    %v1809 = vrcp.pop %v1808
    %v1810 = vmul.f32 1.0, %v1809
    %v1811 = vtanh.pop %v1804
    %v1812 = vmul.f32 %v1810, %v1550
    %1814 = vrot.lane.b32.xlu0 %v1811, 64
    %v1815 = vpop.permute.xlu0 %1814
    %v1817 = vmul.f32 %v1810, %v1815
    %1819 = vrot.lane.b32.xlu0 %v1817, 32
    %v1820 = vpop.permute.xlu0 %1819
    %v1822 = vadd.f32 %v1812, %v1820
    %v1823 = vtanh.pop %v1822
    %1825 = vrot.lane.b32.xlu0 %v1823, 64
    %v1826 = vpop.permute.xlu0 %1825
    %v1828 = vmul.f32 %v1810, %v1826
    %1830 = vrot.lane.b32.xlu0 %v1828, 32
    %v1831 = vpop.permute.xlu0 %1830
    %v1832 = vsel %vm199, %v1831, 0
    %1834 = vmatprep.subr.mxu0 0.0
    %1835 = vmatpush1.msra.mxu0 0.0
    %1836 = vmatprep.subr.mxu0 0.0
    %1837 = vmatpush1.msra.mxu0 0.0
    %1838 = vmatprep.subr.mxu0 0.0
    %1839 = vmatpush1.msra.mxu0 0.0
    %1840 = vmatprep.subr.mxu0 0.0
    %1841 = vmatpush1.msra.mxu0 0.0
    %1842 = vmatprep.subr.mxu0 0.0
    %1843 = vmatpush1.msra.mxu0 0.0
    %1844 = vmatprep.subr.mxu0 0.0
    %1845 = vmatpush1.msra.mxu0 0.0
    %1846 = vmatprep.subr.mxu0 0.0
    %1847 = vmatpush1.msra.mxu0 0.0
    %1848 = vmatprep.subr.mxu0 0.0
    %1849 = vmatpush1.msra.mxu0 0.0
    %1850 = vmatprep.subr.mxu0 0.0
    %1851 = vmatpush1.msra.mxu0 0.0
    %1852 = vmatprep.subr.mxu0 0.0
    %1853 = vmatpush1.msra.mxu0 0.0
    %1854 = vmatprep.subr.mxu0 0.0
    %1855 = vmatpush1.msra.mxu0 0.0
    %1856 = vmatprep.subr.mxu0 0.0
    %1857 = vmatpush1.msra.mxu0 0.0
    %1858 = vmatprep.subr.mxu0 0.0
    %1859 = vmatpush1.msra.mxu0 %v196
    %1860 = vmatprep.subr.mxu0 0.0
    %1861 = vmatpush1.msra.mxu0 %v195
    %1862 = vmatprep.subr.mxu0 0.0
    %1863 = vmatpush1.msra.mxu0 %v194
    %1864 = vmatprep.subr.mxu0 0.0
    %1865 = vmatpush1.msra.mxu0 %v193
    %1866 = vmatprep.subr.mxu0 0.0
    %1867 = vmatpush2.msra.mxu0 0.0
    %1868 = vmatprep.subr.mxu0 0.0
    %1869 = vmatpush2.msra.mxu0 0.0
    %1870 = vmatprep.subr.mxu0 0.0
    %1871 = vmatpush2.msra.mxu0 0.0
    %1872 = vmatprep.subr.mxu0 0.0
    %1873 = vmatpush2.msra.mxu0 0.0
    %1874 = vmatprep.subr.mxu0 0.0
    %1875 = vmatpush2.msra.mxu0 0.0
    %1876 = vmatprep.subr.mxu0 0.0
    %1877 = vmatpush2.msra.mxu0 0.0
    %1878 = vmatprep.subr.mxu0 0.0
    %1879 = vmatpush2.msra.mxu0 0.0
    %1880 = vmatprep.subr.mxu0 0.0
    %1881 = vmatpush2.msra.mxu0 0.0
    %1882 = vmatprep.subr.mxu0 0.0
    %1883 = vmatpush2.msra.mxu0 0.0
    %1884 = vmatprep.subr.mxu0 0.0
    %1885 = vmatpush2.msra.mxu0 0.0
    %1886 = vmatprep.subr.mxu0 0.0
    %1887 = vmatpush2.msra.mxu0 0.0
    %1888 = vmatprep.subr.mxu0 0.0
    %1889 = vmatpush2.msra.mxu0 0.0
    %1890 = vmatprep.subr.mxu0 0.0
    %1891 = vmatpush2.msra.mxu0 0.0
    %1892 = vmatprep.subr.mxu0 0.0
    %1893 = vmatpush2.msra.mxu0 0.0
    %1894 = vmatprep.subr.mxu0 0.0
    %1895 = vmatpush2.msra.mxu0 0.0
    %1896 = vmatprep.subr.mxu0 0.0
    %1897 = vmatpush2.msra.mxu0 0.0
    %1898 = vmatprep.mubr.f32.mxu0 0.0
    %1899 = vmatmul.mubr.f32.gmra.mxu0 %v1832
    %v1900 = vpop.f32.mrf.mxu0
    %v1901 = vadd.f32 %v302, %v1900
    %v1902 = vpop.f32.mrf.mxu0
    %1903 = vdwg.mxu0
    %1905 = vrot.lane.b32.xlu0 %v1731, 32
    %v1906 = vpop.permute.xlu0 %1905
    %v1907 = vsel %vm199, %v1906, 0
    %1909 = vmatprep.subr.mxu0 0.0
    %1910 = vmatpush1.msra.mxu0 0.0
    %1911 = vmatprep.subr.mxu0 0.0
    %1912 = vmatpush1.msra.mxu0 0.0
    %1913 = vmatprep.subr.mxu0 0.0
    %1914 = vmatpush1.msra.mxu0 0.0
    %1915 = vmatprep.subr.mxu0 0.0
    %1916 = vmatpush1.msra.mxu0 0.0
    %1917 = vmatprep.subr.mxu0 0.0
    %1918 = vmatpush1.msra.mxu0 0.0
    %1919 = vmatprep.subr.mxu0 0.0
    %1920 = vmatpush1.msra.mxu0 0.0
    %1921 = vmatprep.subr.mxu0 0.0
    %1922 = vmatpush1.msra.mxu0 0.0
    %1923 = vmatprep.subr.mxu0 0.0
    %1924 = vmatpush1.msra.mxu0 0.0
    %1925 = vmatprep.subr.mxu0 0.0
    %1926 = vmatpush1.msra.mxu0 0.0
    %1927 = vmatprep.subr.mxu0 0.0
    %1928 = vmatpush1.msra.mxu0 0.0
    %1929 = vmatprep.subr.mxu0 0.0
    %1930 = vmatpush1.msra.mxu0 0.0
    %1931 = vmatprep.subr.mxu0 0.0
    %1932 = vmatpush1.msra.mxu0 0.0
    %1933 = vmatprep.subr.mxu0 0.0
    %1934 = vmatpush1.msra.mxu0 %v192
    %1935 = vmatprep.subr.mxu0 0.0
    %1936 = vmatpush1.msra.mxu0 %v191
    %1937 = vmatprep.subr.mxu0 0.0
    %1938 = vmatpush1.msra.mxu0 %v190
    %1939 = vmatprep.subr.mxu0 0.0
    %1940 = vmatpush1.msra.mxu0 %v189
    %1941 = vmatprep.subr.mxu0 0.0
    %1942 = vmatpush2.msra.mxu0 0.0
    %1943 = vmatprep.subr.mxu0 0.0
    %1944 = vmatpush2.msra.mxu0 0.0
    %1945 = vmatprep.subr.mxu0 0.0
    %1946 = vmatpush2.msra.mxu0 0.0
    %1947 = vmatprep.subr.mxu0 0.0
    %1948 = vmatpush2.msra.mxu0 0.0
    %1949 = vmatprep.subr.mxu0 0.0
    %1950 = vmatpush2.msra.mxu0 0.0
    %1951 = vmatprep.subr.mxu0 0.0
    %1952 = vmatpush2.msra.mxu0 0.0
    %1953 = vmatprep.subr.mxu0 0.0
    %1954 = vmatpush2.msra.mxu0 0.0
    %1955 = vmatprep.subr.mxu0 0.0
    %1956 = vmatpush2.msra.mxu0 0.0
    %1957 = vmatprep.subr.mxu0 0.0
    %1958 = vmatpush2.msra.mxu0 0.0
    %1959 = vmatprep.subr.mxu0 0.0
    %1960 = vmatpush2.msra.mxu0 0.0
    %1961 = vmatprep.subr.mxu0 0.0
    %1962 = vmatpush2.msra.mxu0 0.0
    %1963 = vmatprep.subr.mxu0 0.0
    %1964 = vmatpush2.msra.mxu0 0.0
    %1965 = vmatprep.subr.mxu0 0.0
    %1966 = vmatpush2.msra.mxu0 0.0
    %1967 = vmatprep.subr.mxu0 0.0
    %1968 = vmatpush2.msra.mxu0 0.0
    %1969 = vmatprep.subr.mxu0 0.0
    %1970 = vmatpush2.msra.mxu0 0.0
    %1971 = vmatprep.subr.mxu0 0.0
    %1972 = vmatpush2.msra.mxu0 0.0
    %1973 = vmatprep.mubr.f32.mxu0 0.0
    %1974 = vmatmul.mubr.f32.gmra.mxu0 %v1907
    %v1975 = vpop.f32.mrf.mxu0
    %v1976 = vadd.f32 0.0, %v1975
    %v1977 = vpop.f32.mrf.mxu0
    %1978 = vdwg.mxu0
    %v1979 = vadd.f32 %v1629, %v1976
    %v1980 = vxor.u32 %v1979, 2147483648
    %v1981 = vmul.f32 %v1980, 1.442695
    %v1982 = vpow.pop %v1981
    %v1983 = vadd.f32 %v1982, 1.0
    %v1984 = vrcp.pop %v1983
    %v1985 = vmul.f32 1.0, %v1984
    %v1986 = vtanh.pop %v1979
    %v1987 = vmul.f32 %v1985, %v1725
    %1989 = vrot.lane.b32.xlu0 %v1986, 64
    %v1990 = vpop.permute.xlu0 %1989
    %v1992 = vmul.f32 %v1985, %v1990
    %1994 = vrot.lane.b32.xlu0 %v1992, 32
    %v1995 = vpop.permute.xlu0 %1994
    %v1997 = vadd.f32 %v1987, %v1995
    %v1998 = vtanh.pop %v1997
    %2000 = vrot.lane.b32.xlu0 %v1998, 64
    %v2001 = vpop.permute.xlu0 %2000
    %v2003 = vmul.f32 %v1985, %v2001
    %v2004 = vmax.f32 %v1732, %v2003
    %v2005 = vld [vmem:[%s178] sm:$0xff]
    %2006 = vmatprep.subr.mxu0 0.0
    %2007 = vmatpush1.msra.mxu0 0.0
    %2008 = vmatprep.subr.mxu0 0.0
    %2009 = vmatpush1.msra.mxu0 0.0
    %2010 = vmatprep.subr.mxu0 0.0
    %2011 = vmatpush1.msra.mxu0 0.0
    %2012 = vmatprep.subr.mxu0 0.0
    %2013 = vmatpush1.msra.mxu0 0.0
    %2014 = vmatprep.subr.mxu0 0.0
    %2015 = vmatpush1.msra.mxu0 0.0
    %2016 = vmatprep.subr.mxu0 0.0
    %2017 = vmatpush1.msra.mxu0 0.0
    %2018 = vmatprep.subr.mxu0 0.0
    %2019 = vmatpush1.msra.mxu0 0.0
    %2020 = vmatprep.subr.mxu0 0.0
    %2021 = vmatpush1.msra.mxu0 0.0
    %2022 = vmatprep.subr.mxu0 0.0
    %2023 = vmatpush1.msra.mxu0 0.0
    %2024 = vmatprep.subr.mxu0 0.0
    %2025 = vmatpush1.msra.mxu0 0.0
    %2026 = vmatprep.subr.mxu0 0.0
    %2027 = vmatpush1.msra.mxu0 0.0
    %2028 = vmatprep.subr.mxu0 0.0
    %2029 = vmatpush1.msra.mxu0 0.0
    %2030 = vmatprep.subr.mxu0 0.0
    %2031 = vmatpush1.msra.mxu0 %v187
    %2032 = vmatprep.subr.mxu0 0.0
    %2033 = vmatpush1.msra.mxu0 %v186
    %2034 = vmatprep.subr.mxu0 0.0
    %2035 = vmatpush1.msra.mxu0 %v185
    %2036 = vmatprep.subr.mxu0 0.0
    %2037 = vmatpush1.msra.mxu0 %v184
    %2038 = vmatprep.subr.mxu0 0.0
    %2039 = vmatpush2.msra.mxu0 0.0
    %2040 = vmatprep.subr.mxu0 0.0
    %2041 = vmatpush2.msra.mxu0 0.0
    %2042 = vmatprep.subr.mxu0 0.0
    %2043 = vmatpush2.msra.mxu0 0.0
    %2044 = vmatprep.subr.mxu0 0.0
    %2045 = vmatpush2.msra.mxu0 0.0
    %2046 = vmatprep.subr.mxu0 0.0
    %2047 = vmatpush2.msra.mxu0 0.0
    %2048 = vmatprep.subr.mxu0 0.0
    %2049 = vmatpush2.msra.mxu0 0.0
    %2050 = vmatprep.subr.mxu0 0.0
    %2051 = vmatpush2.msra.mxu0 0.0
    %2052 = vmatprep.subr.mxu0 0.0
    %2053 = vmatpush2.msra.mxu0 0.0
    %2054 = vmatprep.subr.mxu0 0.0
    %2055 = vmatpush2.msra.mxu0 0.0
    %2056 = vmatprep.subr.mxu0 0.0
    %2057 = vmatpush2.msra.mxu0 0.0
    %2058 = vmatprep.subr.mxu0 0.0
    %2059 = vmatpush2.msra.mxu0 0.0
    %2060 = vmatprep.subr.mxu0 0.0
    %2061 = vmatpush2.msra.mxu0 0.0
    %2062 = vmatprep.subr.mxu0 0.0
    %2063 = vmatpush2.msra.mxu0 0.0
    %2064 = vmatprep.subr.mxu0 0.0
    %2065 = vmatpush2.msra.mxu0 0.0
    %2066 = vmatprep.subr.mxu0 0.0
    %2067 = vmatpush2.msra.mxu0 0.0
    %2068 = vmatprep.subr.mxu0 0.0
    %2069 = vmatpush2.msra.mxu0 0.0
    %2070 = vmatprep.mubr.f32.mxu0 0.0
    %2071 = vmatmul.mubr.f32.gmra.mxu0 %v1832
    %v2072 = vpop.f32.mrf.mxu0
    %v2073 = vadd.f32 0.0, %v2072
    %v2074 = vpop.f32.mrf.mxu0
    %2075 = vdwg.mxu0
    %v2076 = vadd.f32 %v2005, %v2073
    %v2077 = vxor.u32 %v2076, 2147483648
    %v2078 = vmul.f32 %v2077, 1.442695
    %v2079 = vpow.pop %v2078
    %v2080 = vadd.f32 %v2079, 1.0
    %v2081 = vrcp.pop %v2080
    %v2082 = vmul.f32 1.0, %v2081
    %v2083 = vtanh.pop %v2076
    %v2084 = vmul.f32 %v2082, %v1822
    %2086 = vrot.lane.b32.xlu0 %v2083, 64
    %v2087 = vpop.permute.xlu0 %2086
    %v2089 = vmul.f32 %v2082, %v2087
    %2091 = vrot.lane.b32.xlu0 %v2089, 32
    %v2092 = vpop.permute.xlu0 %2091
    %v2094 = vadd.f32 %v2084, %v2092
    %v2095 = vtanh.pop %v2094
    %2097 = vrot.lane.b32.xlu0 %v2095, 64
    %v2098 = vpop.permute.xlu0 %2097
    %v2100 = vmul.f32 %v2082, %v2098
    %2102 = vrot.lane.b32.xlu0 %v2100, 32
    %v2103 = vpop.permute.xlu0 %2102
    %v2104 = vsel %vm199, %v2103, 0
    %2106 = vmatprep.subr.mxu0 0.0
    %2107 = vmatpush1.msra.mxu0 0.0
    %2108 = vmatprep.subr.mxu0 0.0
    %2109 = vmatpush1.msra.mxu0 0.0
    %2110 = vmatprep.subr.mxu0 0.0
    %2111 = vmatpush1.msra.mxu0 0.0
    %2112 = vmatprep.subr.mxu0 0.0
    %2113 = vmatpush1.msra.mxu0 0.0
    %2114 = vmatprep.subr.mxu0 0.0
    %2115 = vmatpush1.msra.mxu0 0.0
    %2116 = vmatprep.subr.mxu0 0.0
    %2117 = vmatpush1.msra.mxu0 0.0
    %2118 = vmatprep.subr.mxu0 0.0
    %2119 = vmatpush1.msra.mxu0 0.0
    %2120 = vmatprep.subr.mxu0 0.0
    %2121 = vmatpush1.msra.mxu0 0.0
    %2122 = vmatprep.subr.mxu0 0.0
    %2123 = vmatpush1.msra.mxu0 0.0
    %2124 = vmatprep.subr.mxu0 0.0
    %2125 = vmatpush1.msra.mxu0 0.0
    %2126 = vmatprep.subr.mxu0 0.0
    %2127 = vmatpush1.msra.mxu0 0.0
    %2128 = vmatprep.subr.mxu0 0.0
    %2129 = vmatpush1.msra.mxu0 0.0
    %2130 = vmatprep.subr.mxu0 0.0
    %2131 = vmatpush1.msra.mxu0 %v196
    %2132 = vmatprep.subr.mxu0 0.0
    %2133 = vmatpush1.msra.mxu0 %v195
    %2134 = vmatprep.subr.mxu0 0.0
    %2135 = vmatpush1.msra.mxu0 %v194
    %2136 = vmatprep.subr.mxu0 0.0
    %2137 = vmatpush1.msra.mxu0 %v193
    %2138 = vmatprep.subr.mxu0 0.0
    %2139 = vmatpush2.msra.mxu0 0.0
    %2140 = vmatprep.subr.mxu0 0.0
    %2141 = vmatpush2.msra.mxu0 0.0
    %2142 = vmatprep.subr.mxu0 0.0
    %2143 = vmatpush2.msra.mxu0 0.0
    %2144 = vmatprep.subr.mxu0 0.0
    %2145 = vmatpush2.msra.mxu0 0.0
    %2146 = vmatprep.subr.mxu0 0.0
    %2147 = vmatpush2.msra.mxu0 0.0
    %2148 = vmatprep.subr.mxu0 0.0
    %2149 = vmatpush2.msra.mxu0 0.0
    %2150 = vmatprep.subr.mxu0 0.0
    %2151 = vmatpush2.msra.mxu0 0.0
    %2152 = vmatprep.subr.mxu0 0.0
    %2153 = vmatpush2.msra.mxu0 0.0
    %2154 = vmatprep.subr.mxu0 0.0
    %2155 = vmatpush2.msra.mxu0 0.0
    %2156 = vmatprep.subr.mxu0 0.0
    %2157 = vmatpush2.msra.mxu0 0.0
    %2158 = vmatprep.subr.mxu0 0.0
    %2159 = vmatpush2.msra.mxu0 0.0
    %2160 = vmatprep.subr.mxu0 0.0
    %2161 = vmatpush2.msra.mxu0 0.0
    %2162 = vmatprep.subr.mxu0 0.0
    %2163 = vmatpush2.msra.mxu0 0.0
    %2164 = vmatprep.subr.mxu0 0.0
    %2165 = vmatpush2.msra.mxu0 0.0
    %2166 = vmatprep.subr.mxu0 0.0
    %2167 = vmatpush2.msra.mxu0 0.0
    %2168 = vmatprep.subr.mxu0 0.0
    %2169 = vmatpush2.msra.mxu0 0.0
    %2170 = vmatprep.mubr.f32.mxu0 0.0
    %2171 = vmatmul.mubr.f32.gmra.mxu0 %v2104
    %v2172 = vpop.f32.mrf.mxu0
    %v2173 = vadd.f32 %v302, %v2172
    %v2174 = vpop.f32.mrf.mxu0
    %2175 = vdwg.mxu0
    %2177 = vrot.lane.b32.xlu0 %v2003, 32
    %v2178 = vpop.permute.xlu0 %2177
    %v2179 = vsel %vm199, %v2178, 0
    %2181 = vmatprep.subr.mxu0 0.0
    %2182 = vmatpush1.msra.mxu0 0.0
    %2183 = vmatprep.subr.mxu0 0.0
    %2184 = vmatpush1.msra.mxu0 0.0
    %2185 = vmatprep.subr.mxu0 0.0
    %2186 = vmatpush1.msra.mxu0 0.0
    %2187 = vmatprep.subr.mxu0 0.0
    %2188 = vmatpush1.msra.mxu0 0.0
    %2189 = vmatprep.subr.mxu0 0.0
    %2190 = vmatpush1.msra.mxu0 0.0
    %2191 = vmatprep.subr.mxu0 0.0
    %2192 = vmatpush1.msra.mxu0 0.0
    %2193 = vmatprep.subr.mxu0 0.0
    %2194 = vmatpush1.msra.mxu0 0.0
    %2195 = vmatprep.subr.mxu0 0.0
    %2196 = vmatpush1.msra.mxu0 0.0
    %2197 = vmatprep.subr.mxu0 0.0
    %2198 = vmatpush1.msra.mxu0 0.0
    %2199 = vmatprep.subr.mxu0 0.0
    %2200 = vmatpush1.msra.mxu0 0.0
    %2201 = vmatprep.subr.mxu0 0.0
    %2202 = vmatpush1.msra.mxu0 0.0
    %2203 = vmatprep.subr.mxu0 0.0
    %2204 = vmatpush1.msra.mxu0 0.0
    %2205 = vmatprep.subr.mxu0 0.0
    %2206 = vmatpush1.msra.mxu0 %v192
    %2207 = vmatprep.subr.mxu0 0.0
    %2208 = vmatpush1.msra.mxu0 %v191
    %2209 = vmatprep.subr.mxu0 0.0
    %2210 = vmatpush1.msra.mxu0 %v190
    %2211 = vmatprep.subr.mxu0 0.0
    %2212 = vmatpush1.msra.mxu0 %v189
    %2213 = vmatprep.subr.mxu0 0.0
    %2214 = vmatpush2.msra.mxu0 0.0
    %2215 = vmatprep.subr.mxu0 0.0
    %2216 = vmatpush2.msra.mxu0 0.0
    %2217 = vmatprep.subr.mxu0 0.0
    %2218 = vmatpush2.msra.mxu0 0.0
    %2219 = vmatprep.subr.mxu0 0.0
    %2220 = vmatpush2.msra.mxu0 0.0
    %2221 = vmatprep.subr.mxu0 0.0
    %2222 = vmatpush2.msra.mxu0 0.0
    %2223 = vmatprep.subr.mxu0 0.0
    %2224 = vmatpush2.msra.mxu0 0.0
    %2225 = vmatprep.subr.mxu0 0.0
    %2226 = vmatpush2.msra.mxu0 0.0
    %2227 = vmatprep.subr.mxu0 0.0
    %2228 = vmatpush2.msra.mxu0 0.0
    %2229 = vmatprep.subr.mxu0 0.0
    %2230 = vmatpush2.msra.mxu0 0.0
    %2231 = vmatprep.subr.mxu0 0.0
    %2232 = vmatpush2.msra.mxu0 0.0
    %2233 = vmatprep.subr.mxu0 0.0
    %2234 = vmatpush2.msra.mxu0 0.0
    %2235 = vmatprep.subr.mxu0 0.0
    %2236 = vmatpush2.msra.mxu0 0.0
    %2237 = vmatprep.subr.mxu0 0.0
    %2238 = vmatpush2.msra.mxu0 0.0
    %2239 = vmatprep.subr.mxu0 0.0
    %2240 = vmatpush2.msra.mxu0 0.0
    %2241 = vmatprep.subr.mxu0 0.0
    %2242 = vmatpush2.msra.mxu0 0.0
    %2243 = vmatprep.subr.mxu0 0.0
    %2244 = vmatpush2.msra.mxu0 0.0
    %2245 = vmatprep.mubr.f32.mxu0 0.0
    %2246 = vmatmul.mubr.f32.gmra.mxu0 %v2179
    %v2247 = vpop.f32.mrf.mxu0
    %v2248 = vadd.f32 0.0, %v2247
    %v2249 = vpop.f32.mrf.mxu0
    %2250 = vdwg.mxu0
    %v2251 = vadd.f32 %v1901, %v2248
    %v2252 = vxor.u32 %v2251, 2147483648
    %v2253 = vmul.f32 %v2252, 1.442695
    %v2254 = vpow.pop %v2253
    %v2255 = vadd.f32 %v2254, 1.0
    %v2256 = vrcp.pop %v2255
    %v2257 = vmul.f32 1.0, %v2256
    %v2258 = vtanh.pop %v2251
    %v2259 = vmul.f32 %v2257, %v1997
    %2261 = vrot.lane.b32.xlu0 %v2258, 64
    %v2262 = vpop.permute.xlu0 %2261
    %v2264 = vmul.f32 %v2257, %v2262
    %2266 = vrot.lane.b32.xlu0 %v2264, 32
    %v2267 = vpop.permute.xlu0 %2266
    %v2269 = vadd.f32 %v2259, %v2267
    %v2270 = vtanh.pop %v2269
    %2272 = vrot.lane.b32.xlu0 %v2270, 64
    %v2273 = vpop.permute.xlu0 %2272
    %v2275 = vmul.f32 %v2257, %v2273
    %v2276 = vmax.f32 %v2004, %v2275
    %2278 = vrot.lane.b32.xlu0 %v2275, 32
    %v2279 = vpop.permute.xlu0 %2278
    %v2280 = vsel %vm199, %v2279, 0
    %2282 = vmatprep.subr.mxu0 0.0
    %2283 = vmatpush1.msra.mxu0 0.0
    %2284 = vmatprep.subr.mxu0 0.0
    %2285 = vmatpush1.msra.mxu0 0.0
    %2286 = vmatprep.subr.mxu0 0.0
    %2287 = vmatpush1.msra.mxu0 0.0
    %2288 = vmatprep.subr.mxu0 0.0
    %2289 = vmatpush1.msra.mxu0 0.0
    %2290 = vmatprep.subr.mxu0 0.0
    %2291 = vmatpush1.msra.mxu0 0.0
    %2292 = vmatprep.subr.mxu0 0.0
    %2293 = vmatpush1.msra.mxu0 0.0
    %2294 = vmatprep.subr.mxu0 0.0
    %2295 = vmatpush1.msra.mxu0 0.0
    %2296 = vmatprep.subr.mxu0 0.0
    %2297 = vmatpush1.msra.mxu0 0.0
    %2298 = vmatprep.subr.mxu0 0.0
    %2299 = vmatpush1.msra.mxu0 0.0
    %2300 = vmatprep.subr.mxu0 0.0
    %2301 = vmatpush1.msra.mxu0 0.0
    %2302 = vmatprep.subr.mxu0 0.0
    %2303 = vmatpush1.msra.mxu0 0.0
    %2304 = vmatprep.subr.mxu0 0.0
    %2305 = vmatpush1.msra.mxu0 0.0
    %2306 = vmatprep.subr.mxu0 0.0
    %2307 = vmatpush1.msra.mxu0 %v192
    %2308 = vmatprep.subr.mxu0 0.0
    %2309 = vmatpush1.msra.mxu0 %v191
    %2310 = vmatprep.subr.mxu0 0.0
    %2311 = vmatpush1.msra.mxu0 %v190
    %2312 = vmatprep.subr.mxu0 0.0
    %2313 = vmatpush1.msra.mxu0 %v189
    %2314 = vmatprep.subr.mxu0 0.0
    %2315 = vmatpush2.msra.mxu0 0.0
    %2316 = vmatprep.subr.mxu0 0.0
    %2317 = vmatpush2.msra.mxu0 0.0
    %2318 = vmatprep.subr.mxu0 0.0
    %2319 = vmatpush2.msra.mxu0 0.0
    %2320 = vmatprep.subr.mxu0 0.0
    %2321 = vmatpush2.msra.mxu0 0.0
    %2322 = vmatprep.subr.mxu0 0.0
    %2323 = vmatpush2.msra.mxu0 0.0
    %2324 = vmatprep.subr.mxu0 0.0
    %2325 = vmatpush2.msra.mxu0 0.0
    %2326 = vmatprep.subr.mxu0 0.0
    %2327 = vmatpush2.msra.mxu0 0.0
    %2328 = vmatprep.subr.mxu0 0.0
    %2329 = vmatpush2.msra.mxu0 0.0
    %2330 = vmatprep.subr.mxu0 0.0
    %2331 = vmatpush2.msra.mxu0 0.0
    %2332 = vmatprep.subr.mxu0 0.0
    %2333 = vmatpush2.msra.mxu0 0.0
    %2334 = vmatprep.subr.mxu0 0.0
    %2335 = vmatpush2.msra.mxu0 0.0
    %2336 = vmatprep.subr.mxu0 0.0
    %2337 = vmatpush2.msra.mxu0 0.0
    %2338 = vmatprep.subr.mxu0 0.0
    %2339 = vmatpush2.msra.mxu0 0.0
    %2340 = vmatprep.subr.mxu0 0.0
    %2341 = vmatpush2.msra.mxu0 0.0
    %2342 = vmatprep.subr.mxu0 0.0
    %2343 = vmatpush2.msra.mxu0 0.0
    %2344 = vmatprep.subr.mxu0 0.0
    %2345 = vmatpush2.msra.mxu0 0.0
    %2346 = vmatprep.mubr.f32.mxu0 0.0
    %2347 = vmatmul.mubr.f32.gmra.mxu0 %v2280
    %v2348 = vpop.f32.mrf.mxu0
    %v2349 = vadd.f32 0.0, %v2348
    %v2350 = vpop.f32.mrf.mxu0
    %2351 = vdwg.mxu0
    %v2352 = vadd.f32 %v2173, %v2349
    %v2353 = vxor.u32 %v2352, 2147483648
    %v2354 = vmul.f32 %v2353, 1.442695
    %v2355 = vpow.pop %v2354
    %v2356 = vadd.f32 %v2355, 1.0
    %v2357 = vrcp.pop %v2356
    %v2358 = vmul.f32 1.0, %v2357
    %v2359 = vtanh.pop %v2352
    %v2360 = vmul.f32 %v2358, %v2269
    %2362 = vrot.lane.b32.xlu0 %v2359, 64
    %v2363 = vpop.permute.xlu0 %2362
    %v2365 = vmul.f32 %v2358, %v2363
    %2367 = vrot.lane.b32.xlu0 %v2365, 32
    %v2368 = vpop.permute.xlu0 %2367
    %v2370 = vadd.f32 %v2360, %v2368
    %v2371 = vtanh.pop %v2370
    %2373 = vrot.lane.b32.xlu0 %v2371, 64
    %v2374 = vpop.permute.xlu0 %2373
    %v2376 = vmul.f32 %v2358, %v2374
    %v2377 = vmax.f32 %v2276, %v2376
    %v2378 = vld [vmem:[#allocation10] sm:$0xff]
    %v2379 = vld [vmem:[#allocation10 + $0x8] sm:$0xff]
    %v2380 = vld [vmem:[#allocation10 + $0x10] sm:$0xff]
    %v2381 = vld [vmem:[#allocation10 + $0x18] sm:$0xff]
    %v2382 = vld [vmem:[#allocation12] sm:$0x1]
    %v2384 = vlaneseq
    %v2385 = vshrl.u32 %v2384, 7
    %v2386 = vsub.s32 0, %v2385
    %v2387 = vrot.slane %v2382, %v2386
    %2390 = vrot.lane.b32.xlu0 %v2377, 32
    %v2391 = vpop.permute.xlu0 %2390
    %v2392 = vsel %vm199, %v2391, 0
    %2394 = vmatprep.subr.mxu0 0.0
    %2395 = vmatpush1.msra.mxu0 0.0
    %2396 = vmatprep.subr.mxu0 0.0
    %2397 = vmatpush1.msra.mxu0 0.0
    %2398 = vmatprep.subr.mxu0 0.0
    %2399 = vmatpush1.msra.mxu0 0.0
    %2400 = vmatprep.subr.mxu0 0.0
    %2401 = vmatpush1.msra.mxu0 0.0
    %2402 = vmatprep.subr.mxu0 0.0
    %2403 = vmatpush1.msra.mxu0 0.0
    %2404 = vmatprep.subr.mxu0 0.0
    %2405 = vmatpush1.msra.mxu0 0.0
    %2406 = vmatprep.subr.mxu0 0.0
    %2407 = vmatpush1.msra.mxu0 0.0
    %2408 = vmatprep.subr.mxu0 0.0
    %2409 = vmatpush1.msra.mxu0 0.0
    %2410 = vmatprep.subr.mxu0 0.0
    %2411 = vmatpush1.msra.mxu0 0.0
    %2412 = vmatprep.subr.mxu0 0.0
    %2413 = vmatpush1.msra.mxu0 0.0
    %2414 = vmatprep.subr.mxu0 0.0
    %2415 = vmatpush1.msra.mxu0 0.0
    %2416 = vmatprep.subr.mxu0 0.0
    %2417 = vmatpush1.msra.mxu0 0.0
    %2418 = vmatprep.subr.mxu0 0.0
    %2419 = vmatpush1.msra.mxu0 %v2381
    %2420 = vmatprep.subr.mxu0 0.0
    %2421 = vmatpush1.msra.mxu0 %v2380
    %2422 = vmatprep.subr.mxu0 0.0
    %2423 = vmatpush1.msra.mxu0 %v2379
    %2424 = vmatprep.subr.mxu0 0.0
    %2425 = vmatpush1.msra.mxu0 %v2378
    %2426 = vmatprep.subr.mxu0 0.0
    %2427 = vmatpush2.msra.mxu0 0.0
    %2428 = vmatprep.subr.mxu0 0.0
    %2429 = vmatpush2.msra.mxu0 0.0
    %2430 = vmatprep.subr.mxu0 0.0
    %2431 = vmatpush2.msra.mxu0 0.0
    %2432 = vmatprep.subr.mxu0 0.0
    %2433 = vmatpush2.msra.mxu0 0.0
    %2434 = vmatprep.subr.mxu0 0.0
    %2435 = vmatpush2.msra.mxu0 0.0
    %2436 = vmatprep.subr.mxu0 0.0
    %2437 = vmatpush2.msra.mxu0 0.0
    %2438 = vmatprep.subr.mxu0 0.0
    %2439 = vmatpush2.msra.mxu0 0.0
    %2440 = vmatprep.subr.mxu0 0.0
    %2441 = vmatpush2.msra.mxu0 0.0
    %2442 = vmatprep.subr.mxu0 0.0
    %2443 = vmatpush2.msra.mxu0 0.0
    %2444 = vmatprep.subr.mxu0 0.0
    %2445 = vmatpush2.msra.mxu0 0.0
    %2446 = vmatprep.subr.mxu0 0.0
    %2447 = vmatpush2.msra.mxu0 0.0
    %2448 = vmatprep.subr.mxu0 0.0
    %2449 = vmatpush2.msra.mxu0 0.0
    %2450 = vmatprep.subr.mxu0 0.0
    %2451 = vmatpush2.msra.mxu0 0.0
    %2452 = vmatprep.subr.mxu0 0.0
    %2453 = vmatpush2.msra.mxu0 0.0
    %2454 = vmatprep.subr.mxu0 0.0
    %2455 = vmatpush2.msra.mxu0 0.0
    %2456 = vmatprep.subr.mxu0 0.0
    %2457 = vmatpush2.msra.mxu0 0.0
    %2458 = vmatprep.mubr.f32.mxu0 0.0
    %2459 = vmatmul.mubr.f32.gmra.mxu0 %v2392
    %v2460 = vpop.f32.mrf.mxu0
    %v2461 = vadd.f32 %v2387, %v2460
    %v2462 = vpop.f32.mrf.mxu0
    %2463 = vdwg.mxu0
    %2464 = vst [vmem:[%s7] sm:$0xff] %v2461
    // Predicated region
    $region54: #{_lambda_.1} parent=1 // pred_check
      _
    $region55: #{_lambda_.1} parent=1 // pred_check_branch
      %2466 = sbr.rel (0) target = $region57
    $region56: #{_lambda_.1} parent=1 // pred_region
      _
    $region57: #{_lambda_.1} parent=1 // pred_fallthru
      _
    // Predicated region
    $region58: #{_lambda_.1} parent=1 // pred_check
      _
    $region59: #{_lambda_.1} parent=1 // pred_check_branch
      %2468 = sbr.rel (0) target = $region61
    $region60: #{_lambda_.1} parent=1 // pred_region
      _
    $region61: #{_lambda_.1} parent=1 // pred_fallthru
      _
    %2469 = vsyncpa [#allocation4], 1
    %2470 = vsyncpa [#allocation8], 1
    %2471 = vsyncpa [#allocation11], 1
    %2472 = vsyncpa [#allocation5], 1

</llo_original>
